<compile_context>
chip_gen: v6e
topology: v6e:2x2x1
jax: 0.10.0
libtpu: 0.0.40
codegen_flags: <defaults>
</compile_context>

<pallas_src>
import functools

import jax
import jax.numpy as jnp
from jax.experimental import pallas as pl
from jax.experimental.pallas import tpu as pltpu


def _fused_conv3x3x2_relu_kernel(x_ref, w1_ref, w2_ref, o_ref,
                                 pad1_ref, pad2_ref, patch1_ref, patch2_ref):
    """conv3x3(Cin->Ce) + ReLU + conv3x3(Ce->Ce) + ReLU for one image.

    x_ref:      (1, H, W, Cin)   cdt  input image (NHWC)
    w1_ref:     (9*Cin, Ce)      cdt  conv1 weights, im2col K-major layout
    w2_ref:     (9*Ce, Ce_out)   cdt  conv2 weights (N lane-padded iff Ce>=128)
    o_ref:      (1, H*W, Ce_out) out  row-major flattened output
    pad1_ref:   (H+2, W+2, Cin)  cdt  zero-halo conv1 input       (VMEM scratch)
    pad2_ref:   (H+2, W+2, Ce)   cdt  zero-halo intermediate      (VMEM scratch)
    patch1_ref: (H, W, 9*Cin)    cdt  stage-1 im2col patch buffer (VMEM scratch)
    patch2_ref: (H, W, 9*Ce)     cdt  stage-2 im2col patch buffer (VMEM scratch)
    """
    _, H, W, Cin = x_ref.shape
    Ce = pad2_ref.shape[2]
    cdt = pad1_ref.dtype

    # ---- halo-only zeroing of the padding frame: O(H+W), not O(H*W*C). ----
    # Unconditional (not pl.when(program_id == 0)) so it stays correct when
    # the batch grid is sharded across TensorCores (private scratch per core).
    for p_ref, C in ((pad1_ref, Cin), (pad2_ref, Ce)):
        zrow = jnp.zeros((1, W + 2, C), cdt)
        zcol = jnp.zeros((H, 1, C), cdt)
        p_ref[0:1, :, :] = zrow                     # top halo row
        p_ref[H + 1:H + 2, :, :] = zrow             # bottom halo row
        p_ref[1:H + 1, 0:1, :] = zcol               # left halo column
        p_ref[1:H + 1, W + 1:W + 2, :] = zcol       # right halo column

    # ---- stage 1: pad -> im2col -> single MXU matmul (K = 9*Cin) -> ReLU ----
    pad1_ref[1:H + 1, 1:W + 1, :] = x_ref[0]
    # TODO(synk): for very small Cin, pack (W, Cin) -> W*Cin as the minor dim of
    # the DMA'd input block so the stage-1 input path is lane-dense.
    for t in range(9):
        dy, dx = divmod(t, 3)
        patch1_ref[:, :, t * Cin:(t + 1) * Cin] = \
            pad1_ref[dy:dy + H, dx:dx + W, :]
    h1 = jnp.dot(patch1_ref[...].reshape(H * W, 9 * Cin), w1_ref[...],
                 preferred_element_type=jnp.float32)          # (H*W, Ce) f32
    h1 = jnp.maximum(h1, 0.0).astype(cdt)

    # ---- stage 2: intermediate never leaves VMEM; one matmul, K = 9*Ce ----
    pad2_ref[1:H + 1, 1:W + 1, :] = h1.reshape(H, W, Ce)
    for t in range(9):
        dy, dx = divmod(t, 3)
        patch2_ref[:, :, t * Ce:(t + 1) * Ce] = \
            pad2_ref[dy:dy + H, dx:dx + W, :]
    out = jnp.dot(patch2_ref[...].reshape(H * W, 9 * Ce), w2_ref[...],
                  preferred_element_type=jnp.float32)         # (H*W, Ce_out)
    o_ref[0] = jnp.maximum(out, 0.0).astype(o_ref.dtype)


def conv_module_forward(x_nchw, w1_hwio, w2_hwio,
                        compute_dtype=jnp.bfloat16,
                        out_dtype=jnp.float32):
    """Full forward of the PyTorch `conv` module.

    x_nchw: (B, Cin, H, W); weights in HWIO.  Returns (B, H*W, Ce).
    compute_dtype: MXU-operand / scratch dtype (bf16 recommended on v6e/v7x,
      float32 for bit-accurate checking); accumulation is always f32.
    out_dtype: output dtype (use bf16 to halve writeback if the consumer
      accepts it).
    """
    B, Cin, H, W = x_nchw.shape
    Ce = w1_hwio.shape[-1]
    HW = H * W

    # Lane-pad the output width only when Ce >= 128 (production Ce=768 is
    # already a multiple of 128 -> no padding; toy Ce=32 -> no 4x MXU waste).
    Ce_out = ((Ce + 127) // 128) * 128 if Ce >= 128 else Ce

    # NCHW -> NHWC and cast once in the wrapper (fuses with the transpose),
    # so every in-kernel copy/matmul operand is already in compute dtype.
    x = jnp.transpose(x_nchw, (0, 2, 3, 1)).astype(compute_dtype)
    # HWIO (3,3,C,Ce) -> im2col (9*C, Ce); K index = (dy*3+dx)*C + c matches
    # the patch-buffer channel ordering in the kernel.
    w1 = w1_hwio.reshape(9 * Cin, Ce).astype(compute_dtype)
    w2 = w2_hwio.reshape(9 * Ce, Ce)
    if Ce_out != Ce:
        w2 = jnp.pad(w2, ((0, 0), (0, Ce_out - Ce)))
    w2 = w2.astype(compute_dtype)

    # TODO(synk): for production H/W/Ce (e.g. 224x224, Ce=768) switch to
    # row-strip tiling: grid=(B, H//TH) with a 1-row halo per strip and an
    # explicit pltpu.CompilerParams(vmem_limit_bytes=...) sized per chip
    # generation (v7x 64 MiB/TC -> roughly half the v6e strip height), which
    # also gives each TensorCore many grid steps to pipeline DMA vs compute.
    out = pl.pallas_call(
        _fused_conv3x3x2_relu_kernel,
        out_shape=jax.ShapeDtypeStruct((B, HW, Ce_out), out_dtype),
        grid=(B,),
        in_specs=[
            pl.BlockSpec((1, H, W, Cin), lambda b: (b, 0, 0, 0)),
            pl.BlockSpec((9 * Cin, Ce), lambda b: (0, 0)),        # resident
            pl.BlockSpec((9 * Ce, Ce_out), lambda b: (0, 0)),     # resident
        ],
        out_specs=pl.BlockSpec((1, HW, Ce_out), lambda b: (b, 0, 0)),
        scratch_shapes=[
            pltpu.VMEM((H + 2, W + 2, Cin), compute_dtype),   # pad1
            pltpu.VMEM((H + 2, W + 2, Ce), compute_dtype),    # pad2
            pltpu.VMEM((H, W, 9 * Cin), compute_dtype),       # im2col stage 1
            pltpu.VMEM((H, W, 9 * Ce), compute_dtype),        # im2col stage 2
        ],
        compiler_params=pltpu.CompilerParams(
            dimension_semantics=("parallel",)),   # 2-way TC sharding on v7x
    )(x, w1, w2)

    if Ce_out != Ce:
        out = out[:, :, :Ce]
    # NHWC row-major flatten of (H, W) == PyTorch flatten(2).transpose(1, 2).
    return out


def reference_forward(x_nchw, w1_hwio, w2_hwio):
    """Pure-JAX reference (lax conv) for verification."""
    y = jax.lax.conv_general_dilated(
        x_nchw, w1_hwio, window_strides=(1, 1), padding="SAME",
        dimension_numbers=("NCHW", "HWIO", "NCHW"))
    y = jnp.maximum(y, 0.0)
    y = jax.lax.conv_general_dilated(
        y, w2_hwio, window_strides=(1, 1), padding="SAME",
        dimension_numbers=("NCHW", "HWIO", "NCHW"))
    y = jnp.maximum(y, 0.0)
    B, C, H, W = y.shape
    return jnp.transpose(y.reshape(B, C, H * W), (0, 2, 1))


if __name__ == "__main__":
    # Small shapes consistent with the module (input_dim -> embed_dim).
    B, Cin, H, W = 2, 4, 16, 16
    Ce = 32  # embed_dim

    key = jax.random.PRNGKey(0)
    kx, k1, k2 = jax.random.split(key, 3)

    x = jax.random.normal(kx, (B, Cin, H, W), dtype=jnp.float32)
    # Deterministic synthetic weights in HWIO (Conv2d-like scaling).
    w1 = jax.random.normal(k1, (3, 3, Cin, Ce), dtype=jnp.float32) * (
        1.0 / jnp.sqrt(9.0 * Cin))
    w2 = jax.random.normal(k2, (3, 3, Ce, Ce), dtype=jnp.float32) * (
        1.0 / jnp.sqrt(9.0 * Ce))

    ref = jax.block_until_ready(reference_forward(x, w1, w2))

    # 1) f32 MXU-operand path: tight check against the lax.conv reference
    #    (accumulation order differs from lax conv, hence the small tolerance).
    fwd_f32 = jax.jit(functools.partial(conv_module_forward,
                                        compute_dtype=jnp.float32))
    out_f32 = jax.block_until_ready(fwd_f32(x, w1, w2))
    assert out_f32.shape == (B, H * W, Ce), out_f32.shape
    assert jnp.allclose(out_f32, ref, atol=2e-4, rtol=2e-4), \
        float(jnp.max(jnp.abs(out_f32 - ref)))

    # 2) Fast path (bf16 MXU operands / bf16 scratch, f32 accumulation).
    fwd_bf16 = jax.jit(functools.partial(conv_module_forward,
                                         compute_dtype=jnp.bfloat16))
    out_bf16 = jax.block_until_ready(fwd_bf16(x, w1, w2))
    assert out_bf16.shape == (B, H * W, Ce), out_bf16.shape
    assert jnp.allclose(out_bf16, ref, atol=2e-1, rtol=5e-2), \
        float(jnp.max(jnp.abs(out_bf16 - ref)))

    print("KERNEL_OK")
</pallas_src>

<mosaic_0001>
module attributes {stable_mosaic.version = 11 : i64} {
  func.func @_fused_conv3x3x2_relu_kernel(%arg0: i32, %arg1: memref<1x16x16x4xf32, #tpu.memory_space<vmem>>, %arg2: memref<36x32xf32, #tpu.memory_space<vmem>>, %arg3: memref<288x32xf32, #tpu.memory_space<vmem>>, %arg4: memref<1x256x32xf32, #tpu.memory_space<vmem>>, %arg5: memref<18x18x4xf32, #tpu.memory_space<vmem>>, %arg6: memref<18x18x32xf32, #tpu.memory_space<vmem>>, %arg7: memref<16x16x36xf32, #tpu.memory_space<vmem>>, %arg8: memref<16x16x288xf32, #tpu.memory_space<vmem>>) attributes {dimension_semantics = [#tpu.dimension_semantics<parallel>], iteration_bounds = array<i64: 2>, scalar_prefetch = 0 : i64, scratch_operands = 4 : i64, tpu.core_type = #tpu.core_type<tc>, window_params = [{transform_indices = @transform_0, window_bounds = array<i64: 1, 16, 16, 4>}, {pipeline_mode = #tpu.pipeline_mode<synchronous>, transform_indices = @transform_1, window_bounds = array<i64: 36, 32>}, {pipeline_mode = #tpu.pipeline_mode<synchronous>, transform_indices = @transform_2, window_bounds = array<i64: 288, 32>}, {transform_indices = @transform_3, window_bounds = array<i64: 1, 256, 32>}]} {
    %cst = arith.constant 0.000000e+00 : f32
    %0 = vector.broadcast %cst : f32 to vector<1x18x4xf32>
    %cst_0 = arith.constant 0.000000e+00 : f32
    %1 = vector.broadcast %cst_0 : f32 to vector<16x1x4xf32>
    %c0 = arith.constant 0 : index
    %c0_1 = arith.constant 0 : index
    %c0_2 = arith.constant 0 : index
    %2 = vector.load %arg5[%c0, %c0_1, %c0_2] : memref<18x18x4xf32, #tpu.memory_space<vmem>>, vector<1x18x4xf32>
    tpu.vector_store %arg5[%c0, %c0_1, %c0_2], %0 {strides = array<i32>} : memref<18x18x4xf32, #tpu.memory_space<vmem>>, vector<1x18x4xf32>,
    %c17 = arith.constant 17 : index
    %c0_3 = arith.constant 0 : index
    %c0_4 = arith.constant 0 : index
    %3 = vector.load %arg5[%c17, %c0_3, %c0_4] : memref<18x18x4xf32, #tpu.memory_space<vmem>>, vector<1x18x4xf32>
    tpu.vector_store %arg5[%c17, %c0_3, %c0_4], %0 {strides = array<i32>} : memref<18x18x4xf32, #tpu.memory_space<vmem>>, vector<1x18x4xf32>,
    %c1 = arith.constant 1 : index
    %c0_5 = arith.constant 0 : index
    %c0_6 = arith.constant 0 : index
    %4 = vector.load %arg5[%c1, %c0_5, %c0_6] : memref<18x18x4xf32, #tpu.memory_space<vmem>>, vector<16x1x4xf32>
    tpu.vector_store %arg5[%c1, %c0_5, %c0_6], %1 {strides = array<i32>} : memref<18x18x4xf32, #tpu.memory_space<vmem>>, vector<16x1x4xf32>,
    %c1_7 = arith.constant 1 : index
    %c17_8 = arith.constant 17 : index
    %c0_9 = arith.constant 0 : index
    %5 = vector.load %arg5[%c1_7, %c17_8, %c0_9] : memref<18x18x4xf32, #tpu.memory_space<vmem>>, vector<16x1x4xf32>
    tpu.vector_store %arg5[%c1_7, %c17_8, %c0_9], %1 {strides = array<i32>} : memref<18x18x4xf32, #tpu.memory_space<vmem>>, vector<16x1x4xf32>,
    %cst_10 = arith.constant 0.000000e+00 : f32
    %6 = vector.broadcast %cst_10 : f32 to vector<1x18x32xf32>
    %cst_11 = arith.constant 0.000000e+00 : f32
    %7 = vector.broadcast %cst_11 : f32 to vector<16x1x32xf32>
    %c0_12 = arith.constant 0 : index
    %c0_13 = arith.constant 0 : index
    %c0_14 = arith.constant 0 : index
    %8 = vector.load %arg6[%c0_12, %c0_13, %c0_14] : memref<18x18x32xf32, #tpu.memory_space<vmem>>, vector<1x18x32xf32>
    tpu.vector_store %arg6[%c0_12, %c0_13, %c0_14], %6 {strides = array<i32>} : memref<18x18x32xf32, #tpu.memory_space<vmem>>, vector<1x18x32xf32>,
    %c17_15 = arith.constant 17 : index
    %c0_16 = arith.constant 0 : index
    %c0_17 = arith.constant 0 : index
    %9 = vector.load %arg6[%c17_15, %c0_16, %c0_17] : memref<18x18x32xf32, #tpu.memory_space<vmem>>, vector<1x18x32xf32>
    tpu.vector_store %arg6[%c17_15, %c0_16, %c0_17], %6 {strides = array<i32>} : memref<18x18x32xf32, #tpu.memory_space<vmem>>, vector<1x18x32xf32>,
    %c1_18 = arith.constant 1 : index
    %c0_19 = arith.constant 0 : index
    %c0_20 = arith.constant 0 : index
    %10 = vector.load %arg6[%c1_18, %c0_19, %c0_20] : memref<18x18x32xf32, #tpu.memory_space<vmem>>, vector<16x1x32xf32>
    tpu.vector_store %arg6[%c1_18, %c0_19, %c0_20], %7 {strides = array<i32>} : memref<18x18x32xf32, #tpu.memory_space<vmem>>, vector<16x1x32xf32>,
    %c1_21 = arith.constant 1 : index
    %c17_22 = arith.constant 17 : index
    %c0_23 = arith.constant 0 : index
    %11 = vector.load %arg6[%c1_21, %c17_22, %c0_23] : memref<18x18x32xf32, #tpu.memory_space<vmem>>, vector<16x1x32xf32>
    tpu.vector_store %arg6[%c1_21, %c17_22, %c0_23], %7 {strides = array<i32>} : memref<18x18x32xf32, #tpu.memory_space<vmem>>, vector<16x1x32xf32>,
    %c0_24 = arith.constant 0 : index
    %c0_25 = arith.constant 0 : index
    %c0_26 = arith.constant 0 : index
    %c0_27 = arith.constant 0 : index
    %12 = vector.load %arg1[%c0_24, %c0_25, %c0_26, %c0_27] : memref<1x16x16x4xf32, #tpu.memory_space<vmem>>, vector<1x16x16x4xf32>
    %13 = vector.shape_cast %12 : vector<1x16x16x4xf32> to vector<16x16x4xf32>
    %c1_28 = arith.constant 1 : index
    %c1_29 = arith.constant 1 : index
    %c0_30 = arith.constant 0 : index
    %14 = vector.load %arg5[%c1_28, %c1_29, %c0_30] : memref<18x18x4xf32, #tpu.memory_space<vmem>>, vector<16x16x4xf32>
    tpu.vector_store %arg5[%c1_28, %c1_29, %c0_30], %13 {strides = array<i32>} : memref<18x18x4xf32, #tpu.memory_space<vmem>>, vector<16x16x4xf32>,
    %c0_31 = arith.constant 0 : index
    %c0_32 = arith.constant 0 : index
    %c0_33 = arith.constant 0 : index
    %15 = vector.load %arg5[%c0_31, %c0_32, %c0_33] : memref<18x18x4xf32, #tpu.memory_space<vmem>>, vector<16x16x4xf32>
    %c0_34 = arith.constant 0 : index
    %c0_35 = arith.constant 0 : index
    %c0_36 = arith.constant 0 : index
    %16 = vector.load %arg7[%c0_34, %c0_35, %c0_36] : memref<16x16x36xf32, #tpu.memory_space<vmem>>, vector<16x16x4xf32>
    tpu.vector_store %arg7[%c0_34, %c0_35, %c0_36], %15 {strides = array<i32>} : memref<16x16x36xf32, #tpu.memory_space<vmem>>, vector<16x16x4xf32>,
    %c0_37 = arith.constant 0 : index
    %c1_38 = arith.constant 1 : index
    %c0_39 = arith.constant 0 : index
    %17 = vector.load %arg5[%c0_37, %c1_38, %c0_39] : memref<18x18x4xf32, #tpu.memory_space<vmem>>, vector<16x16x4xf32>
    %c0_40 = arith.constant 0 : index
    %c0_41 = arith.constant 0 : index
    %c4 = arith.constant 4 : index
    %18 = vector.load %arg7[%c0_40, %c0_41, %c4] : memref<16x16x36xf32, #tpu.memory_space<vmem>>, vector<16x16x4xf32>
    tpu.vector_store %arg7[%c0_40, %c0_41, %c4], %17 {strides = array<i32>} : memref<16x16x36xf32, #tpu.memory_space<vmem>>, vector<16x16x4xf32>,
    %c0_42 = arith.constant 0 : index
    %c2 = arith.constant 2 : index
    %c0_43 = arith.constant 0 : index
    %19 = vector.load %arg5[%c0_42, %c2, %c0_43] : memref<18x18x4xf32, #tpu.memory_space<vmem>>, vector<16x16x4xf32>
    %c0_44 = arith.constant 0 : index
    %c0_45 = arith.constant 0 : index
    %c8 = arith.constant 8 : index
    %20 = vector.load %arg7[%c0_44, %c0_45, %c8] : memref<16x16x36xf32, #tpu.memory_space<vmem>>, vector<16x16x4xf32>
    tpu.vector_store %arg7[%c0_44, %c0_45, %c8], %19 {strides = array<i32>} : memref<16x16x36xf32, #tpu.memory_space<vmem>>, vector<16x16x4xf32>,
    %c1_46 = arith.constant 1 : index
    %c0_47 = arith.constant 0 : index
    %c0_48 = arith.constant 0 : index
    %21 = vector.load %arg5[%c1_46, %c0_47, %c0_48] : memref<18x18x4xf32, #tpu.memory_space<vmem>>, vector<16x16x4xf32>
    %c0_49 = arith.constant 0 : index
    %c0_50 = arith.constant 0 : index
    %c12 = arith.constant 12 : index
    %22 = vector.load %arg7[%c0_49, %c0_50, %c12] : memref<16x16x36xf32, #tpu.memory_space<vmem>>, vector<16x16x4xf32>
    tpu.vector_store %arg7[%c0_49, %c0_50, %c12], %21 {strides = array<i32>} : memref<16x16x36xf32, #tpu.memory_space<vmem>>, vector<16x16x4xf32>,
    %c1_51 = arith.constant 1 : index
    %c1_52 = arith.constant 1 : index
    %c0_53 = arith.constant 0 : index
    %23 = vector.load %arg5[%c1_51, %c1_52, %c0_53] : memref<18x18x4xf32, #tpu.memory_space<vmem>>, vector<16x16x4xf32>
    %c0_54 = arith.constant 0 : index
    %c0_55 = arith.constant 0 : index
    %c16 = arith.constant 16 : index
    %24 = vector.load %arg7[%c0_54, %c0_55, %c16] : memref<16x16x36xf32, #tpu.memory_space<vmem>>, vector<16x16x4xf32>
    tpu.vector_store %arg7[%c0_54, %c0_55, %c16], %23 {strides = array<i32>} : memref<16x16x36xf32, #tpu.memory_space<vmem>>, vector<16x16x4xf32>,
    %c1_56 = arith.constant 1 : index
    %c2_57 = arith.constant 2 : index
    %c0_58 = arith.constant 0 : index
    %25 = vector.load %arg5[%c1_56, %c2_57, %c0_58] : memref<18x18x4xf32, #tpu.memory_space<vmem>>, vector<16x16x4xf32>
    %c0_59 = arith.constant 0 : index
    %c0_60 = arith.constant 0 : index
    %c20 = arith.constant 20 : index
    %26 = vector.load %arg7[%c0_59, %c0_60, %c20] : memref<16x16x36xf32, #tpu.memory_space<vmem>>, vector<16x16x4xf32>
    tpu.vector_store %arg7[%c0_59, %c0_60, %c20], %25 {strides = array<i32>} : memref<16x16x36xf32, #tpu.memory_space<vmem>>, vector<16x16x4xf32>,
    %c2_61 = arith.constant 2 : index
    %c0_62 = arith.constant 0 : index
    %c0_63 = arith.constant 0 : index
    %27 = vector.load %arg5[%c2_61, %c0_62, %c0_63] : memref<18x18x4xf32, #tpu.memory_space<vmem>>, vector<16x16x4xf32>
    %c0_64 = arith.constant 0 : index
    %c0_65 = arith.constant 0 : index
    %c24 = arith.constant 24 : index
    %28 = vector.load %arg7[%c0_64, %c0_65, %c24] : memref<16x16x36xf32, #tpu.memory_space<vmem>>, vector<16x16x4xf32>
    tpu.vector_store %arg7[%c0_64, %c0_65, %c24], %27 {strides = array<i32>} : memref<16x16x36xf32, #tpu.memory_space<vmem>>, vector<16x16x4xf32>,
    %c2_66 = arith.constant 2 : index
    %c1_67 = arith.constant 1 : index
    %c0_68 = arith.constant 0 : index
    %29 = vector.load %arg5[%c2_66, %c1_67, %c0_68] : memref<18x18x4xf32, #tpu.memory_space<vmem>>, vector<16x16x4xf32>
    %c0_69 = arith.constant 0 : index
    %c0_70 = arith.constant 0 : index
    %c28 = arith.constant 28 : index
    %30 = vector.load %arg7[%c0_69, %c0_70, %c28] : memref<16x16x36xf32, #tpu.memory_space<vmem>>, vector<16x16x4xf32>
    tpu.vector_store %arg7[%c0_69, %c0_70, %c28], %29 {strides = array<i32>} : memref<16x16x36xf32, #tpu.memory_space<vmem>>, vector<16x16x4xf32>,
    %c2_71 = arith.constant 2 : index
    %c2_72 = arith.constant 2 : index
    %c0_73 = arith.constant 0 : index
    %31 = vector.load %arg5[%c2_71, %c2_72, %c0_73] : memref<18x18x4xf32, #tpu.memory_space<vmem>>, vector<16x16x4xf32>
    %c0_74 = arith.constant 0 : index
    %c0_75 = arith.constant 0 : index
    %c32 = arith.constant 32 : index
    %32 = vector.load %arg7[%c0_74, %c0_75, %c32] : memref<16x16x36xf32, #tpu.memory_space<vmem>>, vector<16x16x4xf32>
    tpu.vector_store %arg7[%c0_74, %c0_75, %c32], %31 {strides = array<i32>} : memref<16x16x36xf32, #tpu.memory_space<vmem>>, vector<16x16x4xf32>,
    %c0_76 = arith.constant 0 : index
    %c0_77 = arith.constant 0 : index
    %c0_78 = arith.constant 0 : index
    %33 = vector.load %arg7[%c0_76, %c0_77, %c0_78] : memref<16x16x36xf32, #tpu.memory_space<vmem>>, vector<16x16x36xf32>
    %34 = vector.shape_cast %33 : vector<16x16x36xf32> to vector<256x36xf32>
    %c0_79 = arith.constant 0 : index
    %c0_80 = arith.constant 0 : index
    %35 = vector.load %arg2[%c0_79, %c0_80] : memref<36x32xf32, #tpu.memory_space<vmem>>, vector<36x32xf32>
    %cst_81 = arith.constant dense<0.000000e+00> : vector<256x32xf32>
    %36 = tpu.matmul %34, %35, %cst_81 {dimension_numbers = #tpu.dot_dimension_numbers<[1], [0], [0], [1], [0, 0, 1, 1], [], []>} : vector<256x36xf32>, vector<36x32xf32>, vector<256x32xf32> -> vector<256x32xf32>
    %cst_82 = arith.constant 0.000000e+00 : f32
    %37 = vector.broadcast %cst_82 : f32 to vector<256x32xf32>
    %38 = arith.maximumf %36, %37 : vector<256x32xf32>
    %39 = vector.shape_cast %38 : vector<256x32xf32> to vector<16x16x32xf32>
    %c1_83 = arith.constant 1 : index
    %c1_84 = arith.constant 1 : index
    %c0_85 = arith.constant 0 : index
    %40 = vector.load %arg6[%c1_83, %c1_84, %c0_85] : memref<18x18x32xf32, #tpu.memory_space<vmem>>, vector<16x16x32xf32>
    tpu.vector_store %arg6[%c1_83, %c1_84, %c0_85], %39 {strides = array<i32>} : memref<18x18x32xf32, #tpu.memory_space<vmem>>, vector<16x16x32xf32>,
    %c0_86 = arith.constant 0 : index
    %c0_87 = arith.constant 0 : index
    %c0_88 = arith.constant 0 : index
    %41 = vector.load %arg6[%c0_86, %c0_87, %c0_88] : memref<18x18x32xf32, #tpu.memory_space<vmem>>, vector<16x16x32xf32>
    %c0_89 = arith.constant 0 : index
    %c0_90 = arith.constant 0 : index
    %c0_91 = arith.constant 0 : index
    %42 = vector.load %arg8[%c0_89, %c0_90, %c0_91] : memref<16x16x288xf32, #tpu.memory_space<vmem>>, vector<16x16x32xf32>
    tpu.vector_store %arg8[%c0_89, %c0_90, %c0_91], %41 {strides = array<i32>} : memref<16x16x288xf32, #tpu.memory_space<vmem>>, vector<16x16x32xf32>,
    %c0_92 = arith.constant 0 : index
    %c1_93 = arith.constant 1 : index
    %c0_94 = arith.constant 0 : index
    %43 = vector.load %arg6[%c0_92, %c1_93, %c0_94] : memref<18x18x32xf32, #tpu.memory_space<vmem>>, vector<16x16x32xf32>
    %c0_95 = arith.constant 0 : index
    %c0_96 = arith.constant 0 : index
    %c32_97 = arith.constant 32 : index
    %44 = vector.load %arg8[%c0_95, %c0_96, %c32_97] : memref<16x16x288xf32, #tpu.memory_space<vmem>>, vector<16x16x32xf32>
    tpu.vector_store %arg8[%c0_95, %c0_96, %c32_97], %43 {strides = array<i32>} : memref<16x16x288xf32, #tpu.memory_space<vmem>>, vector<16x16x32xf32>,
    %c0_98 = arith.constant 0 : index
    %c2_99 = arith.constant 2 : index
    %c0_100 = arith.constant 0 : index
    %45 = vector.load %arg6[%c0_98, %c2_99, %c0_100] : memref<18x18x32xf32, #tpu.memory_space<vmem>>, vector<16x16x32xf32>
    %c0_101 = arith.constant 0 : index
    %c0_102 = arith.constant 0 : index
    %c64 = arith.constant 64 : index
    %46 = vector.load %arg8[%c0_101, %c0_102, %c64] : memref<16x16x288xf32, #tpu.memory_space<vmem>>, vector<16x16x32xf32>
    tpu.vector_store %arg8[%c0_101, %c0_102, %c64], %45 {strides = array<i32>} : memref<16x16x288xf32, #tpu.memory_space<vmem>>, vector<16x16x32xf32>,
    %c1_103 = arith.constant 1 : index
    %c0_104 = arith.constant 0 : index
    %c0_105 = arith.constant 0 : index
    %47 = vector.load %arg6[%c1_103, %c0_104, %c0_105] : memref<18x18x32xf32, #tpu.memory_space<vmem>>, vector<16x16x32xf32>
    %c0_106 = arith.constant 0 : index
    %c0_107 = arith.constant 0 : index
    %c96 = arith.constant 96 : index
    %48 = vector.load %arg8[%c0_106, %c0_107, %c96] : memref<16x16x288xf32, #tpu.memory_space<vmem>>, vector<16x16x32xf32>
    tpu.vector_store %arg8[%c0_106, %c0_107, %c96], %47 {strides = array<i32>} : memref<16x16x288xf32, #tpu.memory_space<vmem>>, vector<16x16x32xf32>,
    %c1_108 = arith.constant 1 : index
    %c1_109 = arith.constant 1 : index
    %c0_110 = arith.constant 0 : index
    %49 = vector.load %arg6[%c1_108, %c1_109, %c0_110] : memref<18x18x32xf32, #tpu.memory_space<vmem>>, vector<16x16x32xf32>
    %c0_111 = arith.constant 0 : index
    %c0_112 = arith.constant 0 : index
    %c128 = arith.constant 128 : index
    %50 = vector.load %arg8[%c0_111, %c0_112, %c128] : memref<16x16x288xf32, #tpu.memory_space<vmem>>, vector<16x16x32xf32>
    tpu.vector_store %arg8[%c0_111, %c0_112, %c128], %49 {strides = array<i32>} : memref<16x16x288xf32, #tpu.memory_space<vmem>>, vector<16x16x32xf32>,
    %c1_113 = arith.constant 1 : index
    %c2_114 = arith.constant 2 : index
    %c0_115 = arith.constant 0 : index
    %51 = vector.load %arg6[%c1_113, %c2_114, %c0_115] : memref<18x18x32xf32, #tpu.memory_space<vmem>>, vector<16x16x32xf32>
    %c0_116 = arith.constant 0 : index
    %c0_117 = arith.constant 0 : index
    %c160 = arith.constant 160 : index
    %52 = vector.load %arg8[%c0_116, %c0_117, %c160] : memref<16x16x288xf32, #tpu.memory_space<vmem>>, vector<16x16x32xf32>
    tpu.vector_store %arg8[%c0_116, %c0_117, %c160], %51 {strides = array<i32>} : memref<16x16x288xf32, #tpu.memory_space<vmem>>, vector<16x16x32xf32>,
    %c2_118 = arith.constant 2 : index
    %c0_119 = arith.constant 0 : index
    %c0_120 = arith.constant 0 : index
    %53 = vector.load %arg6[%c2_118, %c0_119, %c0_120] : memref<18x18x32xf32, #tpu.memory_space<vmem>>, vector<16x16x32xf32>
    %c0_121 = arith.constant 0 : index
    %c0_122 = arith.constant 0 : index
    %c192 = arith.constant 192 : index
    %54 = vector.load %arg8[%c0_121, %c0_122, %c192] : memref<16x16x288xf32, #tpu.memory_space<vmem>>, vector<16x16x32xf32>
    tpu.vector_store %arg8[%c0_121, %c0_122, %c192], %53 {strides = array<i32>} : memref<16x16x288xf32, #tpu.memory_space<vmem>>, vector<16x16x32xf32>,
    %c2_123 = arith.constant 2 : index
    %c1_124 = arith.constant 1 : index
    %c0_125 = arith.constant 0 : index
    %55 = vector.load %arg6[%c2_123, %c1_124, %c0_125] : memref<18x18x32xf32, #tpu.memory_space<vmem>>, vector<16x16x32xf32>
    %c0_126 = arith.constant 0 : index
    %c0_127 = arith.constant 0 : index
    %c224 = arith.constant 224 : index
    %56 = vector.load %arg8[%c0_126, %c0_127, %c224] : memref<16x16x288xf32, #tpu.memory_space<vmem>>, vector<16x16x32xf32>
    tpu.vector_store %arg8[%c0_126, %c0_127, %c224], %55 {strides = array<i32>} : memref<16x16x288xf32, #tpu.memory_space<vmem>>, vector<16x16x32xf32>,
    %c2_128 = arith.constant 2 : index
    %c2_129 = arith.constant 2 : index
    %c0_130 = arith.constant 0 : index
    %57 = vector.load %arg6[%c2_128, %c2_129, %c0_130] : memref<18x18x32xf32, #tpu.memory_space<vmem>>, vector<16x16x32xf32>
    %c0_131 = arith.constant 0 : index
    %c0_132 = arith.constant 0 : index
    %c256 = arith.constant 256 : index
    %58 = vector.load %arg8[%c0_131, %c0_132, %c256] : memref<16x16x288xf32, #tpu.memory_space<vmem>>, vector<16x16x32xf32>
    tpu.vector_store %arg8[%c0_131, %c0_132, %c256], %57 {strides = array<i32>} : memref<16x16x288xf32, #tpu.memory_space<vmem>>, vector<16x16x32xf32>,
    %c0_133 = arith.constant 0 : index
    %c0_134 = arith.constant 0 : index
    %c0_135 = arith.constant 0 : index
    %59 = vector.load %arg8[%c0_133, %c0_134, %c0_135] : memref<16x16x288xf32, #tpu.memory_space<vmem>>, vector<16x16x288xf32>
    %60 = vector.shape_cast %59 : vector<16x16x288xf32> to vector<256x288xf32>
    %c0_136 = arith.constant 0 : index
    %c0_137 = arith.constant 0 : index
    %61 = vector.load %arg3[%c0_136, %c0_137] : memref<288x32xf32, #tpu.memory_space<vmem>>, vector<288x32xf32>
    %cst_138 = arith.constant dense<0.000000e+00> : vector<256x32xf32>
    %62 = tpu.matmul %60, %61, %cst_138 {dimension_numbers = #tpu.dot_dimension_numbers<[1], [0], [0], [1], [0, 0, 1, 1], [], []>} : vector<256x288xf32>, vector<288x32xf32>, vector<256x32xf32> -> vector<256x32xf32>
    %cst_139 = arith.constant 0.000000e+00 : f32
    %63 = vector.broadcast %cst_139 : f32 to vector<256x32xf32>
    %64 = arith.maximumf %62, %63 : vector<256x32xf32>
    %c0_140 = arith.constant 0 : index
    %c0_141 = arith.constant 0 : index
    %c0_142 = arith.constant 0 : index
    %65 = vector.load %arg4[%c0_140, %c0_141, %c0_142] : memref<1x256x32xf32, #tpu.memory_space<vmem>>, vector<1x256x32xf32>
    %66 = vector.shape_cast %65 : vector<1x256x32xf32> to vector<256x32xf32>
    %67 = vector.shape_cast %64 : vector<256x32xf32> to vector<1x256x32xf32>
    tpu.vector_store %arg4[%c0_140, %c0_141, %c0_142], %67 {strides = array<i32>} : memref<1x256x32xf32, #tpu.memory_space<vmem>>, vector<1x256x32xf32>,
    return
  }
  func.func @transform_0(%arg0: i32) -> (i32, i32, i32, i32) {
    %c0_i32 = arith.constant 0 : i32
    %c0_i32_0 = arith.constant 0 : i32
    %c0_i32_1 = arith.constant 0 : i32
    %c0_i32_2 = arith.constant 0 : i32
    return %arg0, %c0_i32, %c0_i32_0, %c0_i32_1 : i32, i32, i32, i32
  }
  func.func @transform_1(%arg0: i32) -> (i32, i32) {
    %c0_i32 = arith.constant 0 : i32
    %c0_i32_0 = arith.constant 0 : i32
    %c0_i32_1 = arith.constant 0 : i32
    return %c0_i32, %c0_i32_0 : i32, i32
  }
  func.func @transform_2(%arg0: i32) -> (i32, i32) {
    %c0_i32 = arith.constant 0 : i32
    %c0_i32_0 = arith.constant 0 : i32
    %c0_i32_1 = arith.constant 0 : i32
    return %c0_i32, %c0_i32_0 : i32, i32
  }
  func.func @transform_3(%arg0: i32) -> (i32, i32, i32) {
    %c0_i32 = arith.constant 0 : i32
    %c0_i32_0 = arith.constant 0 : i32
    %c0_i32_1 = arith.constant 0 : i32
    return %arg0, %c0_i32, %c0_i32_0 : i32, i32, i32
  }
}

</mosaic_0001>

<llo_original>
// kernel: conv_module_forward.1
$region0: #{conv_module_forward.1}
  #allocation0 [shape = 'u32[]', space=smem, size = 0x4, offset = 0x4, fixed_abs, tag = 'smem constant byte address 0x4 - core index']
  #allocation1 [shape = 'u32[144,128]{1,0:T(1,128)}', space=vmem, size = 0x12000, scoped, tag = 'internal scratch']
  #allocation2 [shape = 'f32[18,18,4]{2,1,0:T(8,128)}', space=vmem, size = 0x36000, scoped, tag = 'scratch operand']
  #allocation3 [shape = 'f32[18,18,32]{2,1,0:T(8,128)}', space=vmem, size = 0x36000, scoped, tag = 'scratch operand']
  #allocation4 [shape = 'f32[16,16,36]{2,1,0:T(8,128)}', space=vmem, size = 0x20000, scoped, tag = 'scratch operand']
  #allocation5 [shape = 'f32[16,16,288]{2,1,0:T(8,128)}', space=vmem, size = 0x60000, scoped, tag = 'scratch operand']
  %s0 = inlined_call_operand.vmem [shape: f32[2,16,16,4], index: 0, kind: input, shape index: {}]
  %s1 = inlined_call_operand.vmem [shape: f32[36,32], index: 1, kind: input, shape index: {}]
  %s2 = inlined_call_operand.vmem [shape: f32[288,32], index: 2, kind: input, shape index: {}]
  %s3 = inlined_call_operand.vmem [shape: f32[2,256,32], index: 3, kind: output, shape index: {}]
  %s4 = sld [smem:[#allocation0]]
  $region45: #{conv_module_forward.1} parent=0
    _
  %s6 = ssub.s32 1, %s4
  %s7 = scalar_select 0, %s6, %s4
  loop: start=0, step=1, limit=4
  $region2: #{conv_module_forward.1} parent=0 // loop_pre_header
    _
  $region3: #{conv_module_forward.1} parent=0 // loop_header
    %s9 = sphi 0, %s13
    %p10 = scmp.ge.s32.totalorder %s9, 4
    %s19 = sphi 0, %s21
    %s22 = sphi 0, %s19
    %s23 = sphi 0, %s22
    %s39 = sphi 0, %s23
    %s43 = sphi 0, %s43
    %s45 = sphi 0, %s43
    %s46 = sphi 0, %s45
    %s60 = sphi 0, %s46
    %s64 = sphi 0, %s64
    %s66 = sphi 0, %s64
    %s67 = sphi 0, %s66
    %s81 = sphi 0, %s67
    %s87 = sphi 0, %s89
    %s90 = sphi 0, %s87
    %s91 = sphi 0, %s90
    %s107 = sphi 0, %s91
  $region4: #{conv_module_forward.1} parent=0 // loop_header_branch
    %12 = sbr.rel (%p10) target = $region8
  $region5: #{conv_module_forward.1} parent=0 // loop_body
    %s14 = ssub.s32 %s9, 1
    %s15 = ssub.s32 %s9, 2
    %s16 = sadd.s32 %s9, 1
    %s17 = ssub.s32 %s9, %s16
    %p18 = scmp.eq.s32.totalorder %s17, 0
    %s20 = sadd.s32 %s19, 1
    %s21 = scalar_select %p18, %s19, %s20
    %p24 = pneg %p18
    %p25 = scmp.eq.s32.totalorder %s9, 1
    %p26 = por %p24, %p25
    %p27 = scmp.ne.s32.totalorder %s19, %s22
    %p28 = scmp.eq.s32.totalorder %s9, 0
    %p29 = por %p27, %p28
    %p30 = scmp.ne.s32.totalorder %s19, %s22
    %p31 = scmp.eq.s32.totalorder %s14, 1
    %p32 = por %p30, %p31
    %p33 = scmp.ne.s32.totalorder %s22, %s23
    %p34 = scmp.eq.s32.totalorder %s14, 0
    %p35 = por %p33, %p34
    %p36 = scmp.ne.s32.totalorder %s22, %s23
    %p37 = scmp.eq.s32.totalorder %s15, 1
    %p38 = por %p36, %p37
    %p40 = scmp.ne.s32.totalorder %s23, %s39
    %p41 = scmp.eq.s32.totalorder %s15, 0
    %p42 = por %p40, %p41
    %s44 = sadd.s32 %s43, 1
    %p47 = scmp.eq.s32.totalorder %s9, 1
    %p48 = scmp.ne.s32.totalorder %s43, %s45
    %p49 = scmp.eq.s32.totalorder %s9, 0
    %p50 = por %p48, %p49
    %p51 = scmp.ne.s32.totalorder %s43, %s45
    %p52 = scmp.eq.s32.totalorder %s14, 1
    %p53 = por %p51, %p52
    %p54 = scmp.ne.s32.totalorder %s45, %s46
    %p55 = scmp.eq.s32.totalorder %s14, 0
    %p56 = por %p54, %p55
    %p57 = scmp.ne.s32.totalorder %s45, %s46
    %p58 = scmp.eq.s32.totalorder %s15, 1
    %p59 = por %p57, %p58
    %p61 = scmp.ne.s32.totalorder %s46, %s60
    %p62 = scmp.eq.s32.totalorder %s15, 0
    %p63 = por %p61, %p62
    %s65 = sadd.s32 %s64, 1
    %p68 = scmp.eq.s32.totalorder %s9, 1
    %p69 = scmp.ne.s32.totalorder %s64, %s66
    %p70 = scmp.eq.s32.totalorder %s9, 0
    %p71 = por %p69, %p70
    %p72 = scmp.ne.s32.totalorder %s64, %s66
    %p73 = scmp.eq.s32.totalorder %s14, 1
    %p74 = por %p72, %p73
    %p75 = scmp.ne.s32.totalorder %s66, %s67
    %p76 = scmp.eq.s32.totalorder %s14, 0
    %p77 = por %p75, %p76
    %p78 = scmp.ne.s32.totalorder %s66, %s67
    %p79 = scmp.eq.s32.totalorder %s15, 1
    %p80 = por %p78, %p79
    %p82 = scmp.ne.s32.totalorder %s67, %s81
    %p83 = scmp.eq.s32.totalorder %s15, 0
    %p84 = por %p82, %p83
    %s85 = ssub.s32 %s9, %s16
    %p86 = scmp.eq.s32.totalorder %s85, 0
    %s88 = sadd.s32 %s87, 1
    %s89 = scalar_select %p86, %s87, %s88
    %p92 = pneg %p86
    %p93 = scmp.eq.s32.totalorder %s9, 1
    %p94 = por %p92, %p93
    %p95 = scmp.ne.s32.totalorder %s87, %s90
    %p96 = scmp.eq.s32.totalorder %s9, 0
    %p97 = por %p95, %p96
    %p98 = scmp.ne.s32.totalorder %s87, %s90
    %p99 = scmp.eq.s32.totalorder %s14, 1
    %p100 = por %p98, %p99
    %p101 = scmp.ne.s32.totalorder %s90, %s91
    %p102 = scmp.eq.s32.totalorder %s14, 0
    %p103 = por %p101, %p102
    %p104 = scmp.ne.s32.totalorder %s90, %s91
    %p105 = scmp.eq.s32.totalorder %s15, 1
    %p106 = por %p104, %p105
    %p108 = scmp.ne.s32.totalorder %s91, %s107
    %p109 = scmp.eq.s32.totalorder %s15, 0
    %p110 = por %p108, %p109
    %p111 = scmp.le.s32.totalorder 1, %s9
    %p112 = scmp.lt.s32.totalorder %s9, 3
    %p113 = pnand %p111, %p112
    %p114 = pneg %p113
    // Predicated region
    $region9: #{conv_module_forward.1} parent=5 // pred_check
      _
    $region10: #{conv_module_forward.1} parent=5 // pred_check_branch
      %116 = sbr.rel (%p113) target = $region12
    $region11: #{conv_module_forward.1} parent=5 // pred_region
      %s117 = ssub.s32 %s9, 1
      // Predicated region
      $region13: #{conv_module_forward.1} parent=11 // pred_check
        %p118 = pneg %p56
      $region14: #{conv_module_forward.1} parent=11 // pred_check_branch
        %120 = sbr.rel (%p118) target = $region16
      $region15: #{conv_module_forward.1} parent=11 // pred_region
        _
      $region16: #{conv_module_forward.1} parent=11 // pred_fallthru
        _
      // Predicated region
      $region17: #{conv_module_forward.1} parent=11 // pred_check
        %p121 = pneg %p77
      $region18: #{conv_module_forward.1} parent=11 // pred_check_branch
        %123 = sbr.rel (%p121) target = $region20
      $region19: #{conv_module_forward.1} parent=11 // pred_region
        _
      $region20: #{conv_module_forward.1} parent=11 // pred_fallthru
        _
    $region12: #{conv_module_forward.1} parent=5 // pred_fallthru
      _
    %p124 = scmp.lt.s32.totalorder %s9, 2
    // Predicated region
    $region21: #{conv_module_forward.1} parent=5 // pred_check
      %p125 = pneg %p124
    $region22: #{conv_module_forward.1} parent=5 // pred_check_branch
      %127 = sbr.rel (%p125) target = $region24
    $region23: #{conv_module_forward.1} parent=5 // pred_region
      // Predicated region
      $region25: #{conv_module_forward.1} parent=23 // pred_check
        %p128 = pneg %p29
      $region26: #{conv_module_forward.1} parent=23 // pred_check_branch
        %130 = sbr.rel (%p128) target = $region28
      $region27: #{conv_module_forward.1} parent=23 // pred_region
        %p131 = scmp.lt.s32.totalorder %s9, 1
        %s132 = scalar_select %p131, %s9, 1
        %s133 = smul.addr %s132, 32
        %s134 = smul.addr %s133, 8
        %s135 = scalar_lea.vmem %s0, %s134
      $region28: #{conv_module_forward.1} parent=23 // pred_fallthru
        _
    $region24: #{conv_module_forward.1} parent=5 // pred_fallthru
      _
    %p136 = scmp.le.s32.totalorder 1, %s9
    %p137 = scmp.lt.s32.totalorder %s9, 3
    %p138 = pnand %p136, %p137
    %p139 = pneg %p138
    // Predicated region
    $region29: #{conv_module_forward.1} parent=5 // pred_check
      _
    $region30: #{conv_module_forward.1} parent=5 // pred_check_branch
      %141 = sbr.rel (%p138) target = $region32
    $region31: #{conv_module_forward.1} parent=5 // pred_region
      %s142 = ssub.s32 %s9, 1
      %p143 = scmp.lt.s32.totalorder %s14, 1
      %s144 = scalar_select %p143, %s14, 1
      %s145 = smul.addr %s144, 32
      %s146 = smul.addr %s145, 8
      %s147 = scalar_lea.vmem %s0, %s146
      %p148 = pneg %p35
      %p149 = pneg %p32
      %p150 = pneg %p56
      %p151 = pneg %p53
      %p152 = pneg %p77
      %p153 = pneg %p74
      %p154 = pneg %p103
      %p155 = pneg %p100
      %p156 = scmp.lt.s32.totalorder %s14, 1
      %s157 = scalar_select %p156, %s14, 1
      %s158 = smul.addr %s157, 32
      %s159 = smul.addr %s158, 8
      %s160 = scalar_lea.vmem %s3, %s159
      %p161 = scmp.lt.s32.totalorder %s14, 1
      %s162 = scalar_select %p161, %s14, 1
      %s163 = smul.addr %s162, 32
      %s164 = smul.addr %s163, 8
      %s165 = scalar_lea.vmem %s0, %s164
      %p166 = scmp.lt.s32.totalorder %s14, 1
      %s167 = scalar_select %p166, %s14, 1
      %s168 = smul.addr %s167, 32
      %s169 = smul.addr %s168, 8
      %s170 = scalar_lea.vmem %s3, %s169
      %vm171 = vcmask 31744
      %172 = vst.msk [vmem:[#allocation2] sm:$0xff] %vm171, 0.0
      %173 = vst.msk [vmem:[#allocation2 + $0x8] sm:$0xff] %vm171, 0.0
      %vm174 = vcmask 25600
      %175 = vst.msk [vmem:[#allocation2 + $0x10] sm:$0x3] %vm174, 0.0
      %s176 = scalar_lea.vmem [#allocation2], 408
      %177 = vst.msk [vmem:[%s176] sm:$0xff] %vm171, 0.0
      %178 = vst.msk [vmem:[%s176 + $0x8] sm:$0xff] %vm171, 0.0
      %179 = vst.msk [vmem:[%s176 + $0x10] sm:$0x3] %vm174, 0.0
      %s180 = scalar_lea.vmem [#allocation2], 24
      %vm181 = vcmask 24576
      %182 = vst.msk [vmem:[%s180] sm:$0x1] %vm181, 0.0
      %183 = vst.msk [vmem:[%s180 + $0x18] sm:$0x1] %vm181, 0.0
      %184 = vst.msk [vmem:[%s180 + $0x30] sm:$0x1] %vm181, 0.0
      %185 = vst.msk [vmem:[%s180 + $0x48] sm:$0x1] %vm181, 0.0
      %186 = vst.msk [vmem:[%s180 + $0x60] sm:$0x1] %vm181, 0.0
      %187 = vst.msk [vmem:[%s180 + $0x78] sm:$0x1] %vm181, 0.0
      %188 = vst.msk [vmem:[%s180 + $0x90] sm:$0x1] %vm181, 0.0
      %189 = vst.msk [vmem:[%s180 + $0xa8] sm:$0x1] %vm181, 0.0
      %190 = vst.msk [vmem:[%s180 + $0xc0] sm:$0x1] %vm181, 0.0
      %191 = vst.msk [vmem:[%s180 + $0xd8] sm:$0x1] %vm181, 0.0
      %192 = vst.msk [vmem:[%s180 + $0xf0] sm:$0x1] %vm181, 0.0
      %193 = vst.msk [vmem:[%s180 + $0x108] sm:$0x1] %vm181, 0.0
      %194 = vst.msk [vmem:[%s180 + $0x120] sm:$0x1] %vm181, 0.0
      %195 = vst.msk [vmem:[%s180 + $0x138] sm:$0x1] %vm181, 0.0
      %196 = vst.msk [vmem:[%s180 + $0x150] sm:$0x1] %vm181, 0.0
      %197 = vst.msk [vmem:[%s180 + $0x168] sm:$0x1] %vm181, 0.0
      %198 = vst.msk [vmem:[%s180 + $0x11] sm:$0x1] %vm181, 0.0
      %199 = vst.msk [vmem:[%s180 + $0x29] sm:$0x1] %vm181, 0.0
      %200 = vst.msk [vmem:[%s180 + $0x41] sm:$0x1] %vm181, 0.0
      %201 = vst.msk [vmem:[%s180 + $0x59] sm:$0x1] %vm181, 0.0
      %202 = vst.msk [vmem:[%s180 + $0x71] sm:$0x1] %vm181, 0.0
      %203 = vst.msk [vmem:[%s180 + $0x89] sm:$0x1] %vm181, 0.0
      %204 = vst.msk [vmem:[%s180 + $0xa1] sm:$0x1] %vm181, 0.0
      %205 = vst.msk [vmem:[%s180 + $0xb9] sm:$0x1] %vm181, 0.0
      %206 = vst.msk [vmem:[%s180 + $0xd1] sm:$0x1] %vm181, 0.0
      %207 = vst.msk [vmem:[%s180 + $0xe9] sm:$0x1] %vm181, 0.0
      %208 = vst.msk [vmem:[%s180 + $0x101] sm:$0x1] %vm181, 0.0
      %209 = vst.msk [vmem:[%s180 + $0x119] sm:$0x1] %vm181, 0.0
      %210 = vst.msk [vmem:[%s180 + $0x131] sm:$0x1] %vm181, 0.0
      %211 = vst.msk [vmem:[%s180 + $0x149] sm:$0x1] %vm181, 0.0
      %212 = vst.msk [vmem:[%s180 + $0x161] sm:$0x1] %vm181, 0.0
      %213 = vst.msk [vmem:[%s180 + $0x179] sm:$0x1] %vm181, 0.0
      %vm214 = vcmask 261120
      %215 = vst.msk [vmem:[#allocation3] sm:$0xff] %vm214, 0.0
      %216 = vst.msk [vmem:[#allocation3 + $0x8] sm:$0xff] %vm214, 0.0
      %vm217 = vcmask 254976
      %218 = vst.msk [vmem:[#allocation3 + $0x10] sm:$0x3] %vm217, 0.0
      %s219 = scalar_lea.vmem [#allocation3], 408
      %220 = vst.msk [vmem:[%s219] sm:$0xff] %vm214, 0.0
      %221 = vst.msk [vmem:[%s219 + $0x8] sm:$0xff] %vm214, 0.0
      %222 = vst.msk [vmem:[%s219 + $0x10] sm:$0x3] %vm217, 0.0
      %s223 = scalar_lea.vmem [#allocation3], 24
      %vm224 = vcmask 253952
      %225 = vst.msk [vmem:[%s223] sm:$0x1] %vm224, 0.0
      %226 = vst.msk [vmem:[%s223 + $0x18] sm:$0x1] %vm224, 0.0
      %227 = vst.msk [vmem:[%s223 + $0x30] sm:$0x1] %vm224, 0.0
      %228 = vst.msk [vmem:[%s223 + $0x48] sm:$0x1] %vm224, 0.0
      %229 = vst.msk [vmem:[%s223 + $0x60] sm:$0x1] %vm224, 0.0
      %230 = vst.msk [vmem:[%s223 + $0x78] sm:$0x1] %vm224, 0.0
      %231 = vst.msk [vmem:[%s223 + $0x90] sm:$0x1] %vm224, 0.0
      %232 = vst.msk [vmem:[%s223 + $0xa8] sm:$0x1] %vm224, 0.0
      %233 = vst.msk [vmem:[%s223 + $0xc0] sm:$0x1] %vm224, 0.0
      %234 = vst.msk [vmem:[%s223 + $0xd8] sm:$0x1] %vm224, 0.0
      %235 = vst.msk [vmem:[%s223 + $0xf0] sm:$0x1] %vm224, 0.0
      %236 = vst.msk [vmem:[%s223 + $0x108] sm:$0x1] %vm224, 0.0
      %237 = vst.msk [vmem:[%s223 + $0x120] sm:$0x1] %vm224, 0.0
      %238 = vst.msk [vmem:[%s223 + $0x138] sm:$0x1] %vm224, 0.0
      %239 = vst.msk [vmem:[%s223 + $0x150] sm:$0x1] %vm224, 0.0
      %240 = vst.msk [vmem:[%s223 + $0x168] sm:$0x1] %vm224, 0.0
      %241 = vst.msk [vmem:[%s223 + $0x11] sm:$0x1] %vm224, 0.0
      %242 = vst.msk [vmem:[%s223 + $0x29] sm:$0x1] %vm224, 0.0
      %243 = vst.msk [vmem:[%s223 + $0x41] sm:$0x1] %vm224, 0.0
      %244 = vst.msk [vmem:[%s223 + $0x59] sm:$0x1] %vm224, 0.0
      %245 = vst.msk [vmem:[%s223 + $0x71] sm:$0x1] %vm224, 0.0
      %246 = vst.msk [vmem:[%s223 + $0x89] sm:$0x1] %vm224, 0.0
      %247 = vst.msk [vmem:[%s223 + $0xa1] sm:$0x1] %vm224, 0.0
      %248 = vst.msk [vmem:[%s223 + $0xb9] sm:$0x1] %vm224, 0.0
      %249 = vst.msk [vmem:[%s223 + $0xd1] sm:$0x1] %vm224, 0.0
      %250 = vst.msk [vmem:[%s223 + $0xe9] sm:$0x1] %vm224, 0.0
      %251 = vst.msk [vmem:[%s223 + $0x101] sm:$0x1] %vm224, 0.0
      %252 = vst.msk [vmem:[%s223 + $0x119] sm:$0x1] %vm224, 0.0
      %253 = vst.msk [vmem:[%s223 + $0x131] sm:$0x1] %vm224, 0.0
      %254 = vst.msk [vmem:[%s223 + $0x149] sm:$0x1] %vm224, 0.0
      %255 = vst.msk [vmem:[%s223 + $0x161] sm:$0x1] %vm224, 0.0
      %256 = vst.msk [vmem:[%s223 + $0x179] sm:$0x1] %vm224, 0.0
      %v257 = vld [vmem:[%s165] sm:$0xff]
      %v258 = vld [vmem:[%s165 + $0x8] sm:$0xff]
      %v259 = vld [vmem:[%s165 + $0x10] sm:$0xff]
      %v260 = vld [vmem:[%s165 + $0x18] sm:$0xff]
      %v261 = vld [vmem:[%s165 + $0x20] sm:$0xff]
      %v262 = vld [vmem:[%s165 + $0x28] sm:$0xff]
      %v263 = vld [vmem:[%s165 + $0x30] sm:$0xff]
      %v264 = vld [vmem:[%s165 + $0x38] sm:$0xff]
      %v265 = vld [vmem:[%s165 + $0x40] sm:$0xff]
      %v266 = vld [vmem:[%s165 + $0x48] sm:$0xff]
      %v267 = vld [vmem:[%s165 + $0x50] sm:$0xff]
      %v268 = vld [vmem:[%s165 + $0x58] sm:$0xff]
      %v269 = vld [vmem:[%s165 + $0x60] sm:$0xff]
      %v270 = vld [vmem:[%s165 + $0x68] sm:$0xff]
      %v271 = vld [vmem:[%s165 + $0x70] sm:$0xff]
      %v272 = vld [vmem:[%s165 + $0x78] sm:$0xff]
      %v273 = vld [vmem:[%s165 + $0x80] sm:$0xff]
      %v274 = vld [vmem:[%s165 + $0x88] sm:$0xff]
      %v275 = vld [vmem:[%s165 + $0x90] sm:$0xff]
      %v276 = vld [vmem:[%s165 + $0x98] sm:$0xff]
      %v277 = vld [vmem:[%s165 + $0xa0] sm:$0xff]
      %v278 = vld [vmem:[%s165 + $0xa8] sm:$0xff]
      %v279 = vld [vmem:[%s165 + $0xb0] sm:$0xff]
      %v280 = vld [vmem:[%s165 + $0xb8] sm:$0xff]
      %v281 = vld [vmem:[%s165 + $0xc0] sm:$0xff]
      %v282 = vld [vmem:[%s165 + $0xc8] sm:$0xff]
      %v283 = vld [vmem:[%s165 + $0xd0] sm:$0xff]
      %v284 = vld [vmem:[%s165 + $0xd8] sm:$0xff]
      %v285 = vld [vmem:[%s165 + $0xe0] sm:$0xff]
      %v286 = vld [vmem:[%s165 + $0xe8] sm:$0xff]
      %v287 = vld [vmem:[%s165 + $0xf0] sm:$0xff]
      %v288 = vld [vmem:[%s165 + $0xf8] sm:$0xff]
      %289 = vst.msk [vmem:[%s180 + $0x1] sm:$0xff] %vm171, %v257
      %290 = vst.msk [vmem:[%s180 + $0x9] sm:$0xff] %vm171, %v258
      %291 = vst.msk [vmem:[%s180 + $0x19] sm:$0xff] %vm171, %v259
      %292 = vst.msk [vmem:[%s180 + $0x21] sm:$0xff] %vm171, %v260
      %293 = vst.msk [vmem:[%s180 + $0x31] sm:$0xff] %vm171, %v261
      %294 = vst.msk [vmem:[%s180 + $0x39] sm:$0xff] %vm171, %v262
      %295 = vst.msk [vmem:[%s180 + $0x49] sm:$0xff] %vm171, %v263
      %296 = vst.msk [vmem:[%s180 + $0x51] sm:$0xff] %vm171, %v264
      %297 = vst.msk [vmem:[%s180 + $0x61] sm:$0xff] %vm171, %v265
      %298 = vst.msk [vmem:[%s180 + $0x69] sm:$0xff] %vm171, %v266
      %299 = vst.msk [vmem:[%s180 + $0x79] sm:$0xff] %vm171, %v267
      %300 = vst.msk [vmem:[%s180 + $0x81] sm:$0xff] %vm171, %v268
      %301 = vst.msk [vmem:[%s180 + $0x91] sm:$0xff] %vm171, %v269
      %302 = vst.msk [vmem:[%s180 + $0x99] sm:$0xff] %vm171, %v270
      %303 = vst.msk [vmem:[%s180 + $0xa9] sm:$0xff] %vm171, %v271
      %304 = vst.msk [vmem:[%s180 + $0xb1] sm:$0xff] %vm171, %v272
      %305 = vst.msk [vmem:[%s180 + $0xc1] sm:$0xff] %vm171, %v273
      %306 = vst.msk [vmem:[%s180 + $0xc9] sm:$0xff] %vm171, %v274
      %307 = vst.msk [vmem:[%s180 + $0xd9] sm:$0xff] %vm171, %v275
      %308 = vst.msk [vmem:[%s180 + $0xe1] sm:$0xff] %vm171, %v276
      %309 = vst.msk [vmem:[%s180 + $0xf1] sm:$0xff] %vm171, %v277
      %310 = vst.msk [vmem:[%s180 + $0xf9] sm:$0xff] %vm171, %v278
      %311 = vst.msk [vmem:[%s180 + $0x109] sm:$0xff] %vm171, %v279
      %312 = vst.msk [vmem:[%s180 + $0x111] sm:$0xff] %vm171, %v280
      %313 = vst.msk [vmem:[%s180 + $0x121] sm:$0xff] %vm171, %v281
      %314 = vst.msk [vmem:[%s180 + $0x129] sm:$0xff] %vm171, %v282
      %315 = vst.msk [vmem:[%s180 + $0x139] sm:$0xff] %vm171, %v283
      %316 = vst.msk [vmem:[%s180 + $0x141] sm:$0xff] %vm171, %v284
      %317 = vst.msk [vmem:[%s180 + $0x151] sm:$0xff] %vm171, %v285
      %318 = vst.msk [vmem:[%s180 + $0x159] sm:$0xff] %vm171, %v286
      %319 = vst.msk [vmem:[%s180 + $0x169] sm:$0xff] %vm171, %v287
      %320 = vst.msk [vmem:[%s180 + $0x171] sm:$0xff] %vm171, %v288
      %v321 = vld [vmem:[#allocation2] sm:$0xff]
      %v322 = vld [vmem:[#allocation2 + $0x8] sm:$0xff]
      %v323 = vld [vmem:[#allocation2 + $0x18] sm:$0xff]
      %v324 = vld [vmem:[#allocation2 + $0x20] sm:$0xff]
      %v325 = vld [vmem:[#allocation2 + $0x30] sm:$0xff]
      %v326 = vld [vmem:[#allocation2 + $0x38] sm:$0xff]
      %v327 = vld [vmem:[#allocation2 + $0x48] sm:$0xff]
      %v328 = vld [vmem:[#allocation2 + $0x50] sm:$0xff]
      %v329 = vld [vmem:[#allocation2 + $0x60] sm:$0xff]
      %v330 = vld [vmem:[#allocation2 + $0x68] sm:$0xff]
      %v331 = vld [vmem:[#allocation2 + $0x78] sm:$0xff]
      %v332 = vld [vmem:[#allocation2 + $0x80] sm:$0xff]
      %v333 = vld [vmem:[#allocation2 + $0x90] sm:$0xff]
      %v334 = vld [vmem:[#allocation2 + $0x98] sm:$0xff]
      %v335 = vld [vmem:[#allocation2 + $0xa8] sm:$0xff]
      %v336 = vld [vmem:[#allocation2 + $0xb0] sm:$0xff]
      %v337 = vld [vmem:[#allocation2 + $0xc0] sm:$0xff]
      %v338 = vld [vmem:[#allocation2 + $0xc8] sm:$0xff]
      %v339 = vld [vmem:[#allocation2 + $0xd8] sm:$0xff]
      %v340 = vld [vmem:[#allocation2 + $0xe0] sm:$0xff]
      %v341 = vld [vmem:[#allocation2 + $0xf0] sm:$0xff]
      %v342 = vld [vmem:[#allocation2 + $0xf8] sm:$0xff]
      %v343 = vld [vmem:[#allocation2 + $0x108] sm:$0xff]
      %v344 = vld [vmem:[#allocation2 + $0x110] sm:$0xff]
      %v345 = vld [vmem:[#allocation2 + $0x120] sm:$0xff]
      %v346 = vld [vmem:[#allocation2 + $0x128] sm:$0xff]
      %v347 = vld [vmem:[#allocation2 + $0x138] sm:$0xff]
      %v348 = vld [vmem:[#allocation2 + $0x140] sm:$0xff]
      %v349 = vld [vmem:[#allocation2 + $0x150] sm:$0xff]
      %v350 = vld [vmem:[#allocation2 + $0x158] sm:$0xff]
      %v351 = vld [vmem:[#allocation2 + $0x168] sm:$0xff]
      %v352 = vld [vmem:[#allocation2 + $0x170] sm:$0xff]
      %353 = vst.msk [vmem:[#allocation4] sm:$0xff] %vm171, %v321
      %354 = vst.msk [vmem:[#allocation4 + $0x8] sm:$0xff] %vm171, %v322
      %355 = vst.msk [vmem:[#allocation4 + $0x10] sm:$0xff] %vm171, %v323
      %356 = vst.msk [vmem:[#allocation4 + $0x18] sm:$0xff] %vm171, %v324
      %357 = vst.msk [vmem:[#allocation4 + $0x20] sm:$0xff] %vm171, %v325
      %358 = vst.msk [vmem:[#allocation4 + $0x28] sm:$0xff] %vm171, %v326
      %359 = vst.msk [vmem:[#allocation4 + $0x30] sm:$0xff] %vm171, %v327
      %360 = vst.msk [vmem:[#allocation4 + $0x38] sm:$0xff] %vm171, %v328
      %361 = vst.msk [vmem:[#allocation4 + $0x40] sm:$0xff] %vm171, %v329
      %362 = vst.msk [vmem:[#allocation4 + $0x48] sm:$0xff] %vm171, %v330
      %363 = vst.msk [vmem:[#allocation4 + $0x50] sm:$0xff] %vm171, %v331
      %364 = vst.msk [vmem:[#allocation4 + $0x58] sm:$0xff] %vm171, %v332
      %365 = vst.msk [vmem:[#allocation4 + $0x60] sm:$0xff] %vm171, %v333
      %366 = vst.msk [vmem:[#allocation4 + $0x68] sm:$0xff] %vm171, %v334
      %367 = vst.msk [vmem:[#allocation4 + $0x70] sm:$0xff] %vm171, %v335
      %368 = vst.msk [vmem:[#allocation4 + $0x78] sm:$0xff] %vm171, %v336
      %369 = vst.msk [vmem:[#allocation4 + $0x80] sm:$0xff] %vm171, %v337
      %370 = vst.msk [vmem:[#allocation4 + $0x88] sm:$0xff] %vm171, %v338
      %371 = vst.msk [vmem:[#allocation4 + $0x90] sm:$0xff] %vm171, %v339
      %372 = vst.msk [vmem:[#allocation4 + $0x98] sm:$0xff] %vm171, %v340
      %373 = vst.msk [vmem:[#allocation4 + $0xa0] sm:$0xff] %vm171, %v341
      %374 = vst.msk [vmem:[#allocation4 + $0xa8] sm:$0xff] %vm171, %v342
      %375 = vst.msk [vmem:[#allocation4 + $0xb0] sm:$0xff] %vm171, %v343
      %376 = vst.msk [vmem:[#allocation4 + $0xb8] sm:$0xff] %vm171, %v344
      %377 = vst.msk [vmem:[#allocation4 + $0xc0] sm:$0xff] %vm171, %v345
      %378 = vst.msk [vmem:[#allocation4 + $0xc8] sm:$0xff] %vm171, %v346
      %379 = vst.msk [vmem:[#allocation4 + $0xd0] sm:$0xff] %vm171, %v347
      %380 = vst.msk [vmem:[#allocation4 + $0xd8] sm:$0xff] %vm171, %v348
      %381 = vst.msk [vmem:[#allocation4 + $0xe0] sm:$0xff] %vm171, %v349
      %382 = vst.msk [vmem:[#allocation4 + $0xe8] sm:$0xff] %vm171, %v350
      %383 = vst.msk [vmem:[#allocation4 + $0xf0] sm:$0xff] %vm171, %v351
      %384 = vst.msk [vmem:[#allocation4 + $0xf8] sm:$0xff] %vm171, %v352
      %v385 = vld [vmem:[#allocation2 + $0x1] sm:$0xff]
      %v386 = vld [vmem:[#allocation2 + $0x9] sm:$0xff]
      %v387 = vld [vmem:[#allocation2 + $0x19] sm:$0xff]
      %v388 = vld [vmem:[#allocation2 + $0x21] sm:$0xff]
      %v389 = vld [vmem:[#allocation2 + $0x31] sm:$0xff]
      %v390 = vld [vmem:[#allocation2 + $0x39] sm:$0xff]
      %v391 = vld [vmem:[#allocation2 + $0x49] sm:$0xff]
      %v392 = vld [vmem:[#allocation2 + $0x51] sm:$0xff]
      %v393 = vld [vmem:[#allocation2 + $0x61] sm:$0xff]
      %v394 = vld [vmem:[#allocation2 + $0x69] sm:$0xff]
      %v395 = vld [vmem:[#allocation2 + $0x79] sm:$0xff]
      %v396 = vld [vmem:[#allocation2 + $0x81] sm:$0xff]
      %v397 = vld [vmem:[#allocation2 + $0x91] sm:$0xff]
      %v398 = vld [vmem:[#allocation2 + $0x99] sm:$0xff]
      %v399 = vld [vmem:[#allocation2 + $0xa9] sm:$0xff]
      %v400 = vld [vmem:[#allocation2 + $0xb1] sm:$0xff]
      %v401 = vld [vmem:[#allocation2 + $0xc1] sm:$0xff]
      %v402 = vld [vmem:[#allocation2 + $0xc9] sm:$0xff]
      %v403 = vld [vmem:[#allocation2 + $0xd9] sm:$0xff]
      %v404 = vld [vmem:[#allocation2 + $0xe1] sm:$0xff]
      %v405 = vld [vmem:[#allocation2 + $0xf1] sm:$0xff]
      %v406 = vld [vmem:[#allocation2 + $0xf9] sm:$0xff]
      %v407 = vld [vmem:[#allocation2 + $0x109] sm:$0xff]
      %v408 = vld [vmem:[#allocation2 + $0x111] sm:$0xff]
      %v409 = vld [vmem:[#allocation2 + $0x121] sm:$0xff]
      %v410 = vld [vmem:[#allocation2 + $0x129] sm:$0xff]
      %v411 = vld [vmem:[#allocation2 + $0x139] sm:$0xff]
      %v412 = vld [vmem:[#allocation2 + $0x141] sm:$0xff]
      %v413 = vld [vmem:[#allocation2 + $0x151] sm:$0xff]
      %v414 = vld [vmem:[#allocation2 + $0x159] sm:$0xff]
      %v415 = vld [vmem:[#allocation2 + $0x169] sm:$0xff]
      %v416 = vld [vmem:[#allocation2 + $0x171] sm:$0xff]
      %449 = vrot.lane.b32.xlu0 %v385, 4
      %v450 = vpop.permute.xlu0 %449
      %451 = vrot.lane.b32.xlu0 %v386, 4
      %v452 = vpop.permute.xlu0 %451
      %453 = vrot.lane.b32.xlu0 %v387, 4
      %v454 = vpop.permute.xlu0 %453
      %455 = vrot.lane.b32.xlu0 %v388, 4
      %v456 = vpop.permute.xlu0 %455
      %457 = vrot.lane.b32.xlu0 %v389, 4
      %v458 = vpop.permute.xlu0 %457
      %459 = vrot.lane.b32.xlu0 %v390, 4
      %v460 = vpop.permute.xlu0 %459
      %461 = vrot.lane.b32.xlu0 %v391, 4
      %v462 = vpop.permute.xlu0 %461
      %463 = vrot.lane.b32.xlu0 %v392, 4
      %v464 = vpop.permute.xlu0 %463
      %465 = vrot.lane.b32.xlu0 %v393, 4
      %v466 = vpop.permute.xlu0 %465
      %467 = vrot.lane.b32.xlu0 %v394, 4
      %v468 = vpop.permute.xlu0 %467
      %469 = vrot.lane.b32.xlu0 %v395, 4
      %v470 = vpop.permute.xlu0 %469
      %471 = vrot.lane.b32.xlu0 %v396, 4
      %v472 = vpop.permute.xlu0 %471
      %473 = vrot.lane.b32.xlu0 %v397, 4
      %v474 = vpop.permute.xlu0 %473
      %475 = vrot.lane.b32.xlu0 %v398, 4
      %v476 = vpop.permute.xlu0 %475
      %477 = vrot.lane.b32.xlu0 %v399, 4
      %v478 = vpop.permute.xlu0 %477
      %479 = vrot.lane.b32.xlu0 %v400, 4
      %v480 = vpop.permute.xlu0 %479
      %481 = vrot.lane.b32.xlu0 %v401, 4
      %v482 = vpop.permute.xlu0 %481
      %483 = vrot.lane.b32.xlu0 %v402, 4
      %v484 = vpop.permute.xlu0 %483
      %485 = vrot.lane.b32.xlu0 %v403, 4
      %v486 = vpop.permute.xlu0 %485
      %487 = vrot.lane.b32.xlu0 %v404, 4
      %v488 = vpop.permute.xlu0 %487
      %489 = vrot.lane.b32.xlu0 %v405, 4
      %v490 = vpop.permute.xlu0 %489
      %491 = vrot.lane.b32.xlu0 %v406, 4
      %v492 = vpop.permute.xlu0 %491
      %493 = vrot.lane.b32.xlu0 %v407, 4
      %v494 = vpop.permute.xlu0 %493
      %495 = vrot.lane.b32.xlu0 %v408, 4
      %v496 = vpop.permute.xlu0 %495
      %497 = vrot.lane.b32.xlu0 %v409, 4
      %v498 = vpop.permute.xlu0 %497
      %499 = vrot.lane.b32.xlu0 %v410, 4
      %v500 = vpop.permute.xlu0 %499
      %501 = vrot.lane.b32.xlu0 %v411, 4
      %v502 = vpop.permute.xlu0 %501
      %503 = vrot.lane.b32.xlu0 %v412, 4
      %v504 = vpop.permute.xlu0 %503
      %505 = vrot.lane.b32.xlu0 %v413, 4
      %v506 = vpop.permute.xlu0 %505
      %507 = vrot.lane.b32.xlu0 %v414, 4
      %v508 = vpop.permute.xlu0 %507
      %509 = vrot.lane.b32.xlu0 %v415, 4
      %v510 = vpop.permute.xlu0 %509
      %511 = vrot.lane.b32.xlu0 %v416, 4
      %v512 = vpop.permute.xlu0 %511
      %vm545 = vcmask 64544
      %546 = vst.msk [vmem:[#allocation4] sm:$0xff] %vm545, %v450
      %547 = vst.msk [vmem:[#allocation4 + $0x8] sm:$0xff] %vm545, %v452
      %548 = vst.msk [vmem:[#allocation4 + $0x10] sm:$0xff] %vm545, %v454
      %549 = vst.msk [vmem:[#allocation4 + $0x18] sm:$0xff] %vm545, %v456
      %550 = vst.msk [vmem:[#allocation4 + $0x20] sm:$0xff] %vm545, %v458
      %551 = vst.msk [vmem:[#allocation4 + $0x28] sm:$0xff] %vm545, %v460
      %552 = vst.msk [vmem:[#allocation4 + $0x30] sm:$0xff] %vm545, %v462
      %553 = vst.msk [vmem:[#allocation4 + $0x38] sm:$0xff] %vm545, %v464
      %554 = vst.msk [vmem:[#allocation4 + $0x40] sm:$0xff] %vm545, %v466
      %555 = vst.msk [vmem:[#allocation4 + $0x48] sm:$0xff] %vm545, %v468
      %556 = vst.msk [vmem:[#allocation4 + $0x50] sm:$0xff] %vm545, %v470
      %557 = vst.msk [vmem:[#allocation4 + $0x58] sm:$0xff] %vm545, %v472
      %558 = vst.msk [vmem:[#allocation4 + $0x60] sm:$0xff] %vm545, %v474
      %559 = vst.msk [vmem:[#allocation4 + $0x68] sm:$0xff] %vm545, %v476
      %560 = vst.msk [vmem:[#allocation4 + $0x70] sm:$0xff] %vm545, %v478
      %561 = vst.msk [vmem:[#allocation4 + $0x78] sm:$0xff] %vm545, %v480
      %562 = vst.msk [vmem:[#allocation4 + $0x80] sm:$0xff] %vm545, %v482
      %563 = vst.msk [vmem:[#allocation4 + $0x88] sm:$0xff] %vm545, %v484
      %564 = vst.msk [vmem:[#allocation4 + $0x90] sm:$0xff] %vm545, %v486
      %565 = vst.msk [vmem:[#allocation4 + $0x98] sm:$0xff] %vm545, %v488
      %566 = vst.msk [vmem:[#allocation4 + $0xa0] sm:$0xff] %vm545, %v490
      %567 = vst.msk [vmem:[#allocation4 + $0xa8] sm:$0xff] %vm545, %v492
      %568 = vst.msk [vmem:[#allocation4 + $0xb0] sm:$0xff] %vm545, %v494
      %569 = vst.msk [vmem:[#allocation4 + $0xb8] sm:$0xff] %vm545, %v496
      %570 = vst.msk [vmem:[#allocation4 + $0xc0] sm:$0xff] %vm545, %v498
      %571 = vst.msk [vmem:[#allocation4 + $0xc8] sm:$0xff] %vm545, %v500
      %572 = vst.msk [vmem:[#allocation4 + $0xd0] sm:$0xff] %vm545, %v502
      %573 = vst.msk [vmem:[#allocation4 + $0xd8] sm:$0xff] %vm545, %v504
      %574 = vst.msk [vmem:[#allocation4 + $0xe0] sm:$0xff] %vm545, %v506
      %575 = vst.msk [vmem:[#allocation4 + $0xe8] sm:$0xff] %vm545, %v508
      %576 = vst.msk [vmem:[#allocation4 + $0xf0] sm:$0xff] %vm545, %v510
      %577 = vst.msk [vmem:[#allocation4 + $0xf8] sm:$0xff] %vm545, %v512
      %v578 = vld [vmem:[#allocation2 + $0x2] sm:$0xff]
      %v579 = vld [vmem:[#allocation2 + $0xa] sm:$0xff]
      %v580 = vld [vmem:[#allocation2 + $0x1a] sm:$0xff]
      %v581 = vld [vmem:[#allocation2 + $0x22] sm:$0xff]
      %v582 = vld [vmem:[#allocation2 + $0x32] sm:$0xff]
      %v583 = vld [vmem:[#allocation2 + $0x3a] sm:$0xff]
      %v584 = vld [vmem:[#allocation2 + $0x4a] sm:$0xff]
      %v585 = vld [vmem:[#allocation2 + $0x52] sm:$0xff]
      %v586 = vld [vmem:[#allocation2 + $0x62] sm:$0xff]
      %v587 = vld [vmem:[#allocation2 + $0x6a] sm:$0xff]
      %v588 = vld [vmem:[#allocation2 + $0x7a] sm:$0xff]
      %v589 = vld [vmem:[#allocation2 + $0x82] sm:$0xff]
      %v590 = vld [vmem:[#allocation2 + $0x92] sm:$0xff]
      %v591 = vld [vmem:[#allocation2 + $0x9a] sm:$0xff]
      %v592 = vld [vmem:[#allocation2 + $0xaa] sm:$0xff]
      %v593 = vld [vmem:[#allocation2 + $0xb2] sm:$0xff]
      %v594 = vld [vmem:[#allocation2 + $0xc2] sm:$0xff]
      %v595 = vld [vmem:[#allocation2 + $0xca] sm:$0xff]
      %v596 = vld [vmem:[#allocation2 + $0xda] sm:$0xff]
      %v597 = vld [vmem:[#allocation2 + $0xe2] sm:$0xff]
      %v598 = vld [vmem:[#allocation2 + $0xf2] sm:$0xff]
      %v599 = vld [vmem:[#allocation2 + $0xfa] sm:$0xff]
      %v600 = vld [vmem:[#allocation2 + $0x10a] sm:$0xff]
      %v601 = vld [vmem:[#allocation2 + $0x112] sm:$0xff]
      %v602 = vld [vmem:[#allocation2 + $0x122] sm:$0xff]
      %v603 = vld [vmem:[#allocation2 + $0x12a] sm:$0xff]
      %v604 = vld [vmem:[#allocation2 + $0x13a] sm:$0xff]
      %v605 = vld [vmem:[#allocation2 + $0x142] sm:$0xff]
      %v606 = vld [vmem:[#allocation2 + $0x152] sm:$0xff]
      %v607 = vld [vmem:[#allocation2 + $0x15a] sm:$0xff]
      %v608 = vld [vmem:[#allocation2 + $0x16a] sm:$0xff]
      %v609 = vld [vmem:[#allocation2 + $0x172] sm:$0xff]
      %642 = vrot.lane.b32.xlu0 %v578, 8
      %v643 = vpop.permute.xlu0 %642
      %644 = vrot.lane.b32.xlu0 %v579, 8
      %v645 = vpop.permute.xlu0 %644
      %646 = vrot.lane.b32.xlu0 %v580, 8
      %v647 = vpop.permute.xlu0 %646
      %648 = vrot.lane.b32.xlu0 %v581, 8
      %v649 = vpop.permute.xlu0 %648
      %650 = vrot.lane.b32.xlu0 %v582, 8
      %v651 = vpop.permute.xlu0 %650
      %652 = vrot.lane.b32.xlu0 %v583, 8
      %v653 = vpop.permute.xlu0 %652
      %654 = vrot.lane.b32.xlu0 %v584, 8
      %v655 = vpop.permute.xlu0 %654
      %656 = vrot.lane.b32.xlu0 %v585, 8
      %v657 = vpop.permute.xlu0 %656
      %658 = vrot.lane.b32.xlu0 %v586, 8
      %v659 = vpop.permute.xlu0 %658
      %660 = vrot.lane.b32.xlu0 %v587, 8
      %v661 = vpop.permute.xlu0 %660
      %662 = vrot.lane.b32.xlu0 %v588, 8
      %v663 = vpop.permute.xlu0 %662
      %664 = vrot.lane.b32.xlu0 %v589, 8
      %v665 = vpop.permute.xlu0 %664
      %666 = vrot.lane.b32.xlu0 %v590, 8
      %v667 = vpop.permute.xlu0 %666
      %668 = vrot.lane.b32.xlu0 %v591, 8
      %v669 = vpop.permute.xlu0 %668
      %670 = vrot.lane.b32.xlu0 %v592, 8
      %v671 = vpop.permute.xlu0 %670
      %672 = vrot.lane.b32.xlu0 %v593, 8
      %v673 = vpop.permute.xlu0 %672
      %674 = vrot.lane.b32.xlu0 %v594, 8
      %v675 = vpop.permute.xlu0 %674
      %676 = vrot.lane.b32.xlu0 %v595, 8
      %v677 = vpop.permute.xlu0 %676
      %678 = vrot.lane.b32.xlu0 %v596, 8
      %v679 = vpop.permute.xlu0 %678
      %680 = vrot.lane.b32.xlu0 %v597, 8
      %v681 = vpop.permute.xlu0 %680
      %682 = vrot.lane.b32.xlu0 %v598, 8
      %v683 = vpop.permute.xlu0 %682
      %684 = vrot.lane.b32.xlu0 %v599, 8
      %v685 = vpop.permute.xlu0 %684
      %686 = vrot.lane.b32.xlu0 %v600, 8
      %v687 = vpop.permute.xlu0 %686
      %688 = vrot.lane.b32.xlu0 %v601, 8
      %v689 = vpop.permute.xlu0 %688
      %690 = vrot.lane.b32.xlu0 %v602, 8
      %v691 = vpop.permute.xlu0 %690
      %692 = vrot.lane.b32.xlu0 %v603, 8
      %v693 = vpop.permute.xlu0 %692
      %694 = vrot.lane.b32.xlu0 %v604, 8
      %v695 = vpop.permute.xlu0 %694
      %696 = vrot.lane.b32.xlu0 %v605, 8
      %v697 = vpop.permute.xlu0 %696
      %698 = vrot.lane.b32.xlu0 %v606, 8
      %v699 = vpop.permute.xlu0 %698
      %700 = vrot.lane.b32.xlu0 %v607, 8
      %v701 = vpop.permute.xlu0 %700
      %702 = vrot.lane.b32.xlu0 %v608, 8
      %v703 = vpop.permute.xlu0 %702
      %704 = vrot.lane.b32.xlu0 %v609, 8
      %v705 = vpop.permute.xlu0 %704
      %vm738 = vcmask 97344
      %739 = vst.msk [vmem:[#allocation4] sm:$0xff] %vm738, %v643
      %740 = vst.msk [vmem:[#allocation4 + $0x8] sm:$0xff] %vm738, %v645
      %741 = vst.msk [vmem:[#allocation4 + $0x10] sm:$0xff] %vm738, %v647
      %742 = vst.msk [vmem:[#allocation4 + $0x18] sm:$0xff] %vm738, %v649
      %743 = vst.msk [vmem:[#allocation4 + $0x20] sm:$0xff] %vm738, %v651
      %744 = vst.msk [vmem:[#allocation4 + $0x28] sm:$0xff] %vm738, %v653
      %745 = vst.msk [vmem:[#allocation4 + $0x30] sm:$0xff] %vm738, %v655
      %746 = vst.msk [vmem:[#allocation4 + $0x38] sm:$0xff] %vm738, %v657
      %747 = vst.msk [vmem:[#allocation4 + $0x40] sm:$0xff] %vm738, %v659
      %748 = vst.msk [vmem:[#allocation4 + $0x48] sm:$0xff] %vm738, %v661
      %749 = vst.msk [vmem:[#allocation4 + $0x50] sm:$0xff] %vm738, %v663
      %750 = vst.msk [vmem:[#allocation4 + $0x58] sm:$0xff] %vm738, %v665
      %751 = vst.msk [vmem:[#allocation4 + $0x60] sm:$0xff] %vm738, %v667
      %752 = vst.msk [vmem:[#allocation4 + $0x68] sm:$0xff] %vm738, %v669
      %753 = vst.msk [vmem:[#allocation4 + $0x70] sm:$0xff] %vm738, %v671
      %754 = vst.msk [vmem:[#allocation4 + $0x78] sm:$0xff] %vm738, %v673
      %755 = vst.msk [vmem:[#allocation4 + $0x80] sm:$0xff] %vm738, %v675
      %756 = vst.msk [vmem:[#allocation4 + $0x88] sm:$0xff] %vm738, %v677
      %757 = vst.msk [vmem:[#allocation4 + $0x90] sm:$0xff] %vm738, %v679
      %758 = vst.msk [vmem:[#allocation4 + $0x98] sm:$0xff] %vm738, %v681
      %759 = vst.msk [vmem:[#allocation4 + $0xa0] sm:$0xff] %vm738, %v683
      %760 = vst.msk [vmem:[#allocation4 + $0xa8] sm:$0xff] %vm738, %v685
      %761 = vst.msk [vmem:[#allocation4 + $0xb0] sm:$0xff] %vm738, %v687
      %762 = vst.msk [vmem:[#allocation4 + $0xb8] sm:$0xff] %vm738, %v689
      %763 = vst.msk [vmem:[#allocation4 + $0xc0] sm:$0xff] %vm738, %v691
      %764 = vst.msk [vmem:[#allocation4 + $0xc8] sm:$0xff] %vm738, %v693
      %765 = vst.msk [vmem:[#allocation4 + $0xd0] sm:$0xff] %vm738, %v695
      %766 = vst.msk [vmem:[#allocation4 + $0xd8] sm:$0xff] %vm738, %v697
      %767 = vst.msk [vmem:[#allocation4 + $0xe0] sm:$0xff] %vm738, %v699
      %768 = vst.msk [vmem:[#allocation4 + $0xe8] sm:$0xff] %vm738, %v701
      %769 = vst.msk [vmem:[#allocation4 + $0xf0] sm:$0xff] %vm738, %v703
      %770 = vst.msk [vmem:[#allocation4 + $0xf8] sm:$0xff] %vm738, %v705
      %v771 = vld [vmem:[%s180] sm:$0xff]
      %v772 = vld [vmem:[%s180 + $0x8] sm:$0xff]
      %v773 = vld [vmem:[%s180 + $0x18] sm:$0xff]
      %v774 = vld [vmem:[%s180 + $0x20] sm:$0xff]
      %v775 = vld [vmem:[%s180 + $0x30] sm:$0xff]
      %v776 = vld [vmem:[%s180 + $0x38] sm:$0xff]
      %v777 = vld [vmem:[%s180 + $0x48] sm:$0xff]
      %v778 = vld [vmem:[%s180 + $0x50] sm:$0xff]
      %v779 = vld [vmem:[%s180 + $0x60] sm:$0xff]
      %v780 = vld [vmem:[%s180 + $0x68] sm:$0xff]
      %v781 = vld [vmem:[%s180 + $0x78] sm:$0xff]
      %v782 = vld [vmem:[%s180 + $0x80] sm:$0xff]
      %v783 = vld [vmem:[%s180 + $0x90] sm:$0xff]
      %v784 = vld [vmem:[%s180 + $0x98] sm:$0xff]
      %v785 = vld [vmem:[%s180 + $0xa8] sm:$0xff]
      %v786 = vld [vmem:[%s180 + $0xb0] sm:$0xff]
      %v787 = vld [vmem:[%s180 + $0xc0] sm:$0xff]
      %v788 = vld [vmem:[%s180 + $0xc8] sm:$0xff]
      %v789 = vld [vmem:[%s180 + $0xd8] sm:$0xff]
      %v790 = vld [vmem:[%s180 + $0xe0] sm:$0xff]
      %v791 = vld [vmem:[%s180 + $0xf0] sm:$0xff]
      %v792 = vld [vmem:[%s180 + $0xf8] sm:$0xff]
      %v793 = vld [vmem:[%s180 + $0x108] sm:$0xff]
      %v794 = vld [vmem:[%s180 + $0x110] sm:$0xff]
      %v795 = vld [vmem:[%s180 + $0x120] sm:$0xff]
      %v796 = vld [vmem:[%s180 + $0x128] sm:$0xff]
      %v797 = vld [vmem:[%s180 + $0x138] sm:$0xff]
      %v798 = vld [vmem:[%s180 + $0x140] sm:$0xff]
      %v799 = vld [vmem:[%s180 + $0x150] sm:$0xff]
      %v800 = vld [vmem:[%s180 + $0x158] sm:$0xff]
      %v801 = vld [vmem:[%s180 + $0x168] sm:$0xff]
      %v802 = vld [vmem:[%s180 + $0x170] sm:$0xff]
      %835 = vrot.lane.b32.xlu0 %v771, 12
      %v836 = vpop.permute.xlu0 %835
      %837 = vrot.lane.b32.xlu0 %v772, 12
      %v838 = vpop.permute.xlu0 %837
      %839 = vrot.lane.b32.xlu0 %v773, 12
      %v840 = vpop.permute.xlu0 %839
      %841 = vrot.lane.b32.xlu0 %v774, 12
      %v842 = vpop.permute.xlu0 %841
      %843 = vrot.lane.b32.xlu0 %v775, 12
      %v844 = vpop.permute.xlu0 %843
      %845 = vrot.lane.b32.xlu0 %v776, 12
      %v846 = vpop.permute.xlu0 %845
      %847 = vrot.lane.b32.xlu0 %v777, 12
      %v848 = vpop.permute.xlu0 %847
      %849 = vrot.lane.b32.xlu0 %v778, 12
      %v850 = vpop.permute.xlu0 %849
      %851 = vrot.lane.b32.xlu0 %v779, 12
      %v852 = vpop.permute.xlu0 %851
      %853 = vrot.lane.b32.xlu0 %v780, 12
      %v854 = vpop.permute.xlu0 %853
      %855 = vrot.lane.b32.xlu0 %v781, 12
      %v856 = vpop.permute.xlu0 %855
      %857 = vrot.lane.b32.xlu0 %v782, 12
      %v858 = vpop.permute.xlu0 %857
      %859 = vrot.lane.b32.xlu0 %v783, 12
      %v860 = vpop.permute.xlu0 %859
      %861 = vrot.lane.b32.xlu0 %v784, 12
      %v862 = vpop.permute.xlu0 %861
      %863 = vrot.lane.b32.xlu0 %v785, 12
      %v864 = vpop.permute.xlu0 %863
      %865 = vrot.lane.b32.xlu0 %v786, 12
      %v866 = vpop.permute.xlu0 %865
      %867 = vrot.lane.b32.xlu0 %v787, 12
      %v868 = vpop.permute.xlu0 %867
      %869 = vrot.lane.b32.xlu0 %v788, 12
      %v870 = vpop.permute.xlu0 %869
      %871 = vrot.lane.b32.xlu0 %v789, 12
      %v872 = vpop.permute.xlu0 %871
      %873 = vrot.lane.b32.xlu0 %v790, 12
      %v874 = vpop.permute.xlu0 %873
      %875 = vrot.lane.b32.xlu0 %v791, 12
      %v876 = vpop.permute.xlu0 %875
      %877 = vrot.lane.b32.xlu0 %v792, 12
      %v878 = vpop.permute.xlu0 %877
      %879 = vrot.lane.b32.xlu0 %v793, 12
      %v880 = vpop.permute.xlu0 %879
      %881 = vrot.lane.b32.xlu0 %v794, 12
      %v882 = vpop.permute.xlu0 %881
      %883 = vrot.lane.b32.xlu0 %v795, 12
      %v884 = vpop.permute.xlu0 %883
      %885 = vrot.lane.b32.xlu0 %v796, 12
      %v886 = vpop.permute.xlu0 %885
      %887 = vrot.lane.b32.xlu0 %v797, 12
      %v888 = vpop.permute.xlu0 %887
      %889 = vrot.lane.b32.xlu0 %v798, 12
      %v890 = vpop.permute.xlu0 %889
      %891 = vrot.lane.b32.xlu0 %v799, 12
      %v892 = vpop.permute.xlu0 %891
      %893 = vrot.lane.b32.xlu0 %v800, 12
      %v894 = vpop.permute.xlu0 %893
      %895 = vrot.lane.b32.xlu0 %v801, 12
      %v896 = vpop.permute.xlu0 %895
      %897 = vrot.lane.b32.xlu0 %v802, 12
      %v898 = vpop.permute.xlu0 %897
      %vm931 = vcmask 130144
      %932 = vst.msk [vmem:[#allocation4] sm:$0xff] %vm931, %v836
      %933 = vst.msk [vmem:[#allocation4 + $0x8] sm:$0xff] %vm931, %v838
      %934 = vst.msk [vmem:[#allocation4 + $0x10] sm:$0xff] %vm931, %v840
      %935 = vst.msk [vmem:[#allocation4 + $0x18] sm:$0xff] %vm931, %v842
      %936 = vst.msk [vmem:[#allocation4 + $0x20] sm:$0xff] %vm931, %v844
      %937 = vst.msk [vmem:[#allocation4 + $0x28] sm:$0xff] %vm931, %v846
      %938 = vst.msk [vmem:[#allocation4 + $0x30] sm:$0xff] %vm931, %v848
      %939 = vst.msk [vmem:[#allocation4 + $0x38] sm:$0xff] %vm931, %v850
      %940 = vst.msk [vmem:[#allocation4 + $0x40] sm:$0xff] %vm931, %v852
      %941 = vst.msk [vmem:[#allocation4 + $0x48] sm:$0xff] %vm931, %v854
      %942 = vst.msk [vmem:[#allocation4 + $0x50] sm:$0xff] %vm931, %v856
      %943 = vst.msk [vmem:[#allocation4 + $0x58] sm:$0xff] %vm931, %v858
      %944 = vst.msk [vmem:[#allocation4 + $0x60] sm:$0xff] %vm931, %v860
      %945 = vst.msk [vmem:[#allocation4 + $0x68] sm:$0xff] %vm931, %v862
      %946 = vst.msk [vmem:[#allocation4 + $0x70] sm:$0xff] %vm931, %v864
      %947 = vst.msk [vmem:[#allocation4 + $0x78] sm:$0xff] %vm931, %v866
      %948 = vst.msk [vmem:[#allocation4 + $0x80] sm:$0xff] %vm931, %v868
      %949 = vst.msk [vmem:[#allocation4 + $0x88] sm:$0xff] %vm931, %v870
      %950 = vst.msk [vmem:[#allocation4 + $0x90] sm:$0xff] %vm931, %v872
      %951 = vst.msk [vmem:[#allocation4 + $0x98] sm:$0xff] %vm931, %v874
      %952 = vst.msk [vmem:[#allocation4 + $0xa0] sm:$0xff] %vm931, %v876
      %953 = vst.msk [vmem:[#allocation4 + $0xa8] sm:$0xff] %vm931, %v878
      %954 = vst.msk [vmem:[#allocation4 + $0xb0] sm:$0xff] %vm931, %v880
      %955 = vst.msk [vmem:[#allocation4 + $0xb8] sm:$0xff] %vm931, %v882
      %956 = vst.msk [vmem:[#allocation4 + $0xc0] sm:$0xff] %vm931, %v884
      %957 = vst.msk [vmem:[#allocation4 + $0xc8] sm:$0xff] %vm931, %v886
      %958 = vst.msk [vmem:[#allocation4 + $0xd0] sm:$0xff] %vm931, %v888
      %959 = vst.msk [vmem:[#allocation4 + $0xd8] sm:$0xff] %vm931, %v890
      %960 = vst.msk [vmem:[#allocation4 + $0xe0] sm:$0xff] %vm931, %v892
      %961 = vst.msk [vmem:[#allocation4 + $0xe8] sm:$0xff] %vm931, %v894
      %962 = vst.msk [vmem:[#allocation4 + $0xf0] sm:$0xff] %vm931, %v896
      %963 = vst.msk [vmem:[#allocation4 + $0xf8] sm:$0xff] %vm931, %v898
      %v964 = vld [vmem:[%s180 + $0x1] sm:$0xff]
      %v965 = vld [vmem:[%s180 + $0x9] sm:$0xff]
      %v966 = vld [vmem:[%s180 + $0x19] sm:$0xff]
      %v967 = vld [vmem:[%s180 + $0x21] sm:$0xff]
      %v968 = vld [vmem:[%s180 + $0x31] sm:$0xff]
      %v969 = vld [vmem:[%s180 + $0x39] sm:$0xff]
      %v970 = vld [vmem:[%s180 + $0x49] sm:$0xff]
      %v971 = vld [vmem:[%s180 + $0x51] sm:$0xff]
      %v972 = vld [vmem:[%s180 + $0x61] sm:$0xff]
      %v973 = vld [vmem:[%s180 + $0x69] sm:$0xff]
      %v974 = vld [vmem:[%s180 + $0x79] sm:$0xff]
      %v975 = vld [vmem:[%s180 + $0x81] sm:$0xff]
      %v976 = vld [vmem:[%s180 + $0x91] sm:$0xff]
      %v977 = vld [vmem:[%s180 + $0x99] sm:$0xff]
      %v978 = vld [vmem:[%s180 + $0xa9] sm:$0xff]
      %v979 = vld [vmem:[%s180 + $0xb1] sm:$0xff]
      %v980 = vld [vmem:[%s180 + $0xc1] sm:$0xff]
      %v981 = vld [vmem:[%s180 + $0xc9] sm:$0xff]
      %v982 = vld [vmem:[%s180 + $0xd9] sm:$0xff]
      %v983 = vld [vmem:[%s180 + $0xe1] sm:$0xff]
      %v984 = vld [vmem:[%s180 + $0xf1] sm:$0xff]
      %v985 = vld [vmem:[%s180 + $0xf9] sm:$0xff]
      %v986 = vld [vmem:[%s180 + $0x109] sm:$0xff]
      %v987 = vld [vmem:[%s180 + $0x111] sm:$0xff]
      %v988 = vld [vmem:[%s180 + $0x121] sm:$0xff]
      %v989 = vld [vmem:[%s180 + $0x129] sm:$0xff]
      %v990 = vld [vmem:[%s180 + $0x139] sm:$0xff]
      %v991 = vld [vmem:[%s180 + $0x141] sm:$0xff]
      %v992 = vld [vmem:[%s180 + $0x151] sm:$0xff]
      %v993 = vld [vmem:[%s180 + $0x159] sm:$0xff]
      %v994 = vld [vmem:[%s180 + $0x169] sm:$0xff]
      %v995 = vld [vmem:[%s180 + $0x171] sm:$0xff]
      %1028 = vrot.lane.b32.xlu0 %v964, 16
      %v1029 = vpop.permute.xlu0 %1028
      %1030 = vrot.lane.b32.xlu0 %v965, 16
      %v1031 = vpop.permute.xlu0 %1030
      %1032 = vrot.lane.b32.xlu0 %v966, 16
      %v1033 = vpop.permute.xlu0 %1032
      %1034 = vrot.lane.b32.xlu0 %v967, 16
      %v1035 = vpop.permute.xlu0 %1034
      %1036 = vrot.lane.b32.xlu0 %v968, 16
      %v1037 = vpop.permute.xlu0 %1036
      %1038 = vrot.lane.b32.xlu0 %v969, 16
      %v1039 = vpop.permute.xlu0 %1038
      %1040 = vrot.lane.b32.xlu0 %v970, 16
      %v1041 = vpop.permute.xlu0 %1040
      %1042 = vrot.lane.b32.xlu0 %v971, 16
      %v1043 = vpop.permute.xlu0 %1042
      %1044 = vrot.lane.b32.xlu0 %v972, 16
      %v1045 = vpop.permute.xlu0 %1044
      %1046 = vrot.lane.b32.xlu0 %v973, 16
      %v1047 = vpop.permute.xlu0 %1046
      %1048 = vrot.lane.b32.xlu0 %v974, 16
      %v1049 = vpop.permute.xlu0 %1048
      %1050 = vrot.lane.b32.xlu0 %v975, 16
      %v1051 = vpop.permute.xlu0 %1050
      %1052 = vrot.lane.b32.xlu0 %v976, 16
      %v1053 = vpop.permute.xlu0 %1052
      %1054 = vrot.lane.b32.xlu0 %v977, 16
      %v1055 = vpop.permute.xlu0 %1054
      %1056 = vrot.lane.b32.xlu0 %v978, 16
      %v1057 = vpop.permute.xlu0 %1056
      %1058 = vrot.lane.b32.xlu0 %v979, 16
      %v1059 = vpop.permute.xlu0 %1058
      %1060 = vrot.lane.b32.xlu0 %v980, 16
      %v1061 = vpop.permute.xlu0 %1060
      %1062 = vrot.lane.b32.xlu0 %v981, 16
      %v1063 = vpop.permute.xlu0 %1062
      %1064 = vrot.lane.b32.xlu0 %v982, 16
      %v1065 = vpop.permute.xlu0 %1064
      %1066 = vrot.lane.b32.xlu0 %v983, 16
      %v1067 = vpop.permute.xlu0 %1066
      %1068 = vrot.lane.b32.xlu0 %v984, 16
      %v1069 = vpop.permute.xlu0 %1068
      %1070 = vrot.lane.b32.xlu0 %v985, 16
      %v1071 = vpop.permute.xlu0 %1070
      %1072 = vrot.lane.b32.xlu0 %v986, 16
      %v1073 = vpop.permute.xlu0 %1072
      %1074 = vrot.lane.b32.xlu0 %v987, 16
      %v1075 = vpop.permute.xlu0 %1074
      %1076 = vrot.lane.b32.xlu0 %v988, 16
      %v1077 = vpop.permute.xlu0 %1076
      %1078 = vrot.lane.b32.xlu0 %v989, 16
      %v1079 = vpop.permute.xlu0 %1078
      %1080 = vrot.lane.b32.xlu0 %v990, 16
      %v1081 = vpop.permute.xlu0 %1080
      %1082 = vrot.lane.b32.xlu0 %v991, 16
      %v1083 = vpop.permute.xlu0 %1082
      %1084 = vrot.lane.b32.xlu0 %v992, 16
      %v1085 = vpop.permute.xlu0 %1084
      %1086 = vrot.lane.b32.xlu0 %v993, 16
      %v1087 = vpop.permute.xlu0 %1086
      %1088 = vrot.lane.b32.xlu0 %v994, 16
      %v1089 = vpop.permute.xlu0 %1088
      %1090 = vrot.lane.b32.xlu0 %v995, 16
      %v1091 = vpop.permute.xlu0 %1090
      %vm1124 = vcmask 162944
      %1125 = vst.msk [vmem:[#allocation4] sm:$0xff] %vm1124, %v1029
      %1126 = vst.msk [vmem:[#allocation4 + $0x8] sm:$0xff] %vm1124, %v1031
      %1127 = vst.msk [vmem:[#allocation4 + $0x10] sm:$0xff] %vm1124, %v1033
      %1128 = vst.msk [vmem:[#allocation4 + $0x18] sm:$0xff] %vm1124, %v1035
      %1129 = vst.msk [vmem:[#allocation4 + $0x20] sm:$0xff] %vm1124, %v1037
      %1130 = vst.msk [vmem:[#allocation4 + $0x28] sm:$0xff] %vm1124, %v1039
      %1131 = vst.msk [vmem:[#allocation4 + $0x30] sm:$0xff] %vm1124, %v1041
      %1132 = vst.msk [vmem:[#allocation4 + $0x38] sm:$0xff] %vm1124, %v1043
      %1133 = vst.msk [vmem:[#allocation4 + $0x40] sm:$0xff] %vm1124, %v1045
      %1134 = vst.msk [vmem:[#allocation4 + $0x48] sm:$0xff] %vm1124, %v1047
      %1135 = vst.msk [vmem:[#allocation4 + $0x50] sm:$0xff] %vm1124, %v1049
      %1136 = vst.msk [vmem:[#allocation4 + $0x58] sm:$0xff] %vm1124, %v1051
      %1137 = vst.msk [vmem:[#allocation4 + $0x60] sm:$0xff] %vm1124, %v1053
      %1138 = vst.msk [vmem:[#allocation4 + $0x68] sm:$0xff] %vm1124, %v1055
      %1139 = vst.msk [vmem:[#allocation4 + $0x70] sm:$0xff] %vm1124, %v1057
      %1140 = vst.msk [vmem:[#allocation4 + $0x78] sm:$0xff] %vm1124, %v1059
      %1141 = vst.msk [vmem:[#allocation4 + $0x80] sm:$0xff] %vm1124, %v1061
      %1142 = vst.msk [vmem:[#allocation4 + $0x88] sm:$0xff] %vm1124, %v1063
      %1143 = vst.msk [vmem:[#allocation4 + $0x90] sm:$0xff] %vm1124, %v1065
      %1144 = vst.msk [vmem:[#allocation4 + $0x98] sm:$0xff] %vm1124, %v1067
      %1145 = vst.msk [vmem:[#allocation4 + $0xa0] sm:$0xff] %vm1124, %v1069
      %1146 = vst.msk [vmem:[#allocation4 + $0xa8] sm:$0xff] %vm1124, %v1071
      %1147 = vst.msk [vmem:[#allocation4 + $0xb0] sm:$0xff] %vm1124, %v1073
      %1148 = vst.msk [vmem:[#allocation4 + $0xb8] sm:$0xff] %vm1124, %v1075
      %1149 = vst.msk [vmem:[#allocation4 + $0xc0] sm:$0xff] %vm1124, %v1077
      %1150 = vst.msk [vmem:[#allocation4 + $0xc8] sm:$0xff] %vm1124, %v1079
      %1151 = vst.msk [vmem:[#allocation4 + $0xd0] sm:$0xff] %vm1124, %v1081
      %1152 = vst.msk [vmem:[#allocation4 + $0xd8] sm:$0xff] %vm1124, %v1083
      %1153 = vst.msk [vmem:[#allocation4 + $0xe0] sm:$0xff] %vm1124, %v1085
      %1154 = vst.msk [vmem:[#allocation4 + $0xe8] sm:$0xff] %vm1124, %v1087
      %1155 = vst.msk [vmem:[#allocation4 + $0xf0] sm:$0xff] %vm1124, %v1089
      %1156 = vst.msk [vmem:[#allocation4 + $0xf8] sm:$0xff] %vm1124, %v1091
      %v1157 = vld [vmem:[%s180 + $0x2] sm:$0xff]
      %v1158 = vld [vmem:[%s180 + $0xa] sm:$0xff]
      %v1159 = vld [vmem:[%s180 + $0x1a] sm:$0xff]
      %v1160 = vld [vmem:[%s180 + $0x22] sm:$0xff]
      %v1161 = vld [vmem:[%s180 + $0x32] sm:$0xff]
      %v1162 = vld [vmem:[%s180 + $0x3a] sm:$0xff]
      %v1163 = vld [vmem:[%s180 + $0x4a] sm:$0xff]
      %v1164 = vld [vmem:[%s180 + $0x52] sm:$0xff]
      %v1165 = vld [vmem:[%s180 + $0x62] sm:$0xff]
      %v1166 = vld [vmem:[%s180 + $0x6a] sm:$0xff]
      %v1167 = vld [vmem:[%s180 + $0x7a] sm:$0xff]
      %v1168 = vld [vmem:[%s180 + $0x82] sm:$0xff]
      %v1169 = vld [vmem:[%s180 + $0x92] sm:$0xff]
      %v1170 = vld [vmem:[%s180 + $0x9a] sm:$0xff]
      %v1171 = vld [vmem:[%s180 + $0xaa] sm:$0xff]
      %v1172 = vld [vmem:[%s180 + $0xb2] sm:$0xff]
      %v1173 = vld [vmem:[%s180 + $0xc2] sm:$0xff]
      %v1174 = vld [vmem:[%s180 + $0xca] sm:$0xff]
      %v1175 = vld [vmem:[%s180 + $0xda] sm:$0xff]
      %v1176 = vld [vmem:[%s180 + $0xe2] sm:$0xff]
      %v1177 = vld [vmem:[%s180 + $0xf2] sm:$0xff]
      %v1178 = vld [vmem:[%s180 + $0xfa] sm:$0xff]
      %v1179 = vld [vmem:[%s180 + $0x10a] sm:$0xff]
      %v1180 = vld [vmem:[%s180 + $0x112] sm:$0xff]
      %v1181 = vld [vmem:[%s180 + $0x122] sm:$0xff]
      %v1182 = vld [vmem:[%s180 + $0x12a] sm:$0xff]
      %v1183 = vld [vmem:[%s180 + $0x13a] sm:$0xff]
      %v1184 = vld [vmem:[%s180 + $0x142] sm:$0xff]
      %v1185 = vld [vmem:[%s180 + $0x152] sm:$0xff]
      %v1186 = vld [vmem:[%s180 + $0x15a] sm:$0xff]
      %v1187 = vld [vmem:[%s180 + $0x16a] sm:$0xff]
      %v1188 = vld [vmem:[%s180 + $0x172] sm:$0xff]
      %1221 = vrot.lane.b32.xlu0 %v1157, 20
      %v1222 = vpop.permute.xlu0 %1221
      %1223 = vrot.lane.b32.xlu0 %v1158, 20
      %v1224 = vpop.permute.xlu0 %1223
      %1225 = vrot.lane.b32.xlu0 %v1159, 20
      %v1226 = vpop.permute.xlu0 %1225
      %1227 = vrot.lane.b32.xlu0 %v1160, 20
      %v1228 = vpop.permute.xlu0 %1227
      %1229 = vrot.lane.b32.xlu0 %v1161, 20
      %v1230 = vpop.permute.xlu0 %1229
      %1231 = vrot.lane.b32.xlu0 %v1162, 20
      %v1232 = vpop.permute.xlu0 %1231
      %1233 = vrot.lane.b32.xlu0 %v1163, 20
      %v1234 = vpop.permute.xlu0 %1233
      %1235 = vrot.lane.b32.xlu0 %v1164, 20
      %v1236 = vpop.permute.xlu0 %1235
      %1237 = vrot.lane.b32.xlu0 %v1165, 20
      %v1238 = vpop.permute.xlu0 %1237
      %1239 = vrot.lane.b32.xlu0 %v1166, 20
      %v1240 = vpop.permute.xlu0 %1239
      %1241 = vrot.lane.b32.xlu0 %v1167, 20
      %v1242 = vpop.permute.xlu0 %1241
      %1243 = vrot.lane.b32.xlu0 %v1168, 20
      %v1244 = vpop.permute.xlu0 %1243
      %1245 = vrot.lane.b32.xlu0 %v1169, 20
      %v1246 = vpop.permute.xlu0 %1245
      %1247 = vrot.lane.b32.xlu0 %v1170, 20
      %v1248 = vpop.permute.xlu0 %1247
      %1249 = vrot.lane.b32.xlu0 %v1171, 20
      %v1250 = vpop.permute.xlu0 %1249
      %1251 = vrot.lane.b32.xlu0 %v1172, 20
      %v1252 = vpop.permute.xlu0 %1251
      %1253 = vrot.lane.b32.xlu0 %v1173, 20
      %v1254 = vpop.permute.xlu0 %1253
      %1255 = vrot.lane.b32.xlu0 %v1174, 20
      %v1256 = vpop.permute.xlu0 %1255
      %1257 = vrot.lane.b32.xlu0 %v1175, 20
      %v1258 = vpop.permute.xlu0 %1257
      %1259 = vrot.lane.b32.xlu0 %v1176, 20
      %v1260 = vpop.permute.xlu0 %1259
      %1261 = vrot.lane.b32.xlu0 %v1177, 20
      %v1262 = vpop.permute.xlu0 %1261
      %1263 = vrot.lane.b32.xlu0 %v1178, 20
      %v1264 = vpop.permute.xlu0 %1263
      %1265 = vrot.lane.b32.xlu0 %v1179, 20
      %v1266 = vpop.permute.xlu0 %1265
      %1267 = vrot.lane.b32.xlu0 %v1180, 20
      %v1268 = vpop.permute.xlu0 %1267
      %1269 = vrot.lane.b32.xlu0 %v1181, 20
      %v1270 = vpop.permute.xlu0 %1269
      %1271 = vrot.lane.b32.xlu0 %v1182, 20
      %v1272 = vpop.permute.xlu0 %1271
      %1273 = vrot.lane.b32.xlu0 %v1183, 20
      %v1274 = vpop.permute.xlu0 %1273
      %1275 = vrot.lane.b32.xlu0 %v1184, 20
      %v1276 = vpop.permute.xlu0 %1275
      %1277 = vrot.lane.b32.xlu0 %v1185, 20
      %v1278 = vpop.permute.xlu0 %1277
      %1279 = vrot.lane.b32.xlu0 %v1186, 20
      %v1280 = vpop.permute.xlu0 %1279
      %1281 = vrot.lane.b32.xlu0 %v1187, 20
      %v1282 = vpop.permute.xlu0 %1281
      %1283 = vrot.lane.b32.xlu0 %v1188, 20
      %v1284 = vpop.permute.xlu0 %1283
      %vm1317 = vcmask 195744
      %1318 = vst.msk [vmem:[#allocation4] sm:$0xff] %vm1317, %v1222
      %1319 = vst.msk [vmem:[#allocation4 + $0x8] sm:$0xff] %vm1317, %v1224
      %1320 = vst.msk [vmem:[#allocation4 + $0x10] sm:$0xff] %vm1317, %v1226
      %1321 = vst.msk [vmem:[#allocation4 + $0x18] sm:$0xff] %vm1317, %v1228
      %1322 = vst.msk [vmem:[#allocation4 + $0x20] sm:$0xff] %vm1317, %v1230
      %1323 = vst.msk [vmem:[#allocation4 + $0x28] sm:$0xff] %vm1317, %v1232
      %1324 = vst.msk [vmem:[#allocation4 + $0x30] sm:$0xff] %vm1317, %v1234
      %1325 = vst.msk [vmem:[#allocation4 + $0x38] sm:$0xff] %vm1317, %v1236
      %1326 = vst.msk [vmem:[#allocation4 + $0x40] sm:$0xff] %vm1317, %v1238
      %1327 = vst.msk [vmem:[#allocation4 + $0x48] sm:$0xff] %vm1317, %v1240
      %1328 = vst.msk [vmem:[#allocation4 + $0x50] sm:$0xff] %vm1317, %v1242
      %1329 = vst.msk [vmem:[#allocation4 + $0x58] sm:$0xff] %vm1317, %v1244
      %1330 = vst.msk [vmem:[#allocation4 + $0x60] sm:$0xff] %vm1317, %v1246
      %1331 = vst.msk [vmem:[#allocation4 + $0x68] sm:$0xff] %vm1317, %v1248
      %1332 = vst.msk [vmem:[#allocation4 + $0x70] sm:$0xff] %vm1317, %v1250
      %1333 = vst.msk [vmem:[#allocation4 + $0x78] sm:$0xff] %vm1317, %v1252
      %1334 = vst.msk [vmem:[#allocation4 + $0x80] sm:$0xff] %vm1317, %v1254
      %1335 = vst.msk [vmem:[#allocation4 + $0x88] sm:$0xff] %vm1317, %v1256
      %1336 = vst.msk [vmem:[#allocation4 + $0x90] sm:$0xff] %vm1317, %v1258
      %1337 = vst.msk [vmem:[#allocation4 + $0x98] sm:$0xff] %vm1317, %v1260
      %1338 = vst.msk [vmem:[#allocation4 + $0xa0] sm:$0xff] %vm1317, %v1262
      %1339 = vst.msk [vmem:[#allocation4 + $0xa8] sm:$0xff] %vm1317, %v1264
      %1340 = vst.msk [vmem:[#allocation4 + $0xb0] sm:$0xff] %vm1317, %v1266
      %1341 = vst.msk [vmem:[#allocation4 + $0xb8] sm:$0xff] %vm1317, %v1268
      %1342 = vst.msk [vmem:[#allocation4 + $0xc0] sm:$0xff] %vm1317, %v1270
      %1343 = vst.msk [vmem:[#allocation4 + $0xc8] sm:$0xff] %vm1317, %v1272
      %1344 = vst.msk [vmem:[#allocation4 + $0xd0] sm:$0xff] %vm1317, %v1274
      %1345 = vst.msk [vmem:[#allocation4 + $0xd8] sm:$0xff] %vm1317, %v1276
      %1346 = vst.msk [vmem:[#allocation4 + $0xe0] sm:$0xff] %vm1317, %v1278
      %1347 = vst.msk [vmem:[#allocation4 + $0xe8] sm:$0xff] %vm1317, %v1280
      %1348 = vst.msk [vmem:[#allocation4 + $0xf0] sm:$0xff] %vm1317, %v1282
      %1349 = vst.msk [vmem:[#allocation4 + $0xf8] sm:$0xff] %vm1317, %v1284
      %s1350 = scalar_lea.vmem [#allocation2], 48
      %v1351 = vld [vmem:[%s1350] sm:$0xff]
      %v1352 = vld [vmem:[%s1350 + $0x8] sm:$0xff]
      %v1353 = vld [vmem:[%s1350 + $0x18] sm:$0xff]
      %v1354 = vld [vmem:[%s1350 + $0x20] sm:$0xff]
      %v1355 = vld [vmem:[%s1350 + $0x30] sm:$0xff]
      %v1356 = vld [vmem:[%s1350 + $0x38] sm:$0xff]
      %v1357 = vld [vmem:[%s1350 + $0x48] sm:$0xff]
      %v1358 = vld [vmem:[%s1350 + $0x50] sm:$0xff]
      %v1359 = vld [vmem:[%s1350 + $0x60] sm:$0xff]
      %v1360 = vld [vmem:[%s1350 + $0x68] sm:$0xff]
      %v1361 = vld [vmem:[%s1350 + $0x78] sm:$0xff]
      %v1362 = vld [vmem:[%s1350 + $0x80] sm:$0xff]
      %v1363 = vld [vmem:[%s1350 + $0x90] sm:$0xff]
      %v1364 = vld [vmem:[%s1350 + $0x98] sm:$0xff]
      %v1365 = vld [vmem:[%s1350 + $0xa8] sm:$0xff]
      %v1366 = vld [vmem:[%s1350 + $0xb0] sm:$0xff]
      %v1367 = vld [vmem:[%s1350 + $0xc0] sm:$0xff]
      %v1368 = vld [vmem:[%s1350 + $0xc8] sm:$0xff]
      %v1369 = vld [vmem:[%s1350 + $0xd8] sm:$0xff]
      %v1370 = vld [vmem:[%s1350 + $0xe0] sm:$0xff]
      %v1371 = vld [vmem:[%s1350 + $0xf0] sm:$0xff]
      %v1372 = vld [vmem:[%s1350 + $0xf8] sm:$0xff]
      %v1373 = vld [vmem:[%s1350 + $0x108] sm:$0xff]
      %v1374 = vld [vmem:[%s1350 + $0x110] sm:$0xff]
      %v1375 = vld [vmem:[%s1350 + $0x120] sm:$0xff]
      %v1376 = vld [vmem:[%s1350 + $0x128] sm:$0xff]
      %v1377 = vld [vmem:[%s1350 + $0x138] sm:$0xff]
      %v1378 = vld [vmem:[%s1350 + $0x140] sm:$0xff]
      %v1379 = vld [vmem:[%s1350 + $0x150] sm:$0xff]
      %v1380 = vld [vmem:[%s1350 + $0x158] sm:$0xff]
      %v1381 = vld [vmem:[%s1350 + $0x168] sm:$0xff]
      %v1382 = vld [vmem:[%s1350 + $0x170] sm:$0xff]
      %1415 = vrot.lane.b32.xlu0 %v1351, 24
      %v1416 = vpop.permute.xlu0 %1415
      %1417 = vrot.lane.b32.xlu0 %v1352, 24
      %v1418 = vpop.permute.xlu0 %1417
      %1419 = vrot.lane.b32.xlu0 %v1353, 24
      %v1420 = vpop.permute.xlu0 %1419
      %1421 = vrot.lane.b32.xlu0 %v1354, 24
      %v1422 = vpop.permute.xlu0 %1421
      %1423 = vrot.lane.b32.xlu0 %v1355, 24
      %v1424 = vpop.permute.xlu0 %1423
      %1425 = vrot.lane.b32.xlu0 %v1356, 24
      %v1426 = vpop.permute.xlu0 %1425
      %1427 = vrot.lane.b32.xlu0 %v1357, 24
      %v1428 = vpop.permute.xlu0 %1427
      %1429 = vrot.lane.b32.xlu0 %v1358, 24
      %v1430 = vpop.permute.xlu0 %1429
      %1431 = vrot.lane.b32.xlu0 %v1359, 24
      %v1432 = vpop.permute.xlu0 %1431
      %1433 = vrot.lane.b32.xlu0 %v1360, 24
      %v1434 = vpop.permute.xlu0 %1433
      %1435 = vrot.lane.b32.xlu0 %v1361, 24
      %v1436 = vpop.permute.xlu0 %1435
      %1437 = vrot.lane.b32.xlu0 %v1362, 24
      %v1438 = vpop.permute.xlu0 %1437
      %1439 = vrot.lane.b32.xlu0 %v1363, 24
      %v1440 = vpop.permute.xlu0 %1439
      %1441 = vrot.lane.b32.xlu0 %v1364, 24
      %v1442 = vpop.permute.xlu0 %1441
      %1443 = vrot.lane.b32.xlu0 %v1365, 24
      %v1444 = vpop.permute.xlu0 %1443
      %1445 = vrot.lane.b32.xlu0 %v1366, 24
      %v1446 = vpop.permute.xlu0 %1445
      %1447 = vrot.lane.b32.xlu0 %v1367, 24
      %v1448 = vpop.permute.xlu0 %1447
      %1449 = vrot.lane.b32.xlu0 %v1368, 24
      %v1450 = vpop.permute.xlu0 %1449
      %1451 = vrot.lane.b32.xlu0 %v1369, 24
      %v1452 = vpop.permute.xlu0 %1451
      %1453 = vrot.lane.b32.xlu0 %v1370, 24
      %v1454 = vpop.permute.xlu0 %1453
      %1455 = vrot.lane.b32.xlu0 %v1371, 24
      %v1456 = vpop.permute.xlu0 %1455
      %1457 = vrot.lane.b32.xlu0 %v1372, 24
      %v1458 = vpop.permute.xlu0 %1457
      %1459 = vrot.lane.b32.xlu0 %v1373, 24
      %v1460 = vpop.permute.xlu0 %1459
      %1461 = vrot.lane.b32.xlu0 %v1374, 24
      %v1462 = vpop.permute.xlu0 %1461
      %1463 = vrot.lane.b32.xlu0 %v1375, 24
      %v1464 = vpop.permute.xlu0 %1463
      %1465 = vrot.lane.b32.xlu0 %v1376, 24
      %v1466 = vpop.permute.xlu0 %1465
      %1467 = vrot.lane.b32.xlu0 %v1377, 24
      %v1468 = vpop.permute.xlu0 %1467
      %1469 = vrot.lane.b32.xlu0 %v1378, 24
      %v1470 = vpop.permute.xlu0 %1469
      %1471 = vrot.lane.b32.xlu0 %v1379, 24
      %v1472 = vpop.permute.xlu0 %1471
      %1473 = vrot.lane.b32.xlu0 %v1380, 24
      %v1474 = vpop.permute.xlu0 %1473
      %1475 = vrot.lane.b32.xlu0 %v1381, 24
      %v1476 = vpop.permute.xlu0 %1475
      %1477 = vrot.lane.b32.xlu0 %v1382, 24
      %v1478 = vpop.permute.xlu0 %1477
      %vm1511 = vcmask 228544
      %1512 = vst.msk [vmem:[#allocation4] sm:$0xff] %vm1511, %v1416
      %1513 = vst.msk [vmem:[#allocation4 + $0x8] sm:$0xff] %vm1511, %v1418
      %1514 = vst.msk [vmem:[#allocation4 + $0x10] sm:$0xff] %vm1511, %v1420
      %1515 = vst.msk [vmem:[#allocation4 + $0x18] sm:$0xff] %vm1511, %v1422
      %1516 = vst.msk [vmem:[#allocation4 + $0x20] sm:$0xff] %vm1511, %v1424
      %1517 = vst.msk [vmem:[#allocation4 + $0x28] sm:$0xff] %vm1511, %v1426
      %1518 = vst.msk [vmem:[#allocation4 + $0x30] sm:$0xff] %vm1511, %v1428
      %1519 = vst.msk [vmem:[#allocation4 + $0x38] sm:$0xff] %vm1511, %v1430
      %1520 = vst.msk [vmem:[#allocation4 + $0x40] sm:$0xff] %vm1511, %v1432
      %1521 = vst.msk [vmem:[#allocation4 + $0x48] sm:$0xff] %vm1511, %v1434
      %1522 = vst.msk [vmem:[#allocation4 + $0x50] sm:$0xff] %vm1511, %v1436
      %1523 = vst.msk [vmem:[#allocation4 + $0x58] sm:$0xff] %vm1511, %v1438
      %1524 = vst.msk [vmem:[#allocation4 + $0x60] sm:$0xff] %vm1511, %v1440
      %1525 = vst.msk [vmem:[#allocation4 + $0x68] sm:$0xff] %vm1511, %v1442
      %1526 = vst.msk [vmem:[#allocation4 + $0x70] sm:$0xff] %vm1511, %v1444
      %1527 = vst.msk [vmem:[#allocation4 + $0x78] sm:$0xff] %vm1511, %v1446
      %1528 = vst.msk [vmem:[#allocation4 + $0x80] sm:$0xff] %vm1511, %v1448
      %1529 = vst.msk [vmem:[#allocation4 + $0x88] sm:$0xff] %vm1511, %v1450
      %1530 = vst.msk [vmem:[#allocation4 + $0x90] sm:$0xff] %vm1511, %v1452
      %1531 = vst.msk [vmem:[#allocation4 + $0x98] sm:$0xff] %vm1511, %v1454
      %1532 = vst.msk [vmem:[#allocation4 + $0xa0] sm:$0xff] %vm1511, %v1456
      %1533 = vst.msk [vmem:[#allocation4 + $0xa8] sm:$0xff] %vm1511, %v1458
      %1534 = vst.msk [vmem:[#allocation4 + $0xb0] sm:$0xff] %vm1511, %v1460
      %1535 = vst.msk [vmem:[#allocation4 + $0xb8] sm:$0xff] %vm1511, %v1462
      %1536 = vst.msk [vmem:[#allocation4 + $0xc0] sm:$0xff] %vm1511, %v1464
      %1537 = vst.msk [vmem:[#allocation4 + $0xc8] sm:$0xff] %vm1511, %v1466
      %1538 = vst.msk [vmem:[#allocation4 + $0xd0] sm:$0xff] %vm1511, %v1468
      %1539 = vst.msk [vmem:[#allocation4 + $0xd8] sm:$0xff] %vm1511, %v1470
      %1540 = vst.msk [vmem:[#allocation4 + $0xe0] sm:$0xff] %vm1511, %v1472
      %1541 = vst.msk [vmem:[#allocation4 + $0xe8] sm:$0xff] %vm1511, %v1474
      %1542 = vst.msk [vmem:[#allocation4 + $0xf0] sm:$0xff] %vm1511, %v1476
      %1543 = vst.msk [vmem:[#allocation4 + $0xf8] sm:$0xff] %vm1511, %v1478
      %v1544 = vld [vmem:[%s1350 + $0x1] sm:$0xff]
      %v1545 = vld [vmem:[%s1350 + $0x9] sm:$0xff]
      %v1546 = vld [vmem:[%s1350 + $0x19] sm:$0xff]
      %v1547 = vld [vmem:[%s1350 + $0x21] sm:$0xff]
      %v1548 = vld [vmem:[%s1350 + $0x31] sm:$0xff]
      %v1549 = vld [vmem:[%s1350 + $0x39] sm:$0xff]
      %v1550 = vld [vmem:[%s1350 + $0x49] sm:$0xff]
      %v1551 = vld [vmem:[%s1350 + $0x51] sm:$0xff]
      %v1552 = vld [vmem:[%s1350 + $0x61] sm:$0xff]
      %v1553 = vld [vmem:[%s1350 + $0x69] sm:$0xff]
      %v1554 = vld [vmem:[%s1350 + $0x79] sm:$0xff]
      %v1555 = vld [vmem:[%s1350 + $0x81] sm:$0xff]
      %v1556 = vld [vmem:[%s1350 + $0x91] sm:$0xff]
      %v1557 = vld [vmem:[%s1350 + $0x99] sm:$0xff]
      %v1558 = vld [vmem:[%s1350 + $0xa9] sm:$0xff]
      %v1559 = vld [vmem:[%s1350 + $0xb1] sm:$0xff]
      %v1560 = vld [vmem:[%s1350 + $0xc1] sm:$0xff]
      %v1561 = vld [vmem:[%s1350 + $0xc9] sm:$0xff]
      %v1562 = vld [vmem:[%s1350 + $0xd9] sm:$0xff]
      %v1563 = vld [vmem:[%s1350 + $0xe1] sm:$0xff]
      %v1564 = vld [vmem:[%s1350 + $0xf1] sm:$0xff]
      %v1565 = vld [vmem:[%s1350 + $0xf9] sm:$0xff]
      %v1566 = vld [vmem:[%s1350 + $0x109] sm:$0xff]
      %v1567 = vld [vmem:[%s1350 + $0x111] sm:$0xff]
      %v1568 = vld [vmem:[%s1350 + $0x121] sm:$0xff]
      %v1569 = vld [vmem:[%s1350 + $0x129] sm:$0xff]
      %v1570 = vld [vmem:[%s1350 + $0x139] sm:$0xff]
      %v1571 = vld [vmem:[%s1350 + $0x141] sm:$0xff]
      %v1572 = vld [vmem:[%s1350 + $0x151] sm:$0xff]
      %v1573 = vld [vmem:[%s1350 + $0x159] sm:$0xff]
      %v1574 = vld [vmem:[%s1350 + $0x169] sm:$0xff]
      %v1575 = vld [vmem:[%s1350 + $0x171] sm:$0xff]
      %1608 = vrot.lane.b32.xlu0 %v1544, 28
      %v1609 = vpop.permute.xlu0 %1608
      %1610 = vrot.lane.b32.xlu0 %v1545, 28
      %v1611 = vpop.permute.xlu0 %1610
      %1612 = vrot.lane.b32.xlu0 %v1546, 28
      %v1613 = vpop.permute.xlu0 %1612
      %1614 = vrot.lane.b32.xlu0 %v1547, 28
      %v1615 = vpop.permute.xlu0 %1614
      %1616 = vrot.lane.b32.xlu0 %v1548, 28
      %v1617 = vpop.permute.xlu0 %1616
      %1618 = vrot.lane.b32.xlu0 %v1549, 28
      %v1619 = vpop.permute.xlu0 %1618
      %1620 = vrot.lane.b32.xlu0 %v1550, 28
      %v1621 = vpop.permute.xlu0 %1620
      %1622 = vrot.lane.b32.xlu0 %v1551, 28
      %v1623 = vpop.permute.xlu0 %1622
      %1624 = vrot.lane.b32.xlu0 %v1552, 28
      %v1625 = vpop.permute.xlu0 %1624
      %1626 = vrot.lane.b32.xlu0 %v1553, 28
      %v1627 = vpop.permute.xlu0 %1626
      %1628 = vrot.lane.b32.xlu0 %v1554, 28
      %v1629 = vpop.permute.xlu0 %1628
      %1630 = vrot.lane.b32.xlu0 %v1555, 28
      %v1631 = vpop.permute.xlu0 %1630
      %1632 = vrot.lane.b32.xlu0 %v1556, 28
      %v1633 = vpop.permute.xlu0 %1632
      %1634 = vrot.lane.b32.xlu0 %v1557, 28
      %v1635 = vpop.permute.xlu0 %1634
      %1636 = vrot.lane.b32.xlu0 %v1558, 28
      %v1637 = vpop.permute.xlu0 %1636
      %1638 = vrot.lane.b32.xlu0 %v1559, 28
      %v1639 = vpop.permute.xlu0 %1638
      %1640 = vrot.lane.b32.xlu0 %v1560, 28
      %v1641 = vpop.permute.xlu0 %1640
      %1642 = vrot.lane.b32.xlu0 %v1561, 28
      %v1643 = vpop.permute.xlu0 %1642
      %1644 = vrot.lane.b32.xlu0 %v1562, 28
      %v1645 = vpop.permute.xlu0 %1644
      %1646 = vrot.lane.b32.xlu0 %v1563, 28
      %v1647 = vpop.permute.xlu0 %1646
      %1648 = vrot.lane.b32.xlu0 %v1564, 28
      %v1649 = vpop.permute.xlu0 %1648
      %1650 = vrot.lane.b32.xlu0 %v1565, 28
      %v1651 = vpop.permute.xlu0 %1650
      %1652 = vrot.lane.b32.xlu0 %v1566, 28
      %v1653 = vpop.permute.xlu0 %1652
      %1654 = vrot.lane.b32.xlu0 %v1567, 28
      %v1655 = vpop.permute.xlu0 %1654
      %1656 = vrot.lane.b32.xlu0 %v1568, 28
      %v1657 = vpop.permute.xlu0 %1656
      %1658 = vrot.lane.b32.xlu0 %v1569, 28
      %v1659 = vpop.permute.xlu0 %1658
      %1660 = vrot.lane.b32.xlu0 %v1570, 28
      %v1661 = vpop.permute.xlu0 %1660
      %1662 = vrot.lane.b32.xlu0 %v1571, 28
      %v1663 = vpop.permute.xlu0 %1662
      %1664 = vrot.lane.b32.xlu0 %v1572, 28
      %v1665 = vpop.permute.xlu0 %1664
      %1666 = vrot.lane.b32.xlu0 %v1573, 28
      %v1667 = vpop.permute.xlu0 %1666
      %1668 = vrot.lane.b32.xlu0 %v1574, 28
      %v1669 = vpop.permute.xlu0 %1668
      %1670 = vrot.lane.b32.xlu0 %v1575, 28
      %v1671 = vpop.permute.xlu0 %1670
      %vm1704 = vcmask 261344
      %1705 = vst.msk [vmem:[#allocation4] sm:$0xff] %vm1704, %v1609
      %1706 = vst.msk [vmem:[#allocation4 + $0x8] sm:$0xff] %vm1704, %v1611
      %1707 = vst.msk [vmem:[#allocation4 + $0x10] sm:$0xff] %vm1704, %v1613
      %1708 = vst.msk [vmem:[#allocation4 + $0x18] sm:$0xff] %vm1704, %v1615
      %1709 = vst.msk [vmem:[#allocation4 + $0x20] sm:$0xff] %vm1704, %v1617
      %1710 = vst.msk [vmem:[#allocation4 + $0x28] sm:$0xff] %vm1704, %v1619
      %1711 = vst.msk [vmem:[#allocation4 + $0x30] sm:$0xff] %vm1704, %v1621
      %1712 = vst.msk [vmem:[#allocation4 + $0x38] sm:$0xff] %vm1704, %v1623
      %1713 = vst.msk [vmem:[#allocation4 + $0x40] sm:$0xff] %vm1704, %v1625
      %1714 = vst.msk [vmem:[#allocation4 + $0x48] sm:$0xff] %vm1704, %v1627
      %1715 = vst.msk [vmem:[#allocation4 + $0x50] sm:$0xff] %vm1704, %v1629
      %1716 = vst.msk [vmem:[#allocation4 + $0x58] sm:$0xff] %vm1704, %v1631
      %1717 = vst.msk [vmem:[#allocation4 + $0x60] sm:$0xff] %vm1704, %v1633
      %1718 = vst.msk [vmem:[#allocation4 + $0x68] sm:$0xff] %vm1704, %v1635
      %1719 = vst.msk [vmem:[#allocation4 + $0x70] sm:$0xff] %vm1704, %v1637
      %1720 = vst.msk [vmem:[#allocation4 + $0x78] sm:$0xff] %vm1704, %v1639
      %1721 = vst.msk [vmem:[#allocation4 + $0x80] sm:$0xff] %vm1704, %v1641
      %1722 = vst.msk [vmem:[#allocation4 + $0x88] sm:$0xff] %vm1704, %v1643
      %1723 = vst.msk [vmem:[#allocation4 + $0x90] sm:$0xff] %vm1704, %v1645
      %1724 = vst.msk [vmem:[#allocation4 + $0x98] sm:$0xff] %vm1704, %v1647
      %1725 = vst.msk [vmem:[#allocation4 + $0xa0] sm:$0xff] %vm1704, %v1649
      %1726 = vst.msk [vmem:[#allocation4 + $0xa8] sm:$0xff] %vm1704, %v1651
      %1727 = vst.msk [vmem:[#allocation4 + $0xb0] sm:$0xff] %vm1704, %v1653
      %1728 = vst.msk [vmem:[#allocation4 + $0xb8] sm:$0xff] %vm1704, %v1655
      %1729 = vst.msk [vmem:[#allocation4 + $0xc0] sm:$0xff] %vm1704, %v1657
      %1730 = vst.msk [vmem:[#allocation4 + $0xc8] sm:$0xff] %vm1704, %v1659
      %1731 = vst.msk [vmem:[#allocation4 + $0xd0] sm:$0xff] %vm1704, %v1661
      %1732 = vst.msk [vmem:[#allocation4 + $0xd8] sm:$0xff] %vm1704, %v1663
      %1733 = vst.msk [vmem:[#allocation4 + $0xe0] sm:$0xff] %vm1704, %v1665
      %1734 = vst.msk [vmem:[#allocation4 + $0xe8] sm:$0xff] %vm1704, %v1667
      %1735 = vst.msk [vmem:[#allocation4 + $0xf0] sm:$0xff] %vm1704, %v1669
      %1736 = vst.msk [vmem:[#allocation4 + $0xf8] sm:$0xff] %vm1704, %v1671
      %v1737 = vld [vmem:[%s1350 + $0x2] sm:$0xff]
      %v1738 = vld [vmem:[%s1350 + $0xa] sm:$0xff]
      %v1739 = vld [vmem:[%s1350 + $0x1a] sm:$0xff]
      %v1740 = vld [vmem:[%s1350 + $0x22] sm:$0xff]
      %v1741 = vld [vmem:[%s1350 + $0x32] sm:$0xff]
      %v1742 = vld [vmem:[%s1350 + $0x3a] sm:$0xff]
      %v1743 = vld [vmem:[%s1350 + $0x4a] sm:$0xff]
      %v1744 = vld [vmem:[%s1350 + $0x52] sm:$0xff]
      %v1745 = vld [vmem:[%s1350 + $0x62] sm:$0xff]
      %v1746 = vld [vmem:[%s1350 + $0x6a] sm:$0xff]
      %v1747 = vld [vmem:[%s1350 + $0x7a] sm:$0xff]
      %v1748 = vld [vmem:[%s1350 + $0x82] sm:$0xff]
      %v1749 = vld [vmem:[%s1350 + $0x92] sm:$0xff]
      %v1750 = vld [vmem:[%s1350 + $0x9a] sm:$0xff]
      %v1751 = vld [vmem:[%s1350 + $0xaa] sm:$0xff]
      %v1752 = vld [vmem:[%s1350 + $0xb2] sm:$0xff]
      %v1753 = vld [vmem:[%s1350 + $0xc2] sm:$0xff]
      %v1754 = vld [vmem:[%s1350 + $0xca] sm:$0xff]
      %v1755 = vld [vmem:[%s1350 + $0xda] sm:$0xff]
      %v1756 = vld [vmem:[%s1350 + $0xe2] sm:$0xff]
      %v1757 = vld [vmem:[%s1350 + $0xf2] sm:$0xff]
      %v1758 = vld [vmem:[%s1350 + $0xfa] sm:$0xff]
      %v1759 = vld [vmem:[%s1350 + $0x10a] sm:$0xff]
      %v1760 = vld [vmem:[%s1350 + $0x112] sm:$0xff]
      %v1761 = vld [vmem:[%s1350 + $0x122] sm:$0xff]
      %v1762 = vld [vmem:[%s1350 + $0x12a] sm:$0xff]
      %v1763 = vld [vmem:[%s1350 + $0x13a] sm:$0xff]
      %v1764 = vld [vmem:[%s1350 + $0x142] sm:$0xff]
      %v1765 = vld [vmem:[%s1350 + $0x152] sm:$0xff]
      %v1766 = vld [vmem:[%s1350 + $0x15a] sm:$0xff]
      %v1767 = vld [vmem:[%s1350 + $0x16a] sm:$0xff]
      %v1768 = vld [vmem:[%s1350 + $0x172] sm:$0xff]
      %1801 = vrot.lane.b32.xlu0 %v1737, 32
      %v1802 = vpop.permute.xlu0 %1801
      %1803 = vrot.lane.b32.xlu0 %v1738, 32
      %v1804 = vpop.permute.xlu0 %1803
      %1805 = vrot.lane.b32.xlu0 %v1739, 32
      %v1806 = vpop.permute.xlu0 %1805
      %1807 = vrot.lane.b32.xlu0 %v1740, 32
      %v1808 = vpop.permute.xlu0 %1807
      %1809 = vrot.lane.b32.xlu0 %v1741, 32
      %v1810 = vpop.permute.xlu0 %1809
      %1811 = vrot.lane.b32.xlu0 %v1742, 32
      %v1812 = vpop.permute.xlu0 %1811
      %1813 = vrot.lane.b32.xlu0 %v1743, 32
      %v1814 = vpop.permute.xlu0 %1813
      %1815 = vrot.lane.b32.xlu0 %v1744, 32
      %v1816 = vpop.permute.xlu0 %1815
      %1817 = vrot.lane.b32.xlu0 %v1745, 32
      %v1818 = vpop.permute.xlu0 %1817
      %1819 = vrot.lane.b32.xlu0 %v1746, 32
      %v1820 = vpop.permute.xlu0 %1819
      %1821 = vrot.lane.b32.xlu0 %v1747, 32
      %v1822 = vpop.permute.xlu0 %1821
      %1823 = vrot.lane.b32.xlu0 %v1748, 32
      %v1824 = vpop.permute.xlu0 %1823
      %1825 = vrot.lane.b32.xlu0 %v1749, 32
      %v1826 = vpop.permute.xlu0 %1825
      %1827 = vrot.lane.b32.xlu0 %v1750, 32
      %v1828 = vpop.permute.xlu0 %1827
      %1829 = vrot.lane.b32.xlu0 %v1751, 32
      %v1830 = vpop.permute.xlu0 %1829
      %1831 = vrot.lane.b32.xlu0 %v1752, 32
      %v1832 = vpop.permute.xlu0 %1831
      %1833 = vrot.lane.b32.xlu0 %v1753, 32
      %v1834 = vpop.permute.xlu0 %1833
      %1835 = vrot.lane.b32.xlu0 %v1754, 32
      %v1836 = vpop.permute.xlu0 %1835
      %1837 = vrot.lane.b32.xlu0 %v1755, 32
      %v1838 = vpop.permute.xlu0 %1837
      %1839 = vrot.lane.b32.xlu0 %v1756, 32
      %v1840 = vpop.permute.xlu0 %1839
      %1841 = vrot.lane.b32.xlu0 %v1757, 32
      %v1842 = vpop.permute.xlu0 %1841
      %1843 = vrot.lane.b32.xlu0 %v1758, 32
      %v1844 = vpop.permute.xlu0 %1843
      %1845 = vrot.lane.b32.xlu0 %v1759, 32
      %v1846 = vpop.permute.xlu0 %1845
      %1847 = vrot.lane.b32.xlu0 %v1760, 32
      %v1848 = vpop.permute.xlu0 %1847
      %1849 = vrot.lane.b32.xlu0 %v1761, 32
      %v1850 = vpop.permute.xlu0 %1849
      %1851 = vrot.lane.b32.xlu0 %v1762, 32
      %v1852 = vpop.permute.xlu0 %1851
      %1853 = vrot.lane.b32.xlu0 %v1763, 32
      %v1854 = vpop.permute.xlu0 %1853
      %1855 = vrot.lane.b32.xlu0 %v1764, 32
      %v1856 = vpop.permute.xlu0 %1855
      %1857 = vrot.lane.b32.xlu0 %v1765, 32
      %v1858 = vpop.permute.xlu0 %1857
      %1859 = vrot.lane.b32.xlu0 %v1766, 32
      %v1860 = vpop.permute.xlu0 %1859
      %1861 = vrot.lane.b32.xlu0 %v1767, 32
      %v1862 = vpop.permute.xlu0 %1861
      %1863 = vrot.lane.b32.xlu0 %v1768, 32
      %v1864 = vpop.permute.xlu0 %1863
      %vm1897 = vcmask 294144
      %1898 = vst.msk [vmem:[#allocation4] sm:$0xff] %vm1897, %v1802
      %1899 = vst.msk [vmem:[#allocation4 + $0x8] sm:$0xff] %vm1897, %v1804
      %1900 = vst.msk [vmem:[#allocation4 + $0x10] sm:$0xff] %vm1897, %v1806
      %1901 = vst.msk [vmem:[#allocation4 + $0x18] sm:$0xff] %vm1897, %v1808
      %1902 = vst.msk [vmem:[#allocation4 + $0x20] sm:$0xff] %vm1897, %v1810
      %1903 = vst.msk [vmem:[#allocation4 + $0x28] sm:$0xff] %vm1897, %v1812
      %1904 = vst.msk [vmem:[#allocation4 + $0x30] sm:$0xff] %vm1897, %v1814
      %1905 = vst.msk [vmem:[#allocation4 + $0x38] sm:$0xff] %vm1897, %v1816
      %1906 = vst.msk [vmem:[#allocation4 + $0x40] sm:$0xff] %vm1897, %v1818
      %1907 = vst.msk [vmem:[#allocation4 + $0x48] sm:$0xff] %vm1897, %v1820
      %1908 = vst.msk [vmem:[#allocation4 + $0x50] sm:$0xff] %vm1897, %v1822
      %1909 = vst.msk [vmem:[#allocation4 + $0x58] sm:$0xff] %vm1897, %v1824
      %1910 = vst.msk [vmem:[#allocation4 + $0x60] sm:$0xff] %vm1897, %v1826
      %1911 = vst.msk [vmem:[#allocation4 + $0x68] sm:$0xff] %vm1897, %v1828
      %1912 = vst.msk [vmem:[#allocation4 + $0x70] sm:$0xff] %vm1897, %v1830
      %1913 = vst.msk [vmem:[#allocation4 + $0x78] sm:$0xff] %vm1897, %v1832
      %1914 = vst.msk [vmem:[#allocation4 + $0x80] sm:$0xff] %vm1897, %v1834
      %1915 = vst.msk [vmem:[#allocation4 + $0x88] sm:$0xff] %vm1897, %v1836
      %1916 = vst.msk [vmem:[#allocation4 + $0x90] sm:$0xff] %vm1897, %v1838
      %1917 = vst.msk [vmem:[#allocation4 + $0x98] sm:$0xff] %vm1897, %v1840
      %1918 = vst.msk [vmem:[#allocation4 + $0xa0] sm:$0xff] %vm1897, %v1842
      %1919 = vst.msk [vmem:[#allocation4 + $0xa8] sm:$0xff] %vm1897, %v1844
      %1920 = vst.msk [vmem:[#allocation4 + $0xb0] sm:$0xff] %vm1897, %v1846
      %1921 = vst.msk [vmem:[#allocation4 + $0xb8] sm:$0xff] %vm1897, %v1848
      %1922 = vst.msk [vmem:[#allocation4 + $0xc0] sm:$0xff] %vm1897, %v1850
      %1923 = vst.msk [vmem:[#allocation4 + $0xc8] sm:$0xff] %vm1897, %v1852
      %1924 = vst.msk [vmem:[#allocation4 + $0xd0] sm:$0xff] %vm1897, %v1854
      %1925 = vst.msk [vmem:[#allocation4 + $0xd8] sm:$0xff] %vm1897, %v1856
      %1926 = vst.msk [vmem:[#allocation4 + $0xe0] sm:$0xff] %vm1897, %v1858
      %1927 = vst.msk [vmem:[#allocation4 + $0xe8] sm:$0xff] %vm1897, %v1860
      %1928 = vst.msk [vmem:[#allocation4 + $0xf0] sm:$0xff] %vm1897, %v1862
      %1929 = vst.msk [vmem:[#allocation4 + $0xf8] sm:$0xff] %vm1897, %v1864
      %v1930 = vld [vmem:[#allocation4] sm:$0xff]
      %v1931 = vld [vmem:[#allocation4 + $0x8] sm:$0xff]
      %v1932 = vld [vmem:[#allocation4 + $0x10] sm:$0xff]
      %v1933 = vld [vmem:[#allocation4 + $0x18] sm:$0xff]
      %v1934 = vld [vmem:[#allocation4 + $0x20] sm:$0xff]
      %v1935 = vld [vmem:[#allocation4 + $0x28] sm:$0xff]
      %v1936 = vld [vmem:[#allocation4 + $0x30] sm:$0xff]
      %v1937 = vld [vmem:[#allocation4 + $0x38] sm:$0xff]
      %v1938 = vld [vmem:[#allocation4 + $0x40] sm:$0xff]
      %v1939 = vld [vmem:[#allocation4 + $0x48] sm:$0xff]
      %v1940 = vld [vmem:[#allocation4 + $0x50] sm:$0xff]
      %v1941 = vld [vmem:[#allocation4 + $0x58] sm:$0xff]
      %v1942 = vld [vmem:[#allocation4 + $0x60] sm:$0xff]
      %v1943 = vld [vmem:[#allocation4 + $0x68] sm:$0xff]
      %v1944 = vld [vmem:[#allocation4 + $0x70] sm:$0xff]
      %v1945 = vld [vmem:[#allocation4 + $0x78] sm:$0xff]
      %v1946 = vld [vmem:[#allocation4 + $0x80] sm:$0xff]
      %v1947 = vld [vmem:[#allocation4 + $0x88] sm:$0xff]
      %v1948 = vld [vmem:[#allocation4 + $0x90] sm:$0xff]
      %v1949 = vld [vmem:[#allocation4 + $0x98] sm:$0xff]
      %v1950 = vld [vmem:[#allocation4 + $0xa0] sm:$0xff]
      %v1951 = vld [vmem:[#allocation4 + $0xa8] sm:$0xff]
      %v1952 = vld [vmem:[#allocation4 + $0xb0] sm:$0xff]
      %v1953 = vld [vmem:[#allocation4 + $0xb8] sm:$0xff]
      %v1954 = vld [vmem:[#allocation4 + $0xc0] sm:$0xff]
      %v1955 = vld [vmem:[#allocation4 + $0xc8] sm:$0xff]
      %v1956 = vld [vmem:[#allocation4 + $0xd0] sm:$0xff]
      %v1957 = vld [vmem:[#allocation4 + $0xd8] sm:$0xff]
      %v1958 = vld [vmem:[#allocation4 + $0xe0] sm:$0xff]
      %v1959 = vld [vmem:[#allocation4 + $0xe8] sm:$0xff]
      %v1960 = vld [vmem:[#allocation4 + $0xf0] sm:$0xff]
      %v1961 = vld [vmem:[#allocation4 + $0xf8] sm:$0xff]
      %v1962 = vld [vmem:[%s1] sm:$0xff]
      %v1963 = vld [vmem:[%s1 + $0x8] sm:$0xff]
      %v1964 = vld [vmem:[%s1 + $0x10] sm:$0xff]
      %v1965 = vld [vmem:[%s1 + $0x18] sm:$0xff]
      %v1966 = vld [vmem:[%s1 + $0x20] sm:$0xf]
      %vm1967 = vcmask 293888
      %v1969 = vsel %vm1967, %v1930, 0
      %v1972 = vsel %vm1967, %v1931, 0
      %v1975 = vsel %vm1967, %v1932, 0
      %v1978 = vsel %vm1967, %v1933, 0
      %v1981 = vsel %vm1967, %v1934, 0
      %v1984 = vsel %vm1967, %v1935, 0
      %v1987 = vsel %vm1967, %v1936, 0
      %v1990 = vsel %vm1967, %v1937, 0
      %v1993 = vsel %vm1967, %v1938, 0
      %v1996 = vsel %vm1967, %v1939, 0
      %v1999 = vsel %vm1967, %v1940, 0
      %v2002 = vsel %vm1967, %v1941, 0
      %v2005 = vsel %vm1967, %v1942, 0
      %v2008 = vsel %vm1967, %v1943, 0
      %v2011 = vsel %vm1967, %v1944, 0
      %v2014 = vsel %vm1967, %v1945, 0
      %v2017 = vsel %vm1967, %v1946, 0
      %v2020 = vsel %vm1967, %v1947, 0
      %v2023 = vsel %vm1967, %v1948, 0
      %v2026 = vsel %vm1967, %v1949, 0
      %v2029 = vsel %vm1967, %v1950, 0
      %v2032 = vsel %vm1967, %v1951, 0
      %v2035 = vsel %vm1967, %v1952, 0
      %v2038 = vsel %vm1967, %v1953, 0
      %v2041 = vsel %vm1967, %v1954, 0
      %v2044 = vsel %vm1967, %v1955, 0
      %v2047 = vsel %vm1967, %v1956, 0
      %v2050 = vsel %vm1967, %v1957, 0
      %v2053 = vsel %vm1967, %v1958, 0
      %v2056 = vsel %vm1967, %v1959, 0
      %v2059 = vsel %vm1967, %v1960, 0
      %v2062 = vsel %vm1967, %v1961, 0
      %vm2064 = vcmask 1043456
      %v2066 = vsel %vm2064, %v1966, 0
      %2068 = vmatprep.subr.mxu0 0.0
      %2069 = vmatpush1.msra.mxu0 0.0
      %2070 = vmatprep.subr.mxu0 0.0
      %2071 = vmatpush1.msra.mxu0 0.0
      %2072 = vmatprep.subr.mxu0 0.0
      %2073 = vmatpush1.msra.mxu0 0.0
      %2074 = vmatprep.subr.mxu0 0.0
      %2075 = vmatpush1.msra.mxu0 0.0
      %2076 = vmatprep.subr.mxu0 0.0
      %2077 = vmatpush1.msra.mxu0 0.0
      %2078 = vmatprep.subr.mxu0 0.0
      %2079 = vmatpush1.msra.mxu0 0.0
      %2080 = vmatprep.subr.mxu0 0.0
      %2081 = vmatpush1.msra.mxu0 0.0
      %2082 = vmatprep.subr.mxu0 0.0
      %2083 = vmatpush1.msra.mxu0 0.0
      %2084 = vmatprep.subr.mxu0 0.0
      %2085 = vmatpush1.msra.mxu0 0.0
      %2086 = vmatprep.subr.mxu0 0.0
      %2087 = vmatpush1.msra.mxu0 0.0
      %2088 = vmatprep.subr.mxu0 0.0
      %2089 = vmatpush1.msra.mxu0 0.0
      %2090 = vmatprep.subr.mxu0 0.0
      %2091 = vmatpush1.msra.mxu0 %v2066
      %2092 = vmatprep.subr.mxu0 0.0
      %2093 = vmatpush1.msra.mxu0 %v1965
      %2094 = vmatprep.subr.mxu0 0.0
      %2095 = vmatpush1.msra.mxu0 %v1964
      %2096 = vmatprep.subr.mxu0 0.0
      %2097 = vmatpush1.msra.mxu0 %v1963
      %2098 = vmatprep.subr.mxu0 0.0
      %2099 = vmatpush1.msra.mxu0 %v1962
      %2100 = vmatprep.subr.mxu0 0.0
      %2101 = vmatpush2.msra.mxu0 0.0
      %2102 = vmatprep.subr.mxu0 0.0
      %2103 = vmatpush2.msra.mxu0 0.0
      %2104 = vmatprep.subr.mxu0 0.0
      %2105 = vmatpush2.msra.mxu0 0.0
      %2106 = vmatprep.subr.mxu0 0.0
      %2107 = vmatpush2.msra.mxu0 0.0
      %2108 = vmatprep.subr.mxu0 0.0
      %2109 = vmatpush2.msra.mxu0 0.0
      %2110 = vmatprep.subr.mxu0 0.0
      %2111 = vmatpush2.msra.mxu0 0.0
      %2112 = vmatprep.subr.mxu0 0.0
      %2113 = vmatpush2.msra.mxu0 0.0
      %2114 = vmatprep.subr.mxu0 0.0
      %2115 = vmatpush2.msra.mxu0 0.0
      %2116 = vmatprep.subr.mxu0 0.0
      %2117 = vmatpush2.msra.mxu0 0.0
      %2118 = vmatprep.subr.mxu0 0.0
      %2119 = vmatpush2.msra.mxu0 0.0
      %2120 = vmatprep.subr.mxu0 0.0
      %2121 = vmatpush2.msra.mxu0 0.0
      %2122 = vmatprep.subr.mxu0 0.0
      %2123 = vmatpush2.msra.mxu0 0.0
      %2124 = vmatprep.subr.mxu0 0.0
      %2125 = vmatpush2.msra.mxu0 0.0
      %2126 = vmatprep.subr.mxu0 0.0
      %2127 = vmatpush2.msra.mxu0 0.0
      %2128 = vmatprep.subr.mxu0 0.0
      %2129 = vmatpush2.msra.mxu0 0.0
      %2130 = vmatprep.subr.mxu0 0.0
      %2131 = vmatpush2.msra.mxu0 0.0
      %2132 = vmatprep.mubr.f32.mxu0 0.0
      %2133 = vmatmul.mubr.f32.gmra.mxu0 %v1969
      %v2134 = vpop.f32.mrf.mxu0
      %v2135 = vadd.f32 0.0, %v2134
      %v2136 = vpop.f32.mrf.mxu0
      %2137 = vmatprep.mubr.f32.mxu0 0.0
      %2138 = vmatmul.mubr.f32.gmra.mxu0 %v1972
      %v2139 = vpop.f32.mrf.mxu0
      %v2140 = vadd.f32 0.0, %v2139
      %v2141 = vpop.f32.mrf.mxu0
      %2142 = vmatprep.mubr.f32.mxu0 0.0
      %2143 = vmatmul.mubr.f32.gmra.mxu0 %v1975
      %v2144 = vpop.f32.mrf.mxu0
      %v2145 = vadd.f32 0.0, %v2144
      %v2146 = vpop.f32.mrf.mxu0
      %2147 = vmatprep.mubr.f32.mxu0 0.0
      %2148 = vmatmul.mubr.f32.gmra.mxu0 %v1978
      %v2149 = vpop.f32.mrf.mxu0
      %v2150 = vadd.f32 0.0, %v2149
      %v2151 = vpop.f32.mrf.mxu0
      %2152 = vmatprep.mubr.f32.mxu0 0.0
      %2153 = vmatmul.mubr.f32.gmra.mxu0 %v1981
      %v2154 = vpop.f32.mrf.mxu0
      %v2155 = vadd.f32 0.0, %v2154
      %v2156 = vpop.f32.mrf.mxu0
      %2157 = vmatprep.mubr.f32.mxu0 0.0
      %2158 = vmatmul.mubr.f32.gmra.mxu0 %v1984
      %v2159 = vpop.f32.mrf.mxu0
      %v2160 = vadd.f32 0.0, %v2159
      %v2161 = vpop.f32.mrf.mxu0
      %2162 = vmatprep.mubr.f32.mxu0 0.0
      %2163 = vmatmul.mubr.f32.gmra.mxu0 %v1987
      %v2164 = vpop.f32.mrf.mxu0
      %v2165 = vadd.f32 0.0, %v2164
      %v2166 = vpop.f32.mrf.mxu0
      %2167 = vmatprep.mubr.f32.mxu0 0.0
      %2168 = vmatmul.mubr.f32.gmra.mxu0 %v1990
      %v2169 = vpop.f32.mrf.mxu0
      %v2170 = vadd.f32 0.0, %v2169
      %v2171 = vpop.f32.mrf.mxu0
      %2172 = vmatprep.mubr.f32.mxu0 0.0
      %2173 = vmatmul.mubr.f32.gmra.mxu0 %v1993
      %v2174 = vpop.f32.mrf.mxu0
      %v2175 = vadd.f32 0.0, %v2174
      %v2176 = vpop.f32.mrf.mxu0
      %2177 = vmatprep.mubr.f32.mxu0 0.0
      %2178 = vmatmul.mubr.f32.gmra.mxu0 %v1996
      %v2179 = vpop.f32.mrf.mxu0
      %v2180 = vadd.f32 0.0, %v2179
      %v2181 = vpop.f32.mrf.mxu0
      %2182 = vmatprep.mubr.f32.mxu0 0.0
      %2183 = vmatmul.mubr.f32.gmra.mxu0 %v1999
      %v2184 = vpop.f32.mrf.mxu0
      %v2185 = vadd.f32 0.0, %v2184
      %v2186 = vpop.f32.mrf.mxu0
      %2187 = vmatprep.mubr.f32.mxu0 0.0
      %2188 = vmatmul.mubr.f32.gmra.mxu0 %v2002
      %v2189 = vpop.f32.mrf.mxu0
      %v2190 = vadd.f32 0.0, %v2189
      %v2191 = vpop.f32.mrf.mxu0
      %2192 = vmatprep.mubr.f32.mxu0 0.0
      %2193 = vmatmul.mubr.f32.gmra.mxu0 %v2005
      %v2194 = vpop.f32.mrf.mxu0
      %v2195 = vadd.f32 0.0, %v2194
      %v2196 = vpop.f32.mrf.mxu0
      %2197 = vmatprep.mubr.f32.mxu0 0.0
      %2198 = vmatmul.mubr.f32.gmra.mxu0 %v2008
      %v2199 = vpop.f32.mrf.mxu0
      %v2200 = vadd.f32 0.0, %v2199
      %v2201 = vpop.f32.mrf.mxu0
      %2202 = vmatprep.mubr.f32.mxu0 0.0
      %2203 = vmatmul.mubr.f32.gmra.mxu0 %v2011
      %v2204 = vpop.f32.mrf.mxu0
      %v2205 = vadd.f32 0.0, %v2204
      %v2206 = vpop.f32.mrf.mxu0
      %2207 = vmatprep.mubr.f32.mxu0 0.0
      %2208 = vmatmul.mubr.f32.gmra.mxu0 %v2014
      %v2209 = vpop.f32.mrf.mxu0
      %v2210 = vadd.f32 0.0, %v2209
      %v2211 = vpop.f32.mrf.mxu0
      %2212 = vmatprep.mubr.f32.mxu0 0.0
      %2213 = vmatmul.mubr.f32.gmra.mxu0 %v2017
      %v2214 = vpop.f32.mrf.mxu0
      %v2215 = vadd.f32 0.0, %v2214
      %v2216 = vpop.f32.mrf.mxu0
      %2217 = vmatprep.mubr.f32.mxu0 0.0
      %2218 = vmatmul.mubr.f32.gmra.mxu0 %v2020
      %v2219 = vpop.f32.mrf.mxu0
      %v2220 = vadd.f32 0.0, %v2219
      %v2221 = vpop.f32.mrf.mxu0
      %2222 = vmatprep.mubr.f32.mxu0 0.0
      %2223 = vmatmul.mubr.f32.gmra.mxu0 %v2023
      %v2224 = vpop.f32.mrf.mxu0
      %v2225 = vadd.f32 0.0, %v2224
      %v2226 = vpop.f32.mrf.mxu0
      %2227 = vmatprep.mubr.f32.mxu0 0.0
      %2228 = vmatmul.mubr.f32.gmra.mxu0 %v2026
      %v2229 = vpop.f32.mrf.mxu0
      %v2230 = vadd.f32 0.0, %v2229
      %v2231 = vpop.f32.mrf.mxu0
      %2232 = vmatprep.mubr.f32.mxu0 0.0
      %2233 = vmatmul.mubr.f32.gmra.mxu0 %v2029
      %v2234 = vpop.f32.mrf.mxu0
      %v2235 = vadd.f32 0.0, %v2234
      %v2236 = vpop.f32.mrf.mxu0
      %2237 = vmatprep.mubr.f32.mxu0 0.0
      %2238 = vmatmul.mubr.f32.gmra.mxu0 %v2032
      %v2239 = vpop.f32.mrf.mxu0
      %v2240 = vadd.f32 0.0, %v2239
      %v2241 = vpop.f32.mrf.mxu0
      %2242 = vmatprep.mubr.f32.mxu0 0.0
      %2243 = vmatmul.mubr.f32.gmra.mxu0 %v2035
      %v2244 = vpop.f32.mrf.mxu0
      %v2245 = vadd.f32 0.0, %v2244
      %v2246 = vpop.f32.mrf.mxu0
      %2247 = vmatprep.mubr.f32.mxu0 0.0
      %2248 = vmatmul.mubr.f32.gmra.mxu0 %v2038
      %v2249 = vpop.f32.mrf.mxu0
      %v2250 = vadd.f32 0.0, %v2249
      %v2251 = vpop.f32.mrf.mxu0
      %2252 = vmatprep.mubr.f32.mxu0 0.0
      %2253 = vmatmul.mubr.f32.gmra.mxu0 %v2041
      %v2254 = vpop.f32.mrf.mxu0
      %v2255 = vadd.f32 0.0, %v2254
      %v2256 = vpop.f32.mrf.mxu0
      %2257 = vmatprep.mubr.f32.mxu0 0.0
      %2258 = vmatmul.mubr.f32.gmra.mxu0 %v2044
      %v2259 = vpop.f32.mrf.mxu0
      %v2260 = vadd.f32 0.0, %v2259
      %v2261 = vpop.f32.mrf.mxu0
      %2262 = vmatprep.mubr.f32.mxu0 0.0
      %2263 = vmatmul.mubr.f32.gmra.mxu0 %v2047
      %v2264 = vpop.f32.mrf.mxu0
      %v2265 = vadd.f32 0.0, %v2264
      %v2266 = vpop.f32.mrf.mxu0
      %2267 = vmatprep.mubr.f32.mxu0 0.0
      %2268 = vmatmul.mubr.f32.gmra.mxu0 %v2050
      %v2269 = vpop.f32.mrf.mxu0
      %v2270 = vadd.f32 0.0, %v2269
      %v2271 = vpop.f32.mrf.mxu0
      %2272 = vmatprep.mubr.f32.mxu0 0.0
      %2273 = vmatmul.mubr.f32.gmra.mxu0 %v2053
      %v2274 = vpop.f32.mrf.mxu0
      %v2275 = vadd.f32 0.0, %v2274
      %v2276 = vpop.f32.mrf.mxu0
      %2277 = vmatprep.mubr.f32.mxu0 0.0
      %2278 = vmatmul.mubr.f32.gmra.mxu0 %v2056
      %v2279 = vpop.f32.mrf.mxu0
      %v2280 = vadd.f32 0.0, %v2279
      %v2281 = vpop.f32.mrf.mxu0
      %2282 = vmatprep.mubr.f32.mxu0 0.0
      %2283 = vmatmul.mubr.f32.gmra.mxu0 %v2059
      %v2284 = vpop.f32.mrf.mxu0
      %v2285 = vadd.f32 0.0, %v2284
      %v2286 = vpop.f32.mrf.mxu0
      %2287 = vmatprep.mubr.f32.mxu0 0.0
      %2288 = vmatmul.mubr.f32.gmra.mxu0 %v2062
      %v2289 = vpop.f32.mrf.mxu0
      %v2290 = vadd.f32 0.0, %v2289
      %v2291 = vpop.f32.mrf.mxu0
      %2292 = vdwg.mxu0
      %v2293 = vmax.f32 %v2135, 0.0
      %v2294 = vmax.f32 %v2140, 0.0
      %v2295 = vmax.f32 %v2145, 0.0
      %v2296 = vmax.f32 %v2150, 0.0
      %v2297 = vmax.f32 %v2155, 0.0
      %v2298 = vmax.f32 %v2160, 0.0
      %v2299 = vmax.f32 %v2165, 0.0
      %v2300 = vmax.f32 %v2170, 0.0
      %v2301 = vmax.f32 %v2175, 0.0
      %v2302 = vmax.f32 %v2180, 0.0
      %v2303 = vmax.f32 %v2185, 0.0
      %v2304 = vmax.f32 %v2190, 0.0
      %v2305 = vmax.f32 %v2195, 0.0
      %v2306 = vmax.f32 %v2200, 0.0
      %v2307 = vmax.f32 %v2205, 0.0
      %v2308 = vmax.f32 %v2210, 0.0
      %v2309 = vmax.f32 %v2215, 0.0
      %v2310 = vmax.f32 %v2220, 0.0
      %v2311 = vmax.f32 %v2225, 0.0
      %v2312 = vmax.f32 %v2230, 0.0
      %v2313 = vmax.f32 %v2235, 0.0
      %v2314 = vmax.f32 %v2240, 0.0
      %v2315 = vmax.f32 %v2245, 0.0
      %v2316 = vmax.f32 %v2250, 0.0
      %v2317 = vmax.f32 %v2255, 0.0
      %v2318 = vmax.f32 %v2260, 0.0
      %v2319 = vmax.f32 %v2265, 0.0
      %v2320 = vmax.f32 %v2270, 0.0
      %v2321 = vmax.f32 %v2275, 0.0
      %v2322 = vmax.f32 %v2280, 0.0
      %v2323 = vmax.f32 %v2285, 0.0
      %v2324 = vmax.f32 %v2290, 0.0
      %2325 = vst.msk [vmem:[%s223 + $0x1] sm:$0xff] %vm214, %v2293
      %2326 = vst.msk [vmem:[%s223 + $0x9] sm:$0xff] %vm214, %v2294
      %2327 = vst.msk [vmem:[%s223 + $0x19] sm:$0xff] %vm214, %v2295
      %2328 = vst.msk [vmem:[%s223 + $0x21] sm:$0xff] %vm214, %v2296
      %2329 = vst.msk [vmem:[%s223 + $0x31] sm:$0xff] %vm214, %v2297
      %2330 = vst.msk [vmem:[%s223 + $0x39] sm:$0xff] %vm214, %v2298
      %2331 = vst.msk [vmem:[%s223 + $0x49] sm:$0xff] %vm214, %v2299
      %2332 = vst.msk [vmem:[%s223 + $0x51] sm:$0xff] %vm214, %v2300
      %2333 = vst.msk [vmem:[%s223 + $0x61] sm:$0xff] %vm214, %v2301
      %2334 = vst.msk [vmem:[%s223 + $0x69] sm:$0xff] %vm214, %v2302
      %2335 = vst.msk [vmem:[%s223 + $0x79] sm:$0xff] %vm214, %v2303
      %2336 = vst.msk [vmem:[%s223 + $0x81] sm:$0xff] %vm214, %v2304
      %2337 = vst.msk [vmem:[%s223 + $0x91] sm:$0xff] %vm214, %v2305
      %2338 = vst.msk [vmem:[%s223 + $0x99] sm:$0xff] %vm214, %v2306
      %2339 = vst.msk [vmem:[%s223 + $0xa9] sm:$0xff] %vm214, %v2307
      %2340 = vst.msk [vmem:[%s223 + $0xb1] sm:$0xff] %vm214, %v2308
      %2341 = vst.msk [vmem:[%s223 + $0xc1] sm:$0xff] %vm214, %v2309
      %2342 = vst.msk [vmem:[%s223 + $0xc9] sm:$0xff] %vm214, %v2310
      %2343 = vst.msk [vmem:[%s223 + $0xd9] sm:$0xff] %vm214, %v2311
      %2344 = vst.msk [vmem:[%s223 + $0xe1] sm:$0xff] %vm214, %v2312
      %2345 = vst.msk [vmem:[%s223 + $0xf1] sm:$0xff] %vm214, %v2313
      %2346 = vst.msk [vmem:[%s223 + $0xf9] sm:$0xff] %vm214, %v2314
      %2347 = vst.msk [vmem:[%s223 + $0x109] sm:$0xff] %vm214, %v2315
      %2348 = vst.msk [vmem:[%s223 + $0x111] sm:$0xff] %vm214, %v2316
      %2349 = vst.msk [vmem:[%s223 + $0x121] sm:$0xff] %vm214, %v2317
      %2350 = vst.msk [vmem:[%s223 + $0x129] sm:$0xff] %vm214, %v2318
      %2351 = vst.msk [vmem:[%s223 + $0x139] sm:$0xff] %vm214, %v2319
      %2352 = vst.msk [vmem:[%s223 + $0x141] sm:$0xff] %vm214, %v2320
      %2353 = vst.msk [vmem:[%s223 + $0x151] sm:$0xff] %vm214, %v2321
      %2354 = vst.msk [vmem:[%s223 + $0x159] sm:$0xff] %vm214, %v2322
      %2355 = vst.msk [vmem:[%s223 + $0x169] sm:$0xff] %vm214, %v2323
      %2356 = vst.msk [vmem:[%s223 + $0x171] sm:$0xff] %vm214, %v2324
      %v2357 = vld [vmem:[#allocation3] sm:$0xff]
      %v2358 = vld [vmem:[#allocation3 + $0x8] sm:$0xff]
      %v2359 = vld [vmem:[#allocation3 + $0x18] sm:$0xff]
      %v2360 = vld [vmem:[#allocation3 + $0x20] sm:$0xff]
      %v2361 = vld [vmem:[#allocation3 + $0x30] sm:$0xff]
      %v2362 = vld [vmem:[#allocation3 + $0x38] sm:$0xff]
      %v2363 = vld [vmem:[#allocation3 + $0x48] sm:$0xff]
      %v2364 = vld [vmem:[#allocation3 + $0x50] sm:$0xff]
      %v2365 = vld [vmem:[#allocation3 + $0x60] sm:$0xff]
      %v2366 = vld [vmem:[#allocation3 + $0x68] sm:$0xff]
      %v2367 = vld [vmem:[#allocation3 + $0x78] sm:$0xff]
      %v2368 = vld [vmem:[#allocation3 + $0x80] sm:$0xff]
      %v2369 = vld [vmem:[#allocation3 + $0x90] sm:$0xff]
      %v2370 = vld [vmem:[#allocation3 + $0x98] sm:$0xff]
      %v2371 = vld [vmem:[#allocation3 + $0xa8] sm:$0xff]
      %v2372 = vld [vmem:[#allocation3 + $0xb0] sm:$0xff]
      %v2373 = vld [vmem:[#allocation3 + $0xc0] sm:$0xff]
      %v2374 = vld [vmem:[#allocation3 + $0xc8] sm:$0xff]
      %v2375 = vld [vmem:[#allocation3 + $0xd8] sm:$0xff]
      %v2376 = vld [vmem:[#allocation3 + $0xe0] sm:$0xff]
      %v2377 = vld [vmem:[#allocation3 + $0xf0] sm:$0xff]
      %v2378 = vld [vmem:[#allocation3 + $0xf8] sm:$0xff]
      %v2379 = vld [vmem:[#allocation3 + $0x108] sm:$0xff]
      %v2380 = vld [vmem:[#allocation3 + $0x110] sm:$0xff]
      %v2381 = vld [vmem:[#allocation3 + $0x120] sm:$0xff]
      %v2382 = vld [vmem:[#allocation3 + $0x128] sm:$0xff]
      %v2383 = vld [vmem:[#allocation3 + $0x138] sm:$0xff]
      %v2384 = vld [vmem:[#allocation3 + $0x140] sm:$0xff]
      %v2385 = vld [vmem:[#allocation3 + $0x150] sm:$0xff]
      %v2386 = vld [vmem:[#allocation3 + $0x158] sm:$0xff]
      %v2387 = vld [vmem:[#allocation3 + $0x168] sm:$0xff]
      %v2388 = vld [vmem:[#allocation3 + $0x170] sm:$0xff]
      %2389 = vst.msk [vmem:[#allocation5] sm:$0xff] %vm214, %v2357
      %2390 = vst.msk [vmem:[#allocation5 + $0x18] sm:$0xff] %vm214, %v2358
      %2391 = vst.msk [vmem:[#allocation5 + $0x30] sm:$0xff] %vm214, %v2359
      %2392 = vst.msk [vmem:[#allocation5 + $0x48] sm:$0xff] %vm214, %v2360
      %2393 = vst.msk [vmem:[#allocation5 + $0x60] sm:$0xff] %vm214, %v2361
      %2394 = vst.msk [vmem:[#allocation5 + $0x78] sm:$0xff] %vm214, %v2362
      %2395 = vst.msk [vmem:[#allocation5 + $0x90] sm:$0xff] %vm214, %v2363
      %2396 = vst.msk [vmem:[#allocation5 + $0xa8] sm:$0xff] %vm214, %v2364
      %2397 = vst.msk [vmem:[#allocation5 + $0xc0] sm:$0xff] %vm214, %v2365
      %2398 = vst.msk [vmem:[#allocation5 + $0xd8] sm:$0xff] %vm214, %v2366
      %2399 = vst.msk [vmem:[#allocation5 + $0xf0] sm:$0xff] %vm214, %v2367
      %2400 = vst.msk [vmem:[#allocation5 + $0x108] sm:$0xff] %vm214, %v2368
      %2401 = vst.msk [vmem:[#allocation5 + $0x120] sm:$0xff] %vm214, %v2369
      %2402 = vst.msk [vmem:[#allocation5 + $0x138] sm:$0xff] %vm214, %v2370
      %2403 = vst.msk [vmem:[#allocation5 + $0x150] sm:$0xff] %vm214, %v2371
      %2404 = vst.msk [vmem:[#allocation5 + $0x168] sm:$0xff] %vm214, %v2372
      %2405 = vst.msk [vmem:[#allocation5 + $0x180] sm:$0xff] %vm214, %v2373
      %2406 = vst.msk [vmem:[#allocation5 + $0x198] sm:$0xff] %vm214, %v2374
      %2407 = vst.msk [vmem:[#allocation5 + $0x1b0] sm:$0xff] %vm214, %v2375
      %2408 = vst.msk [vmem:[#allocation5 + $0x1c8] sm:$0xff] %vm214, %v2376
      %2409 = vst.msk [vmem:[#allocation5 + $0x1e0] sm:$0xff] %vm214, %v2377
      %2410 = vst.msk [vmem:[#allocation5 + $0x1f8] sm:$0xff] %vm214, %v2378
      %2411 = vst.msk [vmem:[#allocation5 + $0x210] sm:$0xff] %vm214, %v2379
      %2412 = vst.msk [vmem:[#allocation5 + $0x228] sm:$0xff] %vm214, %v2380
      %2413 = vst.msk [vmem:[#allocation5 + $0x240] sm:$0xff] %vm214, %v2381
      %2414 = vst.msk [vmem:[#allocation5 + $0x258] sm:$0xff] %vm214, %v2382
      %2415 = vst.msk [vmem:[#allocation5 + $0x270] sm:$0xff] %vm214, %v2383
      %2416 = vst.msk [vmem:[#allocation5 + $0x288] sm:$0xff] %vm214, %v2384
      %2417 = vst.msk [vmem:[#allocation5 + $0x2a0] sm:$0xff] %vm214, %v2385
      %2418 = vst.msk [vmem:[#allocation5 + $0x2b8] sm:$0xff] %vm214, %v2386
      %2419 = vst.msk [vmem:[#allocation5 + $0x2d0] sm:$0xff] %vm214, %v2387
      %2420 = vst.msk [vmem:[#allocation5 + $0x2e8] sm:$0xff] %vm214, %v2388
      %v2421 = vld [vmem:[#allocation3 + $0x1] sm:$0xff]
      %v2422 = vld [vmem:[#allocation3 + $0x9] sm:$0xff]
      %v2423 = vld [vmem:[#allocation3 + $0x19] sm:$0xff]
      %v2424 = vld [vmem:[#allocation3 + $0x21] sm:$0xff]
      %v2425 = vld [vmem:[#allocation3 + $0x31] sm:$0xff]
      %v2426 = vld [vmem:[#allocation3 + $0x39] sm:$0xff]
      %v2427 = vld [vmem:[#allocation3 + $0x49] sm:$0xff]
      %v2428 = vld [vmem:[#allocation3 + $0x51] sm:$0xff]
      %v2429 = vld [vmem:[#allocation3 + $0x61] sm:$0xff]
      %v2430 = vld [vmem:[#allocation3 + $0x69] sm:$0xff]
      %v2431 = vld [vmem:[#allocation3 + $0x79] sm:$0xff]
      %v2432 = vld [vmem:[#allocation3 + $0x81] sm:$0xff]
      %v2433 = vld [vmem:[#allocation3 + $0x91] sm:$0xff]
      %v2434 = vld [vmem:[#allocation3 + $0x99] sm:$0xff]
      %v2435 = vld [vmem:[#allocation3 + $0xa9] sm:$0xff]
      %v2436 = vld [vmem:[#allocation3 + $0xb1] sm:$0xff]
      %v2437 = vld [vmem:[#allocation3 + $0xc1] sm:$0xff]
      %v2438 = vld [vmem:[#allocation3 + $0xc9] sm:$0xff]
      %v2439 = vld [vmem:[#allocation3 + $0xd9] sm:$0xff]
      %v2440 = vld [vmem:[#allocation3 + $0xe1] sm:$0xff]
      %v2441 = vld [vmem:[#allocation3 + $0xf1] sm:$0xff]
      %v2442 = vld [vmem:[#allocation3 + $0xf9] sm:$0xff]
      %v2443 = vld [vmem:[#allocation3 + $0x109] sm:$0xff]
      %v2444 = vld [vmem:[#allocation3 + $0x111] sm:$0xff]
      %v2445 = vld [vmem:[#allocation3 + $0x121] sm:$0xff]
      %v2446 = vld [vmem:[#allocation3 + $0x129] sm:$0xff]
      %v2447 = vld [vmem:[#allocation3 + $0x139] sm:$0xff]
      %v2448 = vld [vmem:[#allocation3 + $0x141] sm:$0xff]
      %v2449 = vld [vmem:[#allocation3 + $0x151] sm:$0xff]
      %v2450 = vld [vmem:[#allocation3 + $0x159] sm:$0xff]
      %v2451 = vld [vmem:[#allocation3 + $0x169] sm:$0xff]
      %v2452 = vld [vmem:[#allocation3 + $0x171] sm:$0xff]
      %2485 = vrot.lane.b32.xlu0 %v2421, 32
      %v2486 = vpop.permute.xlu0 %2485
      %2487 = vrot.lane.b32.xlu0 %v2422, 32
      %v2488 = vpop.permute.xlu0 %2487
      %2489 = vrot.lane.b32.xlu0 %v2423, 32
      %v2490 = vpop.permute.xlu0 %2489
      %2491 = vrot.lane.b32.xlu0 %v2424, 32
      %v2492 = vpop.permute.xlu0 %2491
      %2493 = vrot.lane.b32.xlu0 %v2425, 32
      %v2494 = vpop.permute.xlu0 %2493
      %2495 = vrot.lane.b32.xlu0 %v2426, 32
      %v2496 = vpop.permute.xlu0 %2495
      %2497 = vrot.lane.b32.xlu0 %v2427, 32
      %v2498 = vpop.permute.xlu0 %2497
      %2499 = vrot.lane.b32.xlu0 %v2428, 32
      %v2500 = vpop.permute.xlu0 %2499
      %2501 = vrot.lane.b32.xlu0 %v2429, 32
      %v2502 = vpop.permute.xlu0 %2501
      %2503 = vrot.lane.b32.xlu0 %v2430, 32
      %v2504 = vpop.permute.xlu0 %2503
      %2505 = vrot.lane.b32.xlu0 %v2431, 32
      %v2506 = vpop.permute.xlu0 %2505
      %2507 = vrot.lane.b32.xlu0 %v2432, 32
      %v2508 = vpop.permute.xlu0 %2507
      %2509 = vrot.lane.b32.xlu0 %v2433, 32
      %v2510 = vpop.permute.xlu0 %2509
      %2511 = vrot.lane.b32.xlu0 %v2434, 32
      %v2512 = vpop.permute.xlu0 %2511
      %2513 = vrot.lane.b32.xlu0 %v2435, 32
      %v2514 = vpop.permute.xlu0 %2513
      %2515 = vrot.lane.b32.xlu0 %v2436, 32
      %v2516 = vpop.permute.xlu0 %2515
      %2517 = vrot.lane.b32.xlu0 %v2437, 32
      %v2518 = vpop.permute.xlu0 %2517
      %2519 = vrot.lane.b32.xlu0 %v2438, 32
      %v2520 = vpop.permute.xlu0 %2519
      %2521 = vrot.lane.b32.xlu0 %v2439, 32
      %v2522 = vpop.permute.xlu0 %2521
      %2523 = vrot.lane.b32.xlu0 %v2440, 32
      %v2524 = vpop.permute.xlu0 %2523
      %2525 = vrot.lane.b32.xlu0 %v2441, 32
      %v2526 = vpop.permute.xlu0 %2525
      %2527 = vrot.lane.b32.xlu0 %v2442, 32
      %v2528 = vpop.permute.xlu0 %2527
      %2529 = vrot.lane.b32.xlu0 %v2443, 32
      %v2530 = vpop.permute.xlu0 %2529
      %2531 = vrot.lane.b32.xlu0 %v2444, 32
      %v2532 = vpop.permute.xlu0 %2531
      %2533 = vrot.lane.b32.xlu0 %v2445, 32
      %v2534 = vpop.permute.xlu0 %2533
      %2535 = vrot.lane.b32.xlu0 %v2446, 32
      %v2536 = vpop.permute.xlu0 %2535
      %2537 = vrot.lane.b32.xlu0 %v2447, 32
      %v2538 = vpop.permute.xlu0 %2537
      %2539 = vrot.lane.b32.xlu0 %v2448, 32
      %v2540 = vpop.permute.xlu0 %2539
      %2541 = vrot.lane.b32.xlu0 %v2449, 32
      %v2542 = vpop.permute.xlu0 %2541
      %2543 = vrot.lane.b32.xlu0 %v2450, 32
      %v2544 = vpop.permute.xlu0 %2543
      %2545 = vrot.lane.b32.xlu0 %v2451, 32
      %v2546 = vpop.permute.xlu0 %2545
      %2547 = vrot.lane.b32.xlu0 %v2452, 32
      %v2548 = vpop.permute.xlu0 %2547
      %vm2581 = vcmask 523520
      %2582 = vst.msk [vmem:[#allocation5] sm:$0xff] %vm2581, %v2486
      %2583 = vst.msk [vmem:[#allocation5 + $0x18] sm:$0xff] %vm2581, %v2488
      %2584 = vst.msk [vmem:[#allocation5 + $0x30] sm:$0xff] %vm2581, %v2490
      %2585 = vst.msk [vmem:[#allocation5 + $0x48] sm:$0xff] %vm2581, %v2492
      %2586 = vst.msk [vmem:[#allocation5 + $0x60] sm:$0xff] %vm2581, %v2494
      %2587 = vst.msk [vmem:[#allocation5 + $0x78] sm:$0xff] %vm2581, %v2496
      %2588 = vst.msk [vmem:[#allocation5 + $0x90] sm:$0xff] %vm2581, %v2498
      %2589 = vst.msk [vmem:[#allocation5 + $0xa8] sm:$0xff] %vm2581, %v2500
      %2590 = vst.msk [vmem:[#allocation5 + $0xc0] sm:$0xff] %vm2581, %v2502
      %2591 = vst.msk [vmem:[#allocation5 + $0xd8] sm:$0xff] %vm2581, %v2504
      %2592 = vst.msk [vmem:[#allocation5 + $0xf0] sm:$0xff] %vm2581, %v2506
      %2593 = vst.msk [vmem:[#allocation5 + $0x108] sm:$0xff] %vm2581, %v2508
      %2594 = vst.msk [vmem:[#allocation5 + $0x120] sm:$0xff] %vm2581, %v2510
      %2595 = vst.msk [vmem:[#allocation5 + $0x138] sm:$0xff] %vm2581, %v2512
      %2596 = vst.msk [vmem:[#allocation5 + $0x150] sm:$0xff] %vm2581, %v2514
      %2597 = vst.msk [vmem:[#allocation5 + $0x168] sm:$0xff] %vm2581, %v2516
      %2598 = vst.msk [vmem:[#allocation5 + $0x180] sm:$0xff] %vm2581, %v2518
      %2599 = vst.msk [vmem:[#allocation5 + $0x198] sm:$0xff] %vm2581, %v2520
      %2600 = vst.msk [vmem:[#allocation5 + $0x1b0] sm:$0xff] %vm2581, %v2522
      %2601 = vst.msk [vmem:[#allocation5 + $0x1c8] sm:$0xff] %vm2581, %v2524
      %2602 = vst.msk [vmem:[#allocation5 + $0x1e0] sm:$0xff] %vm2581, %v2526
      %2603 = vst.msk [vmem:[#allocation5 + $0x1f8] sm:$0xff] %vm2581, %v2528
      %2604 = vst.msk [vmem:[#allocation5 + $0x210] sm:$0xff] %vm2581, %v2530
      %2605 = vst.msk [vmem:[#allocation5 + $0x228] sm:$0xff] %vm2581, %v2532
      %2606 = vst.msk [vmem:[#allocation5 + $0x240] sm:$0xff] %vm2581, %v2534
      %2607 = vst.msk [vmem:[#allocation5 + $0x258] sm:$0xff] %vm2581, %v2536
      %2608 = vst.msk [vmem:[#allocation5 + $0x270] sm:$0xff] %vm2581, %v2538
      %2609 = vst.msk [vmem:[#allocation5 + $0x288] sm:$0xff] %vm2581, %v2540
      %2610 = vst.msk [vmem:[#allocation5 + $0x2a0] sm:$0xff] %vm2581, %v2542
      %2611 = vst.msk [vmem:[#allocation5 + $0x2b8] sm:$0xff] %vm2581, %v2544
      %2612 = vst.msk [vmem:[#allocation5 + $0x2d0] sm:$0xff] %vm2581, %v2546
      %2613 = vst.msk [vmem:[#allocation5 + $0x2e8] sm:$0xff] %vm2581, %v2548
      %v2614 = vld [vmem:[#allocation3 + $0x2] sm:$0xff]
      %v2615 = vld [vmem:[#allocation3 + $0xa] sm:$0xff]
      %v2616 = vld [vmem:[#allocation3 + $0x1a] sm:$0xff]
      %v2617 = vld [vmem:[#allocation3 + $0x22] sm:$0xff]
      %v2618 = vld [vmem:[#allocation3 + $0x32] sm:$0xff]
      %v2619 = vld [vmem:[#allocation3 + $0x3a] sm:$0xff]
      %v2620 = vld [vmem:[#allocation3 + $0x4a] sm:$0xff]
      %v2621 = vld [vmem:[#allocation3 + $0x52] sm:$0xff]
      %v2622 = vld [vmem:[#allocation3 + $0x62] sm:$0xff]
      %v2623 = vld [vmem:[#allocation3 + $0x6a] sm:$0xff]
      %v2624 = vld [vmem:[#allocation3 + $0x7a] sm:$0xff]
      %v2625 = vld [vmem:[#allocation3 + $0x82] sm:$0xff]
      %v2626 = vld [vmem:[#allocation3 + $0x92] sm:$0xff]
      %v2627 = vld [vmem:[#allocation3 + $0x9a] sm:$0xff]
      %v2628 = vld [vmem:[#allocation3 + $0xaa] sm:$0xff]
      %v2629 = vld [vmem:[#allocation3 + $0xb2] sm:$0xff]
      %v2630 = vld [vmem:[#allocation3 + $0xc2] sm:$0xff]
      %v2631 = vld [vmem:[#allocation3 + $0xca] sm:$0xff]
      %v2632 = vld [vmem:[#allocation3 + $0xda] sm:$0xff]
      %v2633 = vld [vmem:[#allocation3 + $0xe2] sm:$0xff]
      %v2634 = vld [vmem:[#allocation3 + $0xf2] sm:$0xff]
      %v2635 = vld [vmem:[#allocation3 + $0xfa] sm:$0xff]
      %v2636 = vld [vmem:[#allocation3 + $0x10a] sm:$0xff]
      %v2637 = vld [vmem:[#allocation3 + $0x112] sm:$0xff]
      %v2638 = vld [vmem:[#allocation3 + $0x122] sm:$0xff]
      %v2639 = vld [vmem:[#allocation3 + $0x12a] sm:$0xff]
      %v2640 = vld [vmem:[#allocation3 + $0x13a] sm:$0xff]
      %v2641 = vld [vmem:[#allocation3 + $0x142] sm:$0xff]
      %v2642 = vld [vmem:[#allocation3 + $0x152] sm:$0xff]
      %v2643 = vld [vmem:[#allocation3 + $0x15a] sm:$0xff]
      %v2644 = vld [vmem:[#allocation3 + $0x16a] sm:$0xff]
      %v2645 = vld [vmem:[#allocation3 + $0x172] sm:$0xff]
      %2678 = vrot.lane.b32.xlu0 %v2614, 64
      %v2679 = vpop.permute.xlu0 %2678
      %2680 = vrot.lane.b32.xlu0 %v2615, 64
      %v2681 = vpop.permute.xlu0 %2680
      %2682 = vrot.lane.b32.xlu0 %v2616, 64
      %v2683 = vpop.permute.xlu0 %2682
      %2684 = vrot.lane.b32.xlu0 %v2617, 64
      %v2685 = vpop.permute.xlu0 %2684
      %2686 = vrot.lane.b32.xlu0 %v2618, 64
      %v2687 = vpop.permute.xlu0 %2686
      %2688 = vrot.lane.b32.xlu0 %v2619, 64
      %v2689 = vpop.permute.xlu0 %2688
      %2690 = vrot.lane.b32.xlu0 %v2620, 64
      %v2691 = vpop.permute.xlu0 %2690
      %2692 = vrot.lane.b32.xlu0 %v2621, 64
      %v2693 = vpop.permute.xlu0 %2692
      %2694 = vrot.lane.b32.xlu0 %v2622, 64
      %v2695 = vpop.permute.xlu0 %2694
      %2696 = vrot.lane.b32.xlu0 %v2623, 64
      %v2697 = vpop.permute.xlu0 %2696
      %2698 = vrot.lane.b32.xlu0 %v2624, 64
      %v2699 = vpop.permute.xlu0 %2698
      %2700 = vrot.lane.b32.xlu0 %v2625, 64
      %v2701 = vpop.permute.xlu0 %2700
      %2702 = vrot.lane.b32.xlu0 %v2626, 64
      %v2703 = vpop.permute.xlu0 %2702
      %2704 = vrot.lane.b32.xlu0 %v2627, 64
      %v2705 = vpop.permute.xlu0 %2704
      %2706 = vrot.lane.b32.xlu0 %v2628, 64
      %v2707 = vpop.permute.xlu0 %2706
      %2708 = vrot.lane.b32.xlu0 %v2629, 64
      %v2709 = vpop.permute.xlu0 %2708
      %2710 = vrot.lane.b32.xlu0 %v2630, 64
      %v2711 = vpop.permute.xlu0 %2710
      %2712 = vrot.lane.b32.xlu0 %v2631, 64
      %v2713 = vpop.permute.xlu0 %2712
      %2714 = vrot.lane.b32.xlu0 %v2632, 64
      %v2715 = vpop.permute.xlu0 %2714
      %2716 = vrot.lane.b32.xlu0 %v2633, 64
      %v2717 = vpop.permute.xlu0 %2716
      %2718 = vrot.lane.b32.xlu0 %v2634, 64
      %v2719 = vpop.permute.xlu0 %2718
      %2720 = vrot.lane.b32.xlu0 %v2635, 64
      %v2721 = vpop.permute.xlu0 %2720
      %2722 = vrot.lane.b32.xlu0 %v2636, 64
      %v2723 = vpop.permute.xlu0 %2722
      %2724 = vrot.lane.b32.xlu0 %v2637, 64
      %v2725 = vpop.permute.xlu0 %2724
      %2726 = vrot.lane.b32.xlu0 %v2638, 64
      %v2727 = vpop.permute.xlu0 %2726
      %2728 = vrot.lane.b32.xlu0 %v2639, 64
      %v2729 = vpop.permute.xlu0 %2728
      %2730 = vrot.lane.b32.xlu0 %v2640, 64
      %v2731 = vpop.permute.xlu0 %2730
      %2732 = vrot.lane.b32.xlu0 %v2641, 64
      %v2733 = vpop.permute.xlu0 %2732
      %2734 = vrot.lane.b32.xlu0 %v2642, 64
      %v2735 = vpop.permute.xlu0 %2734
      %2736 = vrot.lane.b32.xlu0 %v2643, 64
      %v2737 = vpop.permute.xlu0 %2736
      %2738 = vrot.lane.b32.xlu0 %v2644, 64
      %v2739 = vpop.permute.xlu0 %2738
      %2740 = vrot.lane.b32.xlu0 %v2645, 64
      %v2741 = vpop.permute.xlu0 %2740
      %vm2774 = vcmask 785920
      %2775 = vst.msk [vmem:[#allocation5] sm:$0xff] %vm2774, %v2679
      %2776 = vst.msk [vmem:[#allocation5 + $0x18] sm:$0xff] %vm2774, %v2681
      %2777 = vst.msk [vmem:[#allocation5 + $0x30] sm:$0xff] %vm2774, %v2683
      %2778 = vst.msk [vmem:[#allocation5 + $0x48] sm:$0xff] %vm2774, %v2685
      %2779 = vst.msk [vmem:[#allocation5 + $0x60] sm:$0xff] %vm2774, %v2687
      %2780 = vst.msk [vmem:[#allocation5 + $0x78] sm:$0xff] %vm2774, %v2689
      %2781 = vst.msk [vmem:[#allocation5 + $0x90] sm:$0xff] %vm2774, %v2691
      %2782 = vst.msk [vmem:[#allocation5 + $0xa8] sm:$0xff] %vm2774, %v2693
      %2783 = vst.msk [vmem:[#allocation5 + $0xc0] sm:$0xff] %vm2774, %v2695
      %2784 = vst.msk [vmem:[#allocation5 + $0xd8] sm:$0xff] %vm2774, %v2697
      %2785 = vst.msk [vmem:[#allocation5 + $0xf0] sm:$0xff] %vm2774, %v2699
      %2786 = vst.msk [vmem:[#allocation5 + $0x108] sm:$0xff] %vm2774, %v2701
      %2787 = vst.msk [vmem:[#allocation5 + $0x120] sm:$0xff] %vm2774, %v2703
      %2788 = vst.msk [vmem:[#allocation5 + $0x138] sm:$0xff] %vm2774, %v2705
      %2789 = vst.msk [vmem:[#allocation5 + $0x150] sm:$0xff] %vm2774, %v2707
      %2790 = vst.msk [vmem:[#allocation5 + $0x168] sm:$0xff] %vm2774, %v2709
      %2791 = vst.msk [vmem:[#allocation5 + $0x180] sm:$0xff] %vm2774, %v2711
      %2792 = vst.msk [vmem:[#allocation5 + $0x198] sm:$0xff] %vm2774, %v2713
      %2793 = vst.msk [vmem:[#allocation5 + $0x1b0] sm:$0xff] %vm2774, %v2715
      %2794 = vst.msk [vmem:[#allocation5 + $0x1c8] sm:$0xff] %vm2774, %v2717
      %2795 = vst.msk [vmem:[#allocation5 + $0x1e0] sm:$0xff] %vm2774, %v2719
      %2796 = vst.msk [vmem:[#allocation5 + $0x1f8] sm:$0xff] %vm2774, %v2721
      %2797 = vst.msk [vmem:[#allocation5 + $0x210] sm:$0xff] %vm2774, %v2723
      %2798 = vst.msk [vmem:[#allocation5 + $0x228] sm:$0xff] %vm2774, %v2725
      %2799 = vst.msk [vmem:[#allocation5 + $0x240] sm:$0xff] %vm2774, %v2727
      %2800 = vst.msk [vmem:[#allocation5 + $0x258] sm:$0xff] %vm2774, %v2729
      %2801 = vst.msk [vmem:[#allocation5 + $0x270] sm:$0xff] %vm2774, %v2731
      %2802 = vst.msk [vmem:[#allocation5 + $0x288] sm:$0xff] %vm2774, %v2733
      %2803 = vst.msk [vmem:[#allocation5 + $0x2a0] sm:$0xff] %vm2774, %v2735
      %2804 = vst.msk [vmem:[#allocation5 + $0x2b8] sm:$0xff] %vm2774, %v2737
      %2805 = vst.msk [vmem:[#allocation5 + $0x2d0] sm:$0xff] %vm2774, %v2739
      %2806 = vst.msk [vmem:[#allocation5 + $0x2e8] sm:$0xff] %vm2774, %v2741
      %v2807 = vld [vmem:[%s223] sm:$0xff]
      %v2808 = vld [vmem:[%s223 + $0x8] sm:$0xff]
      %v2809 = vld [vmem:[%s223 + $0x18] sm:$0xff]
      %v2810 = vld [vmem:[%s223 + $0x20] sm:$0xff]
      %v2811 = vld [vmem:[%s223 + $0x30] sm:$0xff]
      %v2812 = vld [vmem:[%s223 + $0x38] sm:$0xff]
      %v2813 = vld [vmem:[%s223 + $0x48] sm:$0xff]
      %v2814 = vld [vmem:[%s223 + $0x50] sm:$0xff]
      %v2815 = vld [vmem:[%s223 + $0x60] sm:$0xff]
      %v2816 = vld [vmem:[%s223 + $0x68] sm:$0xff]
      %v2817 = vld [vmem:[%s223 + $0x78] sm:$0xff]
      %v2818 = vld [vmem:[%s223 + $0x80] sm:$0xff]
      %v2819 = vld [vmem:[%s223 + $0x90] sm:$0xff]
      %v2820 = vld [vmem:[%s223 + $0x98] sm:$0xff]
      %v2821 = vld [vmem:[%s223 + $0xa8] sm:$0xff]
      %v2822 = vld [vmem:[%s223 + $0xb0] sm:$0xff]
      %v2823 = vld [vmem:[%s223 + $0xc0] sm:$0xff]
      %v2824 = vld [vmem:[%s223 + $0xc8] sm:$0xff]
      %v2825 = vld [vmem:[%s223 + $0xd8] sm:$0xff]
      %v2826 = vld [vmem:[%s223 + $0xe0] sm:$0xff]
      %v2827 = vld [vmem:[%s223 + $0xf0] sm:$0xff]
      %v2828 = vld [vmem:[%s223 + $0xf8] sm:$0xff]
      %v2829 = vld [vmem:[%s223 + $0x108] sm:$0xff]
      %v2830 = vld [vmem:[%s223 + $0x110] sm:$0xff]
      %v2831 = vld [vmem:[%s223 + $0x120] sm:$0xff]
      %v2832 = vld [vmem:[%s223 + $0x128] sm:$0xff]
      %v2833 = vld [vmem:[%s223 + $0x138] sm:$0xff]
      %v2834 = vld [vmem:[%s223 + $0x140] sm:$0xff]
      %v2835 = vld [vmem:[%s223 + $0x150] sm:$0xff]
      %v2836 = vld [vmem:[%s223 + $0x158] sm:$0xff]
      %v2837 = vld [vmem:[%s223 + $0x168] sm:$0xff]
      %v2838 = vld [vmem:[%s223 + $0x170] sm:$0xff]
      %2871 = vrot.lane.b32.xlu0 %v2807, 96
      %v2872 = vpop.permute.xlu0 %2871
      %2873 = vrot.lane.b32.xlu0 %v2808, 96
      %v2874 = vpop.permute.xlu0 %2873
      %2875 = vrot.lane.b32.xlu0 %v2809, 96
      %v2876 = vpop.permute.xlu0 %2875
      %2877 = vrot.lane.b32.xlu0 %v2810, 96
      %v2878 = vpop.permute.xlu0 %2877
      %2879 = vrot.lane.b32.xlu0 %v2811, 96
      %v2880 = vpop.permute.xlu0 %2879
      %2881 = vrot.lane.b32.xlu0 %v2812, 96
      %v2882 = vpop.permute.xlu0 %2881
      %2883 = vrot.lane.b32.xlu0 %v2813, 96
      %v2884 = vpop.permute.xlu0 %2883
      %2885 = vrot.lane.b32.xlu0 %v2814, 96
      %v2886 = vpop.permute.xlu0 %2885
      %2887 = vrot.lane.b32.xlu0 %v2815, 96
      %v2888 = vpop.permute.xlu0 %2887
      %2889 = vrot.lane.b32.xlu0 %v2816, 96
      %v2890 = vpop.permute.xlu0 %2889
      %2891 = vrot.lane.b32.xlu0 %v2817, 96
      %v2892 = vpop.permute.xlu0 %2891
      %2893 = vrot.lane.b32.xlu0 %v2818, 96
      %v2894 = vpop.permute.xlu0 %2893
      %2895 = vrot.lane.b32.xlu0 %v2819, 96
      %v2896 = vpop.permute.xlu0 %2895
      %2897 = vrot.lane.b32.xlu0 %v2820, 96
      %v2898 = vpop.permute.xlu0 %2897
      %2899 = vrot.lane.b32.xlu0 %v2821, 96
      %v2900 = vpop.permute.xlu0 %2899
      %2901 = vrot.lane.b32.xlu0 %v2822, 96
      %v2902 = vpop.permute.xlu0 %2901
      %2903 = vrot.lane.b32.xlu0 %v2823, 96
      %v2904 = vpop.permute.xlu0 %2903
      %2905 = vrot.lane.b32.xlu0 %v2824, 96
      %v2906 = vpop.permute.xlu0 %2905
      %2907 = vrot.lane.b32.xlu0 %v2825, 96
      %v2908 = vpop.permute.xlu0 %2907
      %2909 = vrot.lane.b32.xlu0 %v2826, 96
      %v2910 = vpop.permute.xlu0 %2909
      %2911 = vrot.lane.b32.xlu0 %v2827, 96
      %v2912 = vpop.permute.xlu0 %2911
      %2913 = vrot.lane.b32.xlu0 %v2828, 96
      %v2914 = vpop.permute.xlu0 %2913
      %2915 = vrot.lane.b32.xlu0 %v2829, 96
      %v2916 = vpop.permute.xlu0 %2915
      %2917 = vrot.lane.b32.xlu0 %v2830, 96
      %v2918 = vpop.permute.xlu0 %2917
      %2919 = vrot.lane.b32.xlu0 %v2831, 96
      %v2920 = vpop.permute.xlu0 %2919
      %2921 = vrot.lane.b32.xlu0 %v2832, 96
      %v2922 = vpop.permute.xlu0 %2921
      %2923 = vrot.lane.b32.xlu0 %v2833, 96
      %v2924 = vpop.permute.xlu0 %2923
      %2925 = vrot.lane.b32.xlu0 %v2834, 96
      %v2926 = vpop.permute.xlu0 %2925
      %2927 = vrot.lane.b32.xlu0 %v2835, 96
      %v2928 = vpop.permute.xlu0 %2927
      %2929 = vrot.lane.b32.xlu0 %v2836, 96
      %v2930 = vpop.permute.xlu0 %2929
      %2931 = vrot.lane.b32.xlu0 %v2837, 96
      %v2932 = vpop.permute.xlu0 %2931
      %2933 = vrot.lane.b32.xlu0 %v2838, 96
      %v2934 = vpop.permute.xlu0 %2933
      %vm2967 = vcmask 1048320
      %2968 = vst.msk [vmem:[#allocation5] sm:$0xff] %vm2967, %v2872
      %2969 = vst.msk [vmem:[#allocation5 + $0x18] sm:$0xff] %vm2967, %v2874
      %2970 = vst.msk [vmem:[#allocation5 + $0x30] sm:$0xff] %vm2967, %v2876
      %2971 = vst.msk [vmem:[#allocation5 + $0x48] sm:$0xff] %vm2967, %v2878
      %2972 = vst.msk [vmem:[#allocation5 + $0x60] sm:$0xff] %vm2967, %v2880
      %2973 = vst.msk [vmem:[#allocation5 + $0x78] sm:$0xff] %vm2967, %v2882
      %2974 = vst.msk [vmem:[#allocation5 + $0x90] sm:$0xff] %vm2967, %v2884
      %2975 = vst.msk [vmem:[#allocation5 + $0xa8] sm:$0xff] %vm2967, %v2886
      %2976 = vst.msk [vmem:[#allocation5 + $0xc0] sm:$0xff] %vm2967, %v2888
      %2977 = vst.msk [vmem:[#allocation5 + $0xd8] sm:$0xff] %vm2967, %v2890
      %2978 = vst.msk [vmem:[#allocation5 + $0xf0] sm:$0xff] %vm2967, %v2892
      %2979 = vst.msk [vmem:[#allocation5 + $0x108] sm:$0xff] %vm2967, %v2894
      %2980 = vst.msk [vmem:[#allocation5 + $0x120] sm:$0xff] %vm2967, %v2896
      %2981 = vst.msk [vmem:[#allocation5 + $0x138] sm:$0xff] %vm2967, %v2898
      %2982 = vst.msk [vmem:[#allocation5 + $0x150] sm:$0xff] %vm2967, %v2900
      %2983 = vst.msk [vmem:[#allocation5 + $0x168] sm:$0xff] %vm2967, %v2902
      %2984 = vst.msk [vmem:[#allocation5 + $0x180] sm:$0xff] %vm2967, %v2904
      %2985 = vst.msk [vmem:[#allocation5 + $0x198] sm:$0xff] %vm2967, %v2906
      %2986 = vst.msk [vmem:[#allocation5 + $0x1b0] sm:$0xff] %vm2967, %v2908
      %2987 = vst.msk [vmem:[#allocation5 + $0x1c8] sm:$0xff] %vm2967, %v2910
      %2988 = vst.msk [vmem:[#allocation5 + $0x1e0] sm:$0xff] %vm2967, %v2912
      %2989 = vst.msk [vmem:[#allocation5 + $0x1f8] sm:$0xff] %vm2967, %v2914
      %2990 = vst.msk [vmem:[#allocation5 + $0x210] sm:$0xff] %vm2967, %v2916
      %2991 = vst.msk [vmem:[#allocation5 + $0x228] sm:$0xff] %vm2967, %v2918
      %2992 = vst.msk [vmem:[#allocation5 + $0x240] sm:$0xff] %vm2967, %v2920
      %2993 = vst.msk [vmem:[#allocation5 + $0x258] sm:$0xff] %vm2967, %v2922
      %2994 = vst.msk [vmem:[#allocation5 + $0x270] sm:$0xff] %vm2967, %v2924
      %2995 = vst.msk [vmem:[#allocation5 + $0x288] sm:$0xff] %vm2967, %v2926
      %2996 = vst.msk [vmem:[#allocation5 + $0x2a0] sm:$0xff] %vm2967, %v2928
      %2997 = vst.msk [vmem:[#allocation5 + $0x2b8] sm:$0xff] %vm2967, %v2930
      %2998 = vst.msk [vmem:[#allocation5 + $0x2d0] sm:$0xff] %vm2967, %v2932
      %2999 = vst.msk [vmem:[#allocation5 + $0x2e8] sm:$0xff] %vm2967, %v2934
      %v3000 = vld [vmem:[%s223 + $0x1] sm:$0xff]
      %v3001 = vld [vmem:[%s223 + $0x9] sm:$0xff]
      %v3002 = vld [vmem:[%s223 + $0x19] sm:$0xff]
      %v3003 = vld [vmem:[%s223 + $0x21] sm:$0xff]
      %v3004 = vld [vmem:[%s223 + $0x31] sm:$0xff]
      %v3005 = vld [vmem:[%s223 + $0x39] sm:$0xff]
      %v3006 = vld [vmem:[%s223 + $0x49] sm:$0xff]
      %v3007 = vld [vmem:[%s223 + $0x51] sm:$0xff]
      %v3008 = vld [vmem:[%s223 + $0x61] sm:$0xff]
      %v3009 = vld [vmem:[%s223 + $0x69] sm:$0xff]
      %v3010 = vld [vmem:[%s223 + $0x79] sm:$0xff]
      %v3011 = vld [vmem:[%s223 + $0x81] sm:$0xff]
      %v3012 = vld [vmem:[%s223 + $0x91] sm:$0xff]
      %v3013 = vld [vmem:[%s223 + $0x99] sm:$0xff]
      %v3014 = vld [vmem:[%s223 + $0xa9] sm:$0xff]
      %v3015 = vld [vmem:[%s223 + $0xb1] sm:$0xff]
      %v3016 = vld [vmem:[%s223 + $0xc1] sm:$0xff]
      %v3017 = vld [vmem:[%s223 + $0xc9] sm:$0xff]
      %v3018 = vld [vmem:[%s223 + $0xd9] sm:$0xff]
      %v3019 = vld [vmem:[%s223 + $0xe1] sm:$0xff]
      %v3020 = vld [vmem:[%s223 + $0xf1] sm:$0xff]
      %v3021 = vld [vmem:[%s223 + $0xf9] sm:$0xff]
      %v3022 = vld [vmem:[%s223 + $0x109] sm:$0xff]
      %v3023 = vld [vmem:[%s223 + $0x111] sm:$0xff]
      %v3024 = vld [vmem:[%s223 + $0x121] sm:$0xff]
      %v3025 = vld [vmem:[%s223 + $0x129] sm:$0xff]
      %v3026 = vld [vmem:[%s223 + $0x139] sm:$0xff]
      %v3027 = vld [vmem:[%s223 + $0x141] sm:$0xff]
      %v3028 = vld [vmem:[%s223 + $0x151] sm:$0xff]
      %v3029 = vld [vmem:[%s223 + $0x159] sm:$0xff]
      %v3030 = vld [vmem:[%s223 + $0x169] sm:$0xff]
      %v3031 = vld [vmem:[%s223 + $0x171] sm:$0xff]
      %3032 = vst.msk [vmem:[#allocation5 + $0x8] sm:$0xff] %vm214, %v3000
      %3033 = vst.msk [vmem:[#allocation5 + $0x20] sm:$0xff] %vm214, %v3001
      %3034 = vst.msk [vmem:[#allocation5 + $0x38] sm:$0xff] %vm214, %v3002
      %3035 = vst.msk [vmem:[#allocation5 + $0x50] sm:$0xff] %vm214, %v3003
      %3036 = vst.msk [vmem:[#allocation5 + $0x68] sm:$0xff] %vm214, %v3004
      %3037 = vst.msk [vmem:[#allocation5 + $0x80] sm:$0xff] %vm214, %v3005
      %3038 = vst.msk [vmem:[#allocation5 + $0x98] sm:$0xff] %vm214, %v3006
      %3039 = vst.msk [vmem:[#allocation5 + $0xb0] sm:$0xff] %vm214, %v3007
      %3040 = vst.msk [vmem:[#allocation5 + $0xc8] sm:$0xff] %vm214, %v3008
      %3041 = vst.msk [vmem:[#allocation5 + $0xe0] sm:$0xff] %vm214, %v3009
      %3042 = vst.msk [vmem:[#allocation5 + $0xf8] sm:$0xff] %vm214, %v3010
      %3043 = vst.msk [vmem:[#allocation5 + $0x110] sm:$0xff] %vm214, %v3011
      %3044 = vst.msk [vmem:[#allocation5 + $0x128] sm:$0xff] %vm214, %v3012
      %3045 = vst.msk [vmem:[#allocation5 + $0x140] sm:$0xff] %vm214, %v3013
      %3046 = vst.msk [vmem:[#allocation5 + $0x158] sm:$0xff] %vm214, %v3014
      %3047 = vst.msk [vmem:[#allocation5 + $0x170] sm:$0xff] %vm214, %v3015
      %3048 = vst.msk [vmem:[#allocation5 + $0x188] sm:$0xff] %vm214, %v3016
      %3049 = vst.msk [vmem:[#allocation5 + $0x1a0] sm:$0xff] %vm214, %v3017
      %3050 = vst.msk [vmem:[#allocation5 + $0x1b8] sm:$0xff] %vm214, %v3018
      %3051 = vst.msk [vmem:[#allocation5 + $0x1d0] sm:$0xff] %vm214, %v3019
      %3052 = vst.msk [vmem:[#allocation5 + $0x1e8] sm:$0xff] %vm214, %v3020
      %3053 = vst.msk [vmem:[#allocation5 + $0x200] sm:$0xff] %vm214, %v3021
      %3054 = vst.msk [vmem:[#allocation5 + $0x218] sm:$0xff] %vm214, %v3022
      %3055 = vst.msk [vmem:[#allocation5 + $0x230] sm:$0xff] %vm214, %v3023
      %3056 = vst.msk [vmem:[#allocation5 + $0x248] sm:$0xff] %vm214, %v3024
      %3057 = vst.msk [vmem:[#allocation5 + $0x260] sm:$0xff] %vm214, %v3025
      %3058 = vst.msk [vmem:[#allocation5 + $0x278] sm:$0xff] %vm214, %v3026
      %3059 = vst.msk [vmem:[#allocation5 + $0x290] sm:$0xff] %vm214, %v3027
      %3060 = vst.msk [vmem:[#allocation5 + $0x2a8] sm:$0xff] %vm214, %v3028
      %3061 = vst.msk [vmem:[#allocation5 + $0x2c0] sm:$0xff] %vm214, %v3029
      %3062 = vst.msk [vmem:[#allocation5 + $0x2d8] sm:$0xff] %vm214, %v3030
      %3063 = vst.msk [vmem:[#allocation5 + $0x2f0] sm:$0xff] %vm214, %v3031
      %v3064 = vld [vmem:[%s223 + $0x2] sm:$0xff]
      %v3065 = vld [vmem:[%s223 + $0xa] sm:$0xff]
      %v3066 = vld [vmem:[%s223 + $0x1a] sm:$0xff]
      %v3067 = vld [vmem:[%s223 + $0x22] sm:$0xff]
      %v3068 = vld [vmem:[%s223 + $0x32] sm:$0xff]
      %v3069 = vld [vmem:[%s223 + $0x3a] sm:$0xff]
      %v3070 = vld [vmem:[%s223 + $0x4a] sm:$0xff]
      %v3071 = vld [vmem:[%s223 + $0x52] sm:$0xff]
      %v3072 = vld [vmem:[%s223 + $0x62] sm:$0xff]
      %v3073 = vld [vmem:[%s223 + $0x6a] sm:$0xff]
      %v3074 = vld [vmem:[%s223 + $0x7a] sm:$0xff]
      %v3075 = vld [vmem:[%s223 + $0x82] sm:$0xff]
      %v3076 = vld [vmem:[%s223 + $0x92] sm:$0xff]
      %v3077 = vld [vmem:[%s223 + $0x9a] sm:$0xff]
      %v3078 = vld [vmem:[%s223 + $0xaa] sm:$0xff]
      %v3079 = vld [vmem:[%s223 + $0xb2] sm:$0xff]
      %v3080 = vld [vmem:[%s223 + $0xc2] sm:$0xff]
      %v3081 = vld [vmem:[%s223 + $0xca] sm:$0xff]
      %v3082 = vld [vmem:[%s223 + $0xda] sm:$0xff]
      %v3083 = vld [vmem:[%s223 + $0xe2] sm:$0xff]
      %v3084 = vld [vmem:[%s223 + $0xf2] sm:$0xff]
      %v3085 = vld [vmem:[%s223 + $0xfa] sm:$0xff]
      %v3086 = vld [vmem:[%s223 + $0x10a] sm:$0xff]
      %v3087 = vld [vmem:[%s223 + $0x112] sm:$0xff]
      %v3088 = vld [vmem:[%s223 + $0x122] sm:$0xff]
      %v3089 = vld [vmem:[%s223 + $0x12a] sm:$0xff]
      %v3090 = vld [vmem:[%s223 + $0x13a] sm:$0xff]
      %v3091 = vld [vmem:[%s223 + $0x142] sm:$0xff]
      %v3092 = vld [vmem:[%s223 + $0x152] sm:$0xff]
      %v3093 = vld [vmem:[%s223 + $0x15a] sm:$0xff]
      %v3094 = vld [vmem:[%s223 + $0x16a] sm:$0xff]
      %v3095 = vld [vmem:[%s223 + $0x172] sm:$0xff]
      %3128 = vrot.lane.b32.xlu0 %v3064, 32
      %v3129 = vpop.permute.xlu0 %3128
      %3130 = vrot.lane.b32.xlu0 %v3065, 32
      %v3131 = vpop.permute.xlu0 %3130
      %3132 = vrot.lane.b32.xlu0 %v3066, 32
      %v3133 = vpop.permute.xlu0 %3132
      %3134 = vrot.lane.b32.xlu0 %v3067, 32
      %v3135 = vpop.permute.xlu0 %3134
      %3136 = vrot.lane.b32.xlu0 %v3068, 32
      %v3137 = vpop.permute.xlu0 %3136
      %3138 = vrot.lane.b32.xlu0 %v3069, 32
      %v3139 = vpop.permute.xlu0 %3138
      %3140 = vrot.lane.b32.xlu0 %v3070, 32
      %v3141 = vpop.permute.xlu0 %3140
      %3142 = vrot.lane.b32.xlu0 %v3071, 32
      %v3143 = vpop.permute.xlu0 %3142
      %3144 = vrot.lane.b32.xlu0 %v3072, 32
      %v3145 = vpop.permute.xlu0 %3144
      %3146 = vrot.lane.b32.xlu0 %v3073, 32
      %v3147 = vpop.permute.xlu0 %3146
      %3148 = vrot.lane.b32.xlu0 %v3074, 32
      %v3149 = vpop.permute.xlu0 %3148
      %3150 = vrot.lane.b32.xlu0 %v3075, 32
      %v3151 = vpop.permute.xlu0 %3150
      %3152 = vrot.lane.b32.xlu0 %v3076, 32
      %v3153 = vpop.permute.xlu0 %3152
      %3154 = vrot.lane.b32.xlu0 %v3077, 32
      %v3155 = vpop.permute.xlu0 %3154
      %3156 = vrot.lane.b32.xlu0 %v3078, 32
      %v3157 = vpop.permute.xlu0 %3156
      %3158 = vrot.lane.b32.xlu0 %v3079, 32
      %v3159 = vpop.permute.xlu0 %3158
      %3160 = vrot.lane.b32.xlu0 %v3080, 32
      %v3161 = vpop.permute.xlu0 %3160
      %3162 = vrot.lane.b32.xlu0 %v3081, 32
      %v3163 = vpop.permute.xlu0 %3162
      %3164 = vrot.lane.b32.xlu0 %v3082, 32
      %v3165 = vpop.permute.xlu0 %3164
      %3166 = vrot.lane.b32.xlu0 %v3083, 32
      %v3167 = vpop.permute.xlu0 %3166
      %3168 = vrot.lane.b32.xlu0 %v3084, 32
      %v3169 = vpop.permute.xlu0 %3168
      %3170 = vrot.lane.b32.xlu0 %v3085, 32
      %v3171 = vpop.permute.xlu0 %3170
      %3172 = vrot.lane.b32.xlu0 %v3086, 32
      %v3173 = vpop.permute.xlu0 %3172
      %3174 = vrot.lane.b32.xlu0 %v3087, 32
      %v3175 = vpop.permute.xlu0 %3174
      %3176 = vrot.lane.b32.xlu0 %v3088, 32
      %v3177 = vpop.permute.xlu0 %3176
      %3178 = vrot.lane.b32.xlu0 %v3089, 32
      %v3179 = vpop.permute.xlu0 %3178
      %3180 = vrot.lane.b32.xlu0 %v3090, 32
      %v3181 = vpop.permute.xlu0 %3180
      %3182 = vrot.lane.b32.xlu0 %v3091, 32
      %v3183 = vpop.permute.xlu0 %3182
      %3184 = vrot.lane.b32.xlu0 %v3092, 32
      %v3185 = vpop.permute.xlu0 %3184
      %3186 = vrot.lane.b32.xlu0 %v3093, 32
      %v3187 = vpop.permute.xlu0 %3186
      %3188 = vrot.lane.b32.xlu0 %v3094, 32
      %v3189 = vpop.permute.xlu0 %3188
      %3190 = vrot.lane.b32.xlu0 %v3095, 32
      %v3191 = vpop.permute.xlu0 %3190
      %3224 = vst.msk [vmem:[#allocation5 + $0x8] sm:$0xff] %vm2581, %v3129
      %3225 = vst.msk [vmem:[#allocation5 + $0x20] sm:$0xff] %vm2581, %v3131
      %3226 = vst.msk [vmem:[#allocation5 + $0x38] sm:$0xff] %vm2581, %v3133
      %3227 = vst.msk [vmem:[#allocation5 + $0x50] sm:$0xff] %vm2581, %v3135
      %3228 = vst.msk [vmem:[#allocation5 + $0x68] sm:$0xff] %vm2581, %v3137
      %3229 = vst.msk [vmem:[#allocation5 + $0x80] sm:$0xff] %vm2581, %v3139
      %3230 = vst.msk [vmem:[#allocation5 + $0x98] sm:$0xff] %vm2581, %v3141
      %3231 = vst.msk [vmem:[#allocation5 + $0xb0] sm:$0xff] %vm2581, %v3143
      %3232 = vst.msk [vmem:[#allocation5 + $0xc8] sm:$0xff] %vm2581, %v3145
      %3233 = vst.msk [vmem:[#allocation5 + $0xe0] sm:$0xff] %vm2581, %v3147
      %3234 = vst.msk [vmem:[#allocation5 + $0xf8] sm:$0xff] %vm2581, %v3149
      %3235 = vst.msk [vmem:[#allocation5 + $0x110] sm:$0xff] %vm2581, %v3151
      %3236 = vst.msk [vmem:[#allocation5 + $0x128] sm:$0xff] %vm2581, %v3153
      %3237 = vst.msk [vmem:[#allocation5 + $0x140] sm:$0xff] %vm2581, %v3155
      %3238 = vst.msk [vmem:[#allocation5 + $0x158] sm:$0xff] %vm2581, %v3157
      %3239 = vst.msk [vmem:[#allocation5 + $0x170] sm:$0xff] %vm2581, %v3159
      %3240 = vst.msk [vmem:[#allocation5 + $0x188] sm:$0xff] %vm2581, %v3161
      %3241 = vst.msk [vmem:[#allocation5 + $0x1a0] sm:$0xff] %vm2581, %v3163
      %3242 = vst.msk [vmem:[#allocation5 + $0x1b8] sm:$0xff] %vm2581, %v3165
      %3243 = vst.msk [vmem:[#allocation5 + $0x1d0] sm:$0xff] %vm2581, %v3167
      %3244 = vst.msk [vmem:[#allocation5 + $0x1e8] sm:$0xff] %vm2581, %v3169
      %3245 = vst.msk [vmem:[#allocation5 + $0x200] sm:$0xff] %vm2581, %v3171
      %3246 = vst.msk [vmem:[#allocation5 + $0x218] sm:$0xff] %vm2581, %v3173
      %3247 = vst.msk [vmem:[#allocation5 + $0x230] sm:$0xff] %vm2581, %v3175
      %3248 = vst.msk [vmem:[#allocation5 + $0x248] sm:$0xff] %vm2581, %v3177
      %3249 = vst.msk [vmem:[#allocation5 + $0x260] sm:$0xff] %vm2581, %v3179
      %3250 = vst.msk [vmem:[#allocation5 + $0x278] sm:$0xff] %vm2581, %v3181
      %3251 = vst.msk [vmem:[#allocation5 + $0x290] sm:$0xff] %vm2581, %v3183
      %3252 = vst.msk [vmem:[#allocation5 + $0x2a8] sm:$0xff] %vm2581, %v3185
      %3253 = vst.msk [vmem:[#allocation5 + $0x2c0] sm:$0xff] %vm2581, %v3187
      %3254 = vst.msk [vmem:[#allocation5 + $0x2d8] sm:$0xff] %vm2581, %v3189
      %3255 = vst.msk [vmem:[#allocation5 + $0x2f0] sm:$0xff] %vm2581, %v3191
      %s3256 = scalar_lea.vmem [#allocation3], 48
      %v3257 = vld [vmem:[%s3256] sm:$0xff]
      %v3258 = vld [vmem:[%s3256 + $0x8] sm:$0xff]
      %v3259 = vld [vmem:[%s3256 + $0x18] sm:$0xff]
      %v3260 = vld [vmem:[%s3256 + $0x20] sm:$0xff]
      %v3261 = vld [vmem:[%s3256 + $0x30] sm:$0xff]
      %v3262 = vld [vmem:[%s3256 + $0x38] sm:$0xff]
      %v3263 = vld [vmem:[%s3256 + $0x48] sm:$0xff]
      %v3264 = vld [vmem:[%s3256 + $0x50] sm:$0xff]
      %v3265 = vld [vmem:[%s3256 + $0x60] sm:$0xff]
      %v3266 = vld [vmem:[%s3256 + $0x68] sm:$0xff]
      %v3267 = vld [vmem:[%s3256 + $0x78] sm:$0xff]
      %v3268 = vld [vmem:[%s3256 + $0x80] sm:$0xff]
      %v3269 = vld [vmem:[%s3256 + $0x90] sm:$0xff]
      %v3270 = vld [vmem:[%s3256 + $0x98] sm:$0xff]
      %v3271 = vld [vmem:[%s3256 + $0xa8] sm:$0xff]
      %v3272 = vld [vmem:[%s3256 + $0xb0] sm:$0xff]
      %v3273 = vld [vmem:[%s3256 + $0xc0] sm:$0xff]
      %v3274 = vld [vmem:[%s3256 + $0xc8] sm:$0xff]
      %v3275 = vld [vmem:[%s3256 + $0xd8] sm:$0xff]
      %v3276 = vld [vmem:[%s3256 + $0xe0] sm:$0xff]
      %v3277 = vld [vmem:[%s3256 + $0xf0] sm:$0xff]
      %v3278 = vld [vmem:[%s3256 + $0xf8] sm:$0xff]
      %v3279 = vld [vmem:[%s3256 + $0x108] sm:$0xff]
      %v3280 = vld [vmem:[%s3256 + $0x110] sm:$0xff]
      %v3281 = vld [vmem:[%s3256 + $0x120] sm:$0xff]
      %v3282 = vld [vmem:[%s3256 + $0x128] sm:$0xff]
      %v3283 = vld [vmem:[%s3256 + $0x138] sm:$0xff]
      %v3284 = vld [vmem:[%s3256 + $0x140] sm:$0xff]
      %v3285 = vld [vmem:[%s3256 + $0x150] sm:$0xff]
      %v3286 = vld [vmem:[%s3256 + $0x158] sm:$0xff]
      %v3287 = vld [vmem:[%s3256 + $0x168] sm:$0xff]
      %v3288 = vld [vmem:[%s3256 + $0x170] sm:$0xff]
      %3321 = vrot.lane.b32.xlu0 %v3257, 64
      %v3322 = vpop.permute.xlu0 %3321
      %3323 = vrot.lane.b32.xlu0 %v3258, 64
      %v3324 = vpop.permute.xlu0 %3323
      %3325 = vrot.lane.b32.xlu0 %v3259, 64
      %v3326 = vpop.permute.xlu0 %3325
      %3327 = vrot.lane.b32.xlu0 %v3260, 64
      %v3328 = vpop.permute.xlu0 %3327
      %3329 = vrot.lane.b32.xlu0 %v3261, 64
      %v3330 = vpop.permute.xlu0 %3329
      %3331 = vrot.lane.b32.xlu0 %v3262, 64
      %v3332 = vpop.permute.xlu0 %3331
      %3333 = vrot.lane.b32.xlu0 %v3263, 64
      %v3334 = vpop.permute.xlu0 %3333
      %3335 = vrot.lane.b32.xlu0 %v3264, 64
      %v3336 = vpop.permute.xlu0 %3335
      %3337 = vrot.lane.b32.xlu0 %v3265, 64
      %v3338 = vpop.permute.xlu0 %3337
      %3339 = vrot.lane.b32.xlu0 %v3266, 64
      %v3340 = vpop.permute.xlu0 %3339
      %3341 = vrot.lane.b32.xlu0 %v3267, 64
      %v3342 = vpop.permute.xlu0 %3341
      %3343 = vrot.lane.b32.xlu0 %v3268, 64
      %v3344 = vpop.permute.xlu0 %3343
      %3345 = vrot.lane.b32.xlu0 %v3269, 64
      %v3346 = vpop.permute.xlu0 %3345
      %3347 = vrot.lane.b32.xlu0 %v3270, 64
      %v3348 = vpop.permute.xlu0 %3347
      %3349 = vrot.lane.b32.xlu0 %v3271, 64
      %v3350 = vpop.permute.xlu0 %3349
      %3351 = vrot.lane.b32.xlu0 %v3272, 64
      %v3352 = vpop.permute.xlu0 %3351
      %3353 = vrot.lane.b32.xlu0 %v3273, 64
      %v3354 = vpop.permute.xlu0 %3353
      %3355 = vrot.lane.b32.xlu0 %v3274, 64
      %v3356 = vpop.permute.xlu0 %3355
      %3357 = vrot.lane.b32.xlu0 %v3275, 64
      %v3358 = vpop.permute.xlu0 %3357
      %3359 = vrot.lane.b32.xlu0 %v3276, 64
      %v3360 = vpop.permute.xlu0 %3359
      %3361 = vrot.lane.b32.xlu0 %v3277, 64
      %v3362 = vpop.permute.xlu0 %3361
      %3363 = vrot.lane.b32.xlu0 %v3278, 64
      %v3364 = vpop.permute.xlu0 %3363
      %3365 = vrot.lane.b32.xlu0 %v3279, 64
      %v3366 = vpop.permute.xlu0 %3365
      %3367 = vrot.lane.b32.xlu0 %v3280, 64
      %v3368 = vpop.permute.xlu0 %3367
      %3369 = vrot.lane.b32.xlu0 %v3281, 64
      %v3370 = vpop.permute.xlu0 %3369
      %3371 = vrot.lane.b32.xlu0 %v3282, 64
      %v3372 = vpop.permute.xlu0 %3371
      %3373 = vrot.lane.b32.xlu0 %v3283, 64
      %v3374 = vpop.permute.xlu0 %3373
      %3375 = vrot.lane.b32.xlu0 %v3284, 64
      %v3376 = vpop.permute.xlu0 %3375
      %3377 = vrot.lane.b32.xlu0 %v3285, 64
      %v3378 = vpop.permute.xlu0 %3377
      %3379 = vrot.lane.b32.xlu0 %v3286, 64
      %v3380 = vpop.permute.xlu0 %3379
      %3381 = vrot.lane.b32.xlu0 %v3287, 64
      %v3382 = vpop.permute.xlu0 %3381
      %3383 = vrot.lane.b32.xlu0 %v3288, 64
      %v3384 = vpop.permute.xlu0 %3383
      %3417 = vst.msk [vmem:[#allocation5 + $0x8] sm:$0xff] %vm2774, %v3322
      %3418 = vst.msk [vmem:[#allocation5 + $0x20] sm:$0xff] %vm2774, %v3324
      %3419 = vst.msk [vmem:[#allocation5 + $0x38] sm:$0xff] %vm2774, %v3326
      %3420 = vst.msk [vmem:[#allocation5 + $0x50] sm:$0xff] %vm2774, %v3328
      %3421 = vst.msk [vmem:[#allocation5 + $0x68] sm:$0xff] %vm2774, %v3330
      %3422 = vst.msk [vmem:[#allocation5 + $0x80] sm:$0xff] %vm2774, %v3332
      %3423 = vst.msk [vmem:[#allocation5 + $0x98] sm:$0xff] %vm2774, %v3334
      %3424 = vst.msk [vmem:[#allocation5 + $0xb0] sm:$0xff] %vm2774, %v3336
      %3425 = vst.msk [vmem:[#allocation5 + $0xc8] sm:$0xff] %vm2774, %v3338
      %3426 = vst.msk [vmem:[#allocation5 + $0xe0] sm:$0xff] %vm2774, %v3340
      %3427 = vst.msk [vmem:[#allocation5 + $0xf8] sm:$0xff] %vm2774, %v3342
      %3428 = vst.msk [vmem:[#allocation5 + $0x110] sm:$0xff] %vm2774, %v3344
      %3429 = vst.msk [vmem:[#allocation5 + $0x128] sm:$0xff] %vm2774, %v3346
      %3430 = vst.msk [vmem:[#allocation5 + $0x140] sm:$0xff] %vm2774, %v3348
      %3431 = vst.msk [vmem:[#allocation5 + $0x158] sm:$0xff] %vm2774, %v3350
      %3432 = vst.msk [vmem:[#allocation5 + $0x170] sm:$0xff] %vm2774, %v3352
      %3433 = vst.msk [vmem:[#allocation5 + $0x188] sm:$0xff] %vm2774, %v3354
      %3434 = vst.msk [vmem:[#allocation5 + $0x1a0] sm:$0xff] %vm2774, %v3356
      %3435 = vst.msk [vmem:[#allocation5 + $0x1b8] sm:$0xff] %vm2774, %v3358
      %3436 = vst.msk [vmem:[#allocation5 + $0x1d0] sm:$0xff] %vm2774, %v3360
      %3437 = vst.msk [vmem:[#allocation5 + $0x1e8] sm:$0xff] %vm2774, %v3362
      %3438 = vst.msk [vmem:[#allocation5 + $0x200] sm:$0xff] %vm2774, %v3364
      %3439 = vst.msk [vmem:[#allocation5 + $0x218] sm:$0xff] %vm2774, %v3366
      %3440 = vst.msk [vmem:[#allocation5 + $0x230] sm:$0xff] %vm2774, %v3368
      %3441 = vst.msk [vmem:[#allocation5 + $0x248] sm:$0xff] %vm2774, %v3370
      %3442 = vst.msk [vmem:[#allocation5 + $0x260] sm:$0xff] %vm2774, %v3372
      %3443 = vst.msk [vmem:[#allocation5 + $0x278] sm:$0xff] %vm2774, %v3374
      %3444 = vst.msk [vmem:[#allocation5 + $0x290] sm:$0xff] %vm2774, %v3376
      %3445 = vst.msk [vmem:[#allocation5 + $0x2a8] sm:$0xff] %vm2774, %v3378
      %3446 = vst.msk [vmem:[#allocation5 + $0x2c0] sm:$0xff] %vm2774, %v3380
      %3447 = vst.msk [vmem:[#allocation5 + $0x2d8] sm:$0xff] %vm2774, %v3382
      %3448 = vst.msk [vmem:[#allocation5 + $0x2f0] sm:$0xff] %vm2774, %v3384
      %v3449 = vld [vmem:[%s3256 + $0x1] sm:$0xff]
      %v3450 = vld [vmem:[%s3256 + $0x9] sm:$0xff]
      %v3451 = vld [vmem:[%s3256 + $0x19] sm:$0xff]
      %v3452 = vld [vmem:[%s3256 + $0x21] sm:$0xff]
      %v3453 = vld [vmem:[%s3256 + $0x31] sm:$0xff]
      %v3454 = vld [vmem:[%s3256 + $0x39] sm:$0xff]
      %v3455 = vld [vmem:[%s3256 + $0x49] sm:$0xff]
      %v3456 = vld [vmem:[%s3256 + $0x51] sm:$0xff]
      %v3457 = vld [vmem:[%s3256 + $0x61] sm:$0xff]
      %v3458 = vld [vmem:[%s3256 + $0x69] sm:$0xff]
      %v3459 = vld [vmem:[%s3256 + $0x79] sm:$0xff]
      %v3460 = vld [vmem:[%s3256 + $0x81] sm:$0xff]
      %v3461 = vld [vmem:[%s3256 + $0x91] sm:$0xff]
      %v3462 = vld [vmem:[%s3256 + $0x99] sm:$0xff]
      %v3463 = vld [vmem:[%s3256 + $0xa9] sm:$0xff]
      %v3464 = vld [vmem:[%s3256 + $0xb1] sm:$0xff]
      %v3465 = vld [vmem:[%s3256 + $0xc1] sm:$0xff]
      %v3466 = vld [vmem:[%s3256 + $0xc9] sm:$0xff]
      %v3467 = vld [vmem:[%s3256 + $0xd9] sm:$0xff]
      %v3468 = vld [vmem:[%s3256 + $0xe1] sm:$0xff]
      %v3469 = vld [vmem:[%s3256 + $0xf1] sm:$0xff]
      %v3470 = vld [vmem:[%s3256 + $0xf9] sm:$0xff]
      %v3471 = vld [vmem:[%s3256 + $0x109] sm:$0xff]
      %v3472 = vld [vmem:[%s3256 + $0x111] sm:$0xff]
      %v3473 = vld [vmem:[%s3256 + $0x121] sm:$0xff]
      %v3474 = vld [vmem:[%s3256 + $0x129] sm:$0xff]
      %v3475 = vld [vmem:[%s3256 + $0x139] sm:$0xff]
      %v3476 = vld [vmem:[%s3256 + $0x141] sm:$0xff]
      %v3477 = vld [vmem:[%s3256 + $0x151] sm:$0xff]
      %v3478 = vld [vmem:[%s3256 + $0x159] sm:$0xff]
      %v3479 = vld [vmem:[%s3256 + $0x169] sm:$0xff]
      %v3480 = vld [vmem:[%s3256 + $0x171] sm:$0xff]
      %3513 = vrot.lane.b32.xlu0 %v3449, 96
      %v3514 = vpop.permute.xlu0 %3513
      %3515 = vrot.lane.b32.xlu0 %v3450, 96
      %v3516 = vpop.permute.xlu0 %3515
      %3517 = vrot.lane.b32.xlu0 %v3451, 96
      %v3518 = vpop.permute.xlu0 %3517
      %3519 = vrot.lane.b32.xlu0 %v3452, 96
      %v3520 = vpop.permute.xlu0 %3519
      %3521 = vrot.lane.b32.xlu0 %v3453, 96
      %v3522 = vpop.permute.xlu0 %3521
      %3523 = vrot.lane.b32.xlu0 %v3454, 96
      %v3524 = vpop.permute.xlu0 %3523
      %3525 = vrot.lane.b32.xlu0 %v3455, 96
      %v3526 = vpop.permute.xlu0 %3525
      %3527 = vrot.lane.b32.xlu0 %v3456, 96
      %v3528 = vpop.permute.xlu0 %3527
      %3529 = vrot.lane.b32.xlu0 %v3457, 96
      %v3530 = vpop.permute.xlu0 %3529
      %3531 = vrot.lane.b32.xlu0 %v3458, 96
      %v3532 = vpop.permute.xlu0 %3531
      %3533 = vrot.lane.b32.xlu0 %v3459, 96
      %v3534 = vpop.permute.xlu0 %3533
      %3535 = vrot.lane.b32.xlu0 %v3460, 96
      %v3536 = vpop.permute.xlu0 %3535
      %3537 = vrot.lane.b32.xlu0 %v3461, 96
      %v3538 = vpop.permute.xlu0 %3537
      %3539 = vrot.lane.b32.xlu0 %v3462, 96
      %v3540 = vpop.permute.xlu0 %3539
      %3541 = vrot.lane.b32.xlu0 %v3463, 96
      %v3542 = vpop.permute.xlu0 %3541
      %3543 = vrot.lane.b32.xlu0 %v3464, 96
      %v3544 = vpop.permute.xlu0 %3543
      %3545 = vrot.lane.b32.xlu0 %v3465, 96
      %v3546 = vpop.permute.xlu0 %3545
      %3547 = vrot.lane.b32.xlu0 %v3466, 96
      %v3548 = vpop.permute.xlu0 %3547
      %3549 = vrot.lane.b32.xlu0 %v3467, 96
      %v3550 = vpop.permute.xlu0 %3549
      %3551 = vrot.lane.b32.xlu0 %v3468, 96
      %v3552 = vpop.permute.xlu0 %3551
      %3553 = vrot.lane.b32.xlu0 %v3469, 96
      %v3554 = vpop.permute.xlu0 %3553
      %3555 = vrot.lane.b32.xlu0 %v3470, 96
      %v3556 = vpop.permute.xlu0 %3555
      %3557 = vrot.lane.b32.xlu0 %v3471, 96
      %v3558 = vpop.permute.xlu0 %3557
      %3559 = vrot.lane.b32.xlu0 %v3472, 96
      %v3560 = vpop.permute.xlu0 %3559
      %3561 = vrot.lane.b32.xlu0 %v3473, 96
      %v3562 = vpop.permute.xlu0 %3561
      %3563 = vrot.lane.b32.xlu0 %v3474, 96
      %v3564 = vpop.permute.xlu0 %3563
      %3565 = vrot.lane.b32.xlu0 %v3475, 96
      %v3566 = vpop.permute.xlu0 %3565
      %3567 = vrot.lane.b32.xlu0 %v3476, 96
      %v3568 = vpop.permute.xlu0 %3567
      %3569 = vrot.lane.b32.xlu0 %v3477, 96
      %v3570 = vpop.permute.xlu0 %3569
      %3571 = vrot.lane.b32.xlu0 %v3478, 96
      %v3572 = vpop.permute.xlu0 %3571
      %3573 = vrot.lane.b32.xlu0 %v3479, 96
      %v3574 = vpop.permute.xlu0 %3573
      %3575 = vrot.lane.b32.xlu0 %v3480, 96
      %v3576 = vpop.permute.xlu0 %3575
      %3609 = vst.msk [vmem:[#allocation5 + $0x8] sm:$0xff] %vm2967, %v3514
      %3610 = vst.msk [vmem:[#allocation5 + $0x20] sm:$0xff] %vm2967, %v3516
      %3611 = vst.msk [vmem:[#allocation5 + $0x38] sm:$0xff] %vm2967, %v3518
      %3612 = vst.msk [vmem:[#allocation5 + $0x50] sm:$0xff] %vm2967, %v3520
      %3613 = vst.msk [vmem:[#allocation5 + $0x68] sm:$0xff] %vm2967, %v3522
      %3614 = vst.msk [vmem:[#allocation5 + $0x80] sm:$0xff] %vm2967, %v3524
      %3615 = vst.msk [vmem:[#allocation5 + $0x98] sm:$0xff] %vm2967, %v3526
      %3616 = vst.msk [vmem:[#allocation5 + $0xb0] sm:$0xff] %vm2967, %v3528
      %3617 = vst.msk [vmem:[#allocation5 + $0xc8] sm:$0xff] %vm2967, %v3530
      %3618 = vst.msk [vmem:[#allocation5 + $0xe0] sm:$0xff] %vm2967, %v3532
      %3619 = vst.msk [vmem:[#allocation5 + $0xf8] sm:$0xff] %vm2967, %v3534
      %3620 = vst.msk [vmem:[#allocation5 + $0x110] sm:$0xff] %vm2967, %v3536
      %3621 = vst.msk [vmem:[#allocation5 + $0x128] sm:$0xff] %vm2967, %v3538
      %3622 = vst.msk [vmem:[#allocation5 + $0x140] sm:$0xff] %vm2967, %v3540
      %3623 = vst.msk [vmem:[#allocation5 + $0x158] sm:$0xff] %vm2967, %v3542
      %3624 = vst.msk [vmem:[#allocation5 + $0x170] sm:$0xff] %vm2967, %v3544
      %3625 = vst.msk [vmem:[#allocation5 + $0x188] sm:$0xff] %vm2967, %v3546
      %3626 = vst.msk [vmem:[#allocation5 + $0x1a0] sm:$0xff] %vm2967, %v3548
      %3627 = vst.msk [vmem:[#allocation5 + $0x1b8] sm:$0xff] %vm2967, %v3550
      %3628 = vst.msk [vmem:[#allocation5 + $0x1d0] sm:$0xff] %vm2967, %v3552
      %3629 = vst.msk [vmem:[#allocation5 + $0x1e8] sm:$0xff] %vm2967, %v3554
      %3630 = vst.msk [vmem:[#allocation5 + $0x200] sm:$0xff] %vm2967, %v3556
      %3631 = vst.msk [vmem:[#allocation5 + $0x218] sm:$0xff] %vm2967, %v3558
      %3632 = vst.msk [vmem:[#allocation5 + $0x230] sm:$0xff] %vm2967, %v3560
      %3633 = vst.msk [vmem:[#allocation5 + $0x248] sm:$0xff] %vm2967, %v3562
      %3634 = vst.msk [vmem:[#allocation5 + $0x260] sm:$0xff] %vm2967, %v3564
      %3635 = vst.msk [vmem:[#allocation5 + $0x278] sm:$0xff] %vm2967, %v3566
      %3636 = vst.msk [vmem:[#allocation5 + $0x290] sm:$0xff] %vm2967, %v3568
      %3637 = vst.msk [vmem:[#allocation5 + $0x2a8] sm:$0xff] %vm2967, %v3570
      %3638 = vst.msk [vmem:[#allocation5 + $0x2c0] sm:$0xff] %vm2967, %v3572
      %3639 = vst.msk [vmem:[#allocation5 + $0x2d8] sm:$0xff] %vm2967, %v3574
      %3640 = vst.msk [vmem:[#allocation5 + $0x2f0] sm:$0xff] %vm2967, %v3576
      %v3641 = vld [vmem:[%s3256 + $0x2] sm:$0xff]
      %v3642 = vld [vmem:[%s3256 + $0xa] sm:$0xff]
      %v3643 = vld [vmem:[%s3256 + $0x1a] sm:$0xff]
      %v3644 = vld [vmem:[%s3256 + $0x22] sm:$0xff]
      %v3645 = vld [vmem:[%s3256 + $0x32] sm:$0xff]
      %v3646 = vld [vmem:[%s3256 + $0x3a] sm:$0xff]
      %v3647 = vld [vmem:[%s3256 + $0x4a] sm:$0xff]
      %v3648 = vld [vmem:[%s3256 + $0x52] sm:$0xff]
      %v3649 = vld [vmem:[%s3256 + $0x62] sm:$0xff]
      %v3650 = vld [vmem:[%s3256 + $0x6a] sm:$0xff]
      %v3651 = vld [vmem:[%s3256 + $0x7a] sm:$0xff]
      %v3652 = vld [vmem:[%s3256 + $0x82] sm:$0xff]
      %v3653 = vld [vmem:[%s3256 + $0x92] sm:$0xff]
      %v3654 = vld [vmem:[%s3256 + $0x9a] sm:$0xff]
      %v3655 = vld [vmem:[%s3256 + $0xaa] sm:$0xff]
      %v3656 = vld [vmem:[%s3256 + $0xb2] sm:$0xff]
      %v3657 = vld [vmem:[%s3256 + $0xc2] sm:$0xff]
      %v3658 = vld [vmem:[%s3256 + $0xca] sm:$0xff]
      %v3659 = vld [vmem:[%s3256 + $0xda] sm:$0xff]
      %v3660 = vld [vmem:[%s3256 + $0xe2] sm:$0xff]
      %v3661 = vld [vmem:[%s3256 + $0xf2] sm:$0xff]
      %v3662 = vld [vmem:[%s3256 + $0xfa] sm:$0xff]
      %v3663 = vld [vmem:[%s3256 + $0x10a] sm:$0xff]
      %v3664 = vld [vmem:[%s3256 + $0x112] sm:$0xff]
      %v3665 = vld [vmem:[%s3256 + $0x122] sm:$0xff]
      %v3666 = vld [vmem:[%s3256 + $0x12a] sm:$0xff]
      %v3667 = vld [vmem:[%s3256 + $0x13a] sm:$0xff]
      %v3668 = vld [vmem:[%s3256 + $0x142] sm:$0xff]
      %v3669 = vld [vmem:[%s3256 + $0x152] sm:$0xff]
      %v3670 = vld [vmem:[%s3256 + $0x15a] sm:$0xff]
      %v3671 = vld [vmem:[%s3256 + $0x16a] sm:$0xff]
      %v3672 = vld [vmem:[%s3256 + $0x172] sm:$0xff]
      %3673 = vst.msk [vmem:[#allocation5 + $0x10] sm:$0xff] %vm214, %v3641
      %3674 = vst.msk [vmem:[#allocation5 + $0x28] sm:$0xff] %vm214, %v3642
      %3675 = vst.msk [vmem:[#allocation5 + $0x40] sm:$0xff] %vm214, %v3643
      %3676 = vst.msk [vmem:[#allocation5 + $0x58] sm:$0xff] %vm214, %v3644
      %3677 = vst.msk [vmem:[#allocation5 + $0x70] sm:$0xff] %vm214, %v3645
      %3678 = vst.msk [vmem:[#allocation5 + $0x88] sm:$0xff] %vm214, %v3646
      %3679 = vst.msk [vmem:[#allocation5 + $0xa0] sm:$0xff] %vm214, %v3647
      %3680 = vst.msk [vmem:[#allocation5 + $0xb8] sm:$0xff] %vm214, %v3648
      %3681 = vst.msk [vmem:[#allocation5 + $0xd0] sm:$0xff] %vm214, %v3649
      %3682 = vst.msk [vmem:[#allocation5 + $0xe8] sm:$0xff] %vm214, %v3650
      %3683 = vst.msk [vmem:[#allocation5 + $0x100] sm:$0xff] %vm214, %v3651
      %3684 = vst.msk [vmem:[#allocation5 + $0x118] sm:$0xff] %vm214, %v3652
      %3685 = vst.msk [vmem:[#allocation5 + $0x130] sm:$0xff] %vm214, %v3653
      %3686 = vst.msk [vmem:[#allocation5 + $0x148] sm:$0xff] %vm214, %v3654
      %3687 = vst.msk [vmem:[#allocation5 + $0x160] sm:$0xff] %vm214, %v3655
      %3688 = vst.msk [vmem:[#allocation5 + $0x178] sm:$0xff] %vm214, %v3656
      %3689 = vst.msk [vmem:[#allocation5 + $0x190] sm:$0xff] %vm214, %v3657
      %3690 = vst.msk [vmem:[#allocation5 + $0x1a8] sm:$0xff] %vm214, %v3658
      %3691 = vst.msk [vmem:[#allocation5 + $0x1c0] sm:$0xff] %vm214, %v3659
      %3692 = vst.msk [vmem:[#allocation5 + $0x1d8] sm:$0xff] %vm214, %v3660
      %3693 = vst.msk [vmem:[#allocation5 + $0x1f0] sm:$0xff] %vm214, %v3661
      %3694 = vst.msk [vmem:[#allocation5 + $0x208] sm:$0xff] %vm214, %v3662
      %3695 = vst.msk [vmem:[#allocation5 + $0x220] sm:$0xff] %vm214, %v3663
      %3696 = vst.msk [vmem:[#allocation5 + $0x238] sm:$0xff] %vm214, %v3664
      %3697 = vst.msk [vmem:[#allocation5 + $0x250] sm:$0xff] %vm214, %v3665
      %3698 = vst.msk [vmem:[#allocation5 + $0x268] sm:$0xff] %vm214, %v3666
      %3699 = vst.msk [vmem:[#allocation5 + $0x280] sm:$0xff] %vm214, %v3667
      %3700 = vst.msk [vmem:[#allocation5 + $0x298] sm:$0xff] %vm214, %v3668
      %3701 = vst.msk [vmem:[#allocation5 + $0x2b0] sm:$0xff] %vm214, %v3669
      %3702 = vst.msk [vmem:[#allocation5 + $0x2c8] sm:$0xff] %vm214, %v3670
      %3703 = vst.msk [vmem:[#allocation5 + $0x2e0] sm:$0xff] %vm214, %v3671
      %3704 = vst.msk [vmem:[#allocation5 + $0x2f8] sm:$0xff] %vm214, %v3672
      %v3705 = vld [vmem:[#allocation5] sm:$0xff]
      %v3706 = vld [vmem:[#allocation5 + $0x8] sm:$0xff]
      %v3707 = vld [vmem:[#allocation5 + $0x10] sm:$0xff]
      %v3708 = vld [vmem:[#allocation5 + $0x18] sm:$0xff]
      %v3709 = vld [vmem:[#allocation5 + $0x20] sm:$0xff]
      %v3710 = vld [vmem:[#allocation5 + $0x28] sm:$0xff]
      %v3711 = vld [vmem:[#allocation5 + $0x30] sm:$0xff]
      %v3712 = vld [vmem:[#allocation5 + $0x38] sm:$0xff]
      %v3713 = vld [vmem:[#allocation5 + $0x40] sm:$0xff]
      %v3714 = vld [vmem:[#allocation5 + $0x48] sm:$0xff]
      %v3715 = vld [vmem:[#allocation5 + $0x50] sm:$0xff]
      %v3716 = vld [vmem:[#allocation5 + $0x58] sm:$0xff]
      %v3717 = vld [vmem:[#allocation5 + $0x60] sm:$0xff]
      %v3718 = vld [vmem:[#allocation5 + $0x68] sm:$0xff]
      %v3719 = vld [vmem:[#allocation5 + $0x70] sm:$0xff]
      %v3720 = vld [vmem:[#allocation5 + $0x78] sm:$0xff]
      %v3721 = vld [vmem:[#allocation5 + $0x80] sm:$0xff]
      %v3722 = vld [vmem:[#allocation5 + $0x88] sm:$0xff]
      %v3723 = vld [vmem:[#allocation5 + $0x90] sm:$0xff]
      %v3724 = vld [vmem:[#allocation5 + $0x98] sm:$0xff]
      %v3725 = vld [vmem:[#allocation5 + $0xa0] sm:$0xff]
      %v3726 = vld [vmem:[#allocation5 + $0xa8] sm:$0xff]
      %v3727 = vld [vmem:[#allocation5 + $0xb0] sm:$0xff]
      %v3728 = vld [vmem:[#allocation5 + $0xb8] sm:$0xff]
      %v3729 = vld [vmem:[#allocation5 + $0xc0] sm:$0xff]
      %v3730 = vld [vmem:[#allocation5 + $0xc8] sm:$0xff]
      %v3731 = vld [vmem:[#allocation5 + $0xd0] sm:$0xff]
      %v3732 = vld [vmem:[#allocation5 + $0xd8] sm:$0xff]
      %v3733 = vld [vmem:[#allocation5 + $0xe0] sm:$0xff]
      %v3734 = vld [vmem:[#allocation5 + $0xe8] sm:$0xff]
      %v3735 = vld [vmem:[#allocation5 + $0xf0] sm:$0xff]
      %v3736 = vld [vmem:[#allocation5 + $0xf8] sm:$0xff]
      %v3737 = vld [vmem:[#allocation5 + $0x100] sm:$0xff]
      %v3738 = vld [vmem:[#allocation5 + $0x108] sm:$0xff]
      %v3739 = vld [vmem:[#allocation5 + $0x110] sm:$0xff]
      %v3740 = vld [vmem:[#allocation5 + $0x118] sm:$0xff]
      %v3741 = vld [vmem:[#allocation5 + $0x120] sm:$0xff]
      %v3742 = vld [vmem:[#allocation5 + $0x128] sm:$0xff]
      %v3743 = vld [vmem:[#allocation5 + $0x130] sm:$0xff]
      %v3744 = vld [vmem:[#allocation5 + $0x138] sm:$0xff]
      %v3745 = vld [vmem:[#allocation5 + $0x140] sm:$0xff]
      %v3746 = vld [vmem:[#allocation5 + $0x148] sm:$0xff]
      %v3747 = vld [vmem:[#allocation5 + $0x150] sm:$0xff]
      %v3748 = vld [vmem:[#allocation5 + $0x158] sm:$0xff]
      %v3749 = vld [vmem:[#allocation5 + $0x160] sm:$0xff]
      %v3750 = vld [vmem:[#allocation5 + $0x168] sm:$0xff]
      %v3751 = vld [vmem:[#allocation5 + $0x170] sm:$0xff]
      %v3752 = vld [vmem:[#allocation5 + $0x178] sm:$0xff]
      %v3753 = vld [vmem:[#allocation5 + $0x180] sm:$0xff]
      %v3754 = vld [vmem:[#allocation5 + $0x188] sm:$0xff]
      %v3755 = vld [vmem:[#allocation5 + $0x190] sm:$0xff]
      %v3756 = vld [vmem:[#allocation5 + $0x198] sm:$0xff]
      %v3757 = vld [vmem:[#allocation5 + $0x1a0] sm:$0xff]
      %v3758 = vld [vmem:[#allocation5 + $0x1a8] sm:$0xff]
      %v3759 = vld [vmem:[#allocation5 + $0x1b0] sm:$0xff]
      %v3760 = vld [vmem:[#allocation5 + $0x1b8] sm:$0xff]
      %v3761 = vld [vmem:[#allocation5 + $0x1c0] sm:$0xff]
      %v3762 = vld [vmem:[#allocation5 + $0x1c8] sm:$0xff]
      %v3763 = vld [vmem:[#allocation5 + $0x1d0] sm:$0xff]
      %v3764 = vld [vmem:[#allocation5 + $0x1d8] sm:$0xff]
      %v3765 = vld [vmem:[#allocation5 + $0x1e0] sm:$0xff]
      %v3766 = vld [vmem:[#allocation5 + $0x1e8] sm:$0xff]
      %v3767 = vld [vmem:[#allocation5 + $0x1f0] sm:$0xff]
      %v3768 = vld [vmem:[#allocation5 + $0x1f8] sm:$0xff]
      %v3769 = vld [vmem:[#allocation5 + $0x200] sm:$0xff]
      %v3770 = vld [vmem:[#allocation5 + $0x208] sm:$0xff]
      %v3771 = vld [vmem:[#allocation5 + $0x210] sm:$0xff]
      %v3772 = vld [vmem:[#allocation5 + $0x218] sm:$0xff]
      %v3773 = vld [vmem:[#allocation5 + $0x220] sm:$0xff]
      %v3774 = vld [vmem:[#allocation5 + $0x228] sm:$0xff]
      %v3775 = vld [vmem:[#allocation5 + $0x230] sm:$0xff]
      %v3776 = vld [vmem:[#allocation5 + $0x238] sm:$0xff]
      %v3777 = vld [vmem:[#allocation5 + $0x240] sm:$0xff]
      %v3778 = vld [vmem:[#allocation5 + $0x248] sm:$0xff]
      %v3779 = vld [vmem:[#allocation5 + $0x250] sm:$0xff]
      %v3780 = vld [vmem:[#allocation5 + $0x258] sm:$0xff]
      %v3781 = vld [vmem:[#allocation5 + $0x260] sm:$0xff]
      %v3782 = vld [vmem:[#allocation5 + $0x268] sm:$0xff]
      %v3783 = vld [vmem:[#allocation5 + $0x270] sm:$0xff]
      %v3784 = vld [vmem:[#allocation5 + $0x278] sm:$0xff]
      %v3785 = vld [vmem:[#allocation5 + $0x280] sm:$0xff]
      %v3786 = vld [vmem:[#allocation5 + $0x288] sm:$0xff]
      %v3787 = vld [vmem:[#allocation5 + $0x290] sm:$0xff]
      %v3788 = vld [vmem:[#allocation5 + $0x298] sm:$0xff]
      %v3789 = vld [vmem:[#allocation5 + $0x2a0] sm:$0xff]
      %v3790 = vld [vmem:[#allocation5 + $0x2a8] sm:$0xff]
      %v3791 = vld [vmem:[#allocation5 + $0x2b0] sm:$0xff]
      %v3792 = vld [vmem:[#allocation5 + $0x2b8] sm:$0xff]
      %v3793 = vld [vmem:[#allocation5 + $0x2c0] sm:$0xff]
      %v3794 = vld [vmem:[#allocation5 + $0x2c8] sm:$0xff]
      %v3795 = vld [vmem:[#allocation5 + $0x2d0] sm:$0xff]
      %v3796 = vld [vmem:[#allocation5 + $0x2d8] sm:$0xff]
      %v3797 = vld [vmem:[#allocation5 + $0x2e0] sm:$0xff]
      %v3798 = vld [vmem:[#allocation5 + $0x2e8] sm:$0xff]
      %v3799 = vld [vmem:[#allocation5 + $0x2f0] sm:$0xff]
      %v3800 = vld [vmem:[#allocation5 + $0x2f8] sm:$0xff]
      %v3801 = vld [vmem:[%s2] sm:$0xff]
      %v3802 = vld [vmem:[%s2 + $0x8] sm:$0xff]
      %v3803 = vld [vmem:[%s2 + $0x10] sm:$0xff]
      %v3804 = vld [vmem:[%s2 + $0x18] sm:$0xff]
      %v3805 = vld [vmem:[%s2 + $0x20] sm:$0xff]
      %v3806 = vld [vmem:[%s2 + $0x28] sm:$0xff]
      %v3807 = vld [vmem:[%s2 + $0x30] sm:$0xff]
      %v3808 = vld [vmem:[%s2 + $0x38] sm:$0xff]
      %v3809 = vld [vmem:[%s2 + $0x40] sm:$0xff]
      %v3810 = vld [vmem:[%s2 + $0x48] sm:$0xff]
      %v3811 = vld [vmem:[%s2 + $0x50] sm:$0xff]
      %v3812 = vld [vmem:[%s2 + $0x58] sm:$0xff]
      %v3813 = vld [vmem:[%s2 + $0x60] sm:$0xff]
      %v3814 = vld [vmem:[%s2 + $0x68] sm:$0xff]
      %v3815 = vld [vmem:[%s2 + $0x70] sm:$0xff]
      %v3816 = vld [vmem:[%s2 + $0x78] sm:$0xff]
      %v3817 = vld [vmem:[%s2 + $0x80] sm:$0xff]
      %v3818 = vld [vmem:[%s2 + $0x88] sm:$0xff]
      %v3819 = vld [vmem:[%s2 + $0x90] sm:$0xff]
      %v3820 = vld [vmem:[%s2 + $0x98] sm:$0xff]
      %v3821 = vld [vmem:[%s2 + $0xa0] sm:$0xff]
      %v3822 = vld [vmem:[%s2 + $0xa8] sm:$0xff]
      %v3823 = vld [vmem:[%s2 + $0xb0] sm:$0xff]
      %v3824 = vld [vmem:[%s2 + $0xb8] sm:$0xff]
      %v3825 = vld [vmem:[%s2 + $0xc0] sm:$0xff]
      %v3826 = vld [vmem:[%s2 + $0xc8] sm:$0xff]
      %v3827 = vld [vmem:[%s2 + $0xd0] sm:$0xff]
      %v3828 = vld [vmem:[%s2 + $0xd8] sm:$0xff]
      %v3829 = vld [vmem:[%s2 + $0xe0] sm:$0xff]
      %v3830 = vld [vmem:[%s2 + $0xe8] sm:$0xff]
      %v3831 = vld [vmem:[%s2 + $0xf0] sm:$0xff]
      %v3832 = vld [vmem:[%s2 + $0xf8] sm:$0xff]
      %v3833 = vld [vmem:[%s2 + $0x100] sm:$0xff]
      %v3834 = vld [vmem:[%s2 + $0x108] sm:$0xff]
      %v3835 = vld [vmem:[%s2 + $0x110] sm:$0xff]
      %v3836 = vld [vmem:[%s2 + $0x118] sm:$0xff]
      %v3838 = vsel %vm214, %v3707, 0
      %v3841 = vsel %vm214, %v3710, 0
      %v3844 = vsel %vm214, %v3713, 0
      %v3847 = vsel %vm214, %v3716, 0
      %v3850 = vsel %vm214, %v3719, 0
      %v3853 = vsel %vm214, %v3722, 0
      %v3856 = vsel %vm214, %v3725, 0
      %v3859 = vsel %vm214, %v3728, 0
      %v3862 = vsel %vm214, %v3731, 0
      %v3865 = vsel %vm214, %v3734, 0
      %v3868 = vsel %vm214, %v3737, 0
      %v3871 = vsel %vm214, %v3740, 0
      %v3874 = vsel %vm214, %v3743, 0
      %v3877 = vsel %vm214, %v3746, 0
      %v3880 = vsel %vm214, %v3749, 0
      %v3883 = vsel %vm214, %v3752, 0
      %v3886 = vsel %vm214, %v3755, 0
      %v3889 = vsel %vm214, %v3758, 0
      %v3892 = vsel %vm214, %v3761, 0
      %v3895 = vsel %vm214, %v3764, 0
      %v3898 = vsel %vm214, %v3767, 0
      %v3901 = vsel %vm214, %v3770, 0
      %v3904 = vsel %vm214, %v3773, 0
      %v3907 = vsel %vm214, %v3776, 0
      %v3910 = vsel %vm214, %v3779, 0
      %v3913 = vsel %vm214, %v3782, 0
      %v3916 = vsel %vm214, %v3785, 0
      %v3919 = vsel %vm214, %v3788, 0
      %v3922 = vsel %vm214, %v3791, 0
      %v3925 = vsel %vm214, %v3794, 0
      %v3928 = vsel %vm214, %v3797, 0
      %v3931 = vsel %vm214, %v3800, 0
      %3933 = vmatprep.subr.mxu0 0.0
      %3934 = vmatpush1.msra.mxu0 %v3816
      %3935 = vmatprep.subr.mxu0 0.0
      %3936 = vmatpush1.msra.mxu0 %v3815
      %3937 = vmatprep.subr.mxu0 0.0
      %3938 = vmatpush1.msra.mxu0 %v3814
      %3939 = vmatprep.subr.mxu0 0.0
      %3940 = vmatpush1.msra.mxu0 %v3813
      %3941 = vmatprep.subr.mxu0 0.0
      %3942 = vmatpush1.msra.mxu0 %v3812
      %3943 = vmatprep.subr.mxu0 0.0
      %3944 = vmatpush1.msra.mxu0 %v3811
      %3945 = vmatprep.subr.mxu0 0.0
      %3946 = vmatpush1.msra.mxu0 %v3810
      %3947 = vmatprep.subr.mxu0 0.0
      %3948 = vmatpush1.msra.mxu0 %v3809
      %3949 = vmatprep.subr.mxu0 0.0
      %3950 = vmatpush1.msra.mxu0 %v3808
      %3951 = vmatprep.subr.mxu0 0.0
      %3952 = vmatpush1.msra.mxu0 %v3807
      %3953 = vmatprep.subr.mxu0 0.0
      %3954 = vmatpush1.msra.mxu0 %v3806
      %3955 = vmatprep.subr.mxu0 0.0
      %3956 = vmatpush1.msra.mxu0 %v3805
      %3957 = vmatprep.subr.mxu0 0.0
      %3958 = vmatpush1.msra.mxu0 %v3804
      %3959 = vmatprep.subr.mxu0 0.0
      %3960 = vmatpush1.msra.mxu0 %v3803
      %3961 = vmatprep.subr.mxu0 0.0
      %3962 = vmatpush1.msra.mxu0 %v3802
      %3963 = vmatprep.subr.mxu0 0.0
      %3964 = vmatpush1.msra.mxu0 %v3801
      %3965 = vmatprep.subr.mxu0 0.0
      %3966 = vmatpush2.msra.mxu0 %v3832
      %3967 = vmatprep.subr.mxu0 0.0
      %3968 = vmatpush2.msra.mxu0 %v3831
      %3969 = vmatprep.subr.mxu0 0.0
      %3970 = vmatpush2.msra.mxu0 %v3830
      %3971 = vmatprep.subr.mxu0 0.0
      %3972 = vmatpush2.msra.mxu0 %v3829
      %3973 = vmatprep.subr.mxu0 0.0
      %3974 = vmatpush2.msra.mxu0 %v3828
      %3975 = vmatprep.subr.mxu0 0.0
      %3976 = vmatpush2.msra.mxu0 %v3827
      %3977 = vmatprep.subr.mxu0 0.0
      %3978 = vmatpush2.msra.mxu0 %v3826
      %3979 = vmatprep.subr.mxu0 0.0
      %3980 = vmatpush2.msra.mxu0 %v3825
      %3981 = vmatprep.subr.mxu0 0.0
      %3982 = vmatpush2.msra.mxu0 %v3824
      %3983 = vmatprep.subr.mxu0 0.0
      %3984 = vmatpush2.msra.mxu0 %v3823
      %3985 = vmatprep.subr.mxu0 0.0
      %3986 = vmatpush2.msra.mxu0 %v3822
      %3987 = vmatprep.subr.mxu0 0.0
      %3988 = vmatpush2.msra.mxu0 %v3821
      %3989 = vmatprep.subr.mxu0 0.0
      %3990 = vmatpush2.msra.mxu0 %v3820
      %3991 = vmatprep.subr.mxu0 0.0
      %3992 = vmatpush2.msra.mxu0 %v3819
      %3993 = vmatprep.subr.mxu0 0.0
      %3994 = vmatpush2.msra.mxu0 %v3818
      %3995 = vmatprep.subr.mxu0 0.0
      %3996 = vmatpush2.msra.mxu0 %v3817
      %3997 = vmatprep.mubr.f32.mxu0 %v3706
      %3998 = vmatmul.mubr.f32.gmra.mxu0 %v3705
      %v3999 = vpop.f32.mrf.mxu0
      %v4000 = vadd.f32 0.0, %v3999
      %v4001 = vpop.f32.mrf.mxu0
      %4002 = vmatprep.mubr.f32.mxu0 %v3709
      %4003 = vmatmul.mubr.f32.gmra.mxu0 %v3708
      %v4004 = vpop.f32.mrf.mxu0
      %v4005 = vadd.f32 0.0, %v4004
      %v4006 = vpop.f32.mrf.mxu0
      %4007 = vmatprep.mubr.f32.mxu0 %v3712
      %4008 = vmatmul.mubr.f32.gmra.mxu0 %v3711
      %v4009 = vpop.f32.mrf.mxu0
      %v4010 = vadd.f32 0.0, %v4009
      %v4011 = vpop.f32.mrf.mxu0
      %4012 = vmatprep.mubr.f32.mxu0 %v3715
      %4013 = vmatmul.mubr.f32.gmra.mxu0 %v3714
      %v4014 = vpop.f32.mrf.mxu0
      %v4015 = vadd.f32 0.0, %v4014
      %v4016 = vpop.f32.mrf.mxu0
      %4017 = vmatprep.mubr.f32.mxu0 %v3718
      %4018 = vmatmul.mubr.f32.gmra.mxu0 %v3717
      %v4019 = vpop.f32.mrf.mxu0
      %v4020 = vadd.f32 0.0, %v4019
      %v4021 = vpop.f32.mrf.mxu0
      %4022 = vmatprep.mubr.f32.mxu0 %v3721
      %4023 = vmatmul.mubr.f32.gmra.mxu0 %v3720
      %v4024 = vpop.f32.mrf.mxu0
      %v4025 = vadd.f32 0.0, %v4024
      %v4026 = vpop.f32.mrf.mxu0
      %4027 = vmatprep.mubr.f32.mxu0 %v3724
      %4028 = vmatmul.mubr.f32.gmra.mxu0 %v3723
      %v4029 = vpop.f32.mrf.mxu0
      %v4030 = vadd.f32 0.0, %v4029
      %v4031 = vpop.f32.mrf.mxu0
      %4032 = vmatprep.mubr.f32.mxu0 %v3727
      %4033 = vmatmul.mubr.f32.gmra.mxu0 %v3726
      %v4034 = vpop.f32.mrf.mxu0
      %v4035 = vadd.f32 0.0, %v4034
      %v4036 = vpop.f32.mrf.mxu0
      %4037 = vmatprep.mubr.f32.mxu0 %v3730
      %4038 = vmatmul.mubr.f32.gmra.mxu0 %v3729
      %v4039 = vpop.f32.mrf.mxu0
      %v4040 = vadd.f32 0.0, %v4039
      %v4041 = vpop.f32.mrf.mxu0
      %4042 = vmatprep.mubr.f32.mxu0 %v3733
      %4043 = vmatmul.mubr.f32.gmra.mxu0 %v3732
      %v4044 = vpop.f32.mrf.mxu0
      %v4045 = vadd.f32 0.0, %v4044
      %v4046 = vpop.f32.mrf.mxu0
      %4047 = vmatprep.mubr.f32.mxu0 %v3736
      %4048 = vmatmul.mubr.f32.gmra.mxu0 %v3735
      %v4049 = vpop.f32.mrf.mxu0
      %v4050 = vadd.f32 0.0, %v4049
      %v4051 = vpop.f32.mrf.mxu0
      %4052 = vmatprep.mubr.f32.mxu0 %v3739
      %4053 = vmatmul.mubr.f32.gmra.mxu0 %v3738
      %v4054 = vpop.f32.mrf.mxu0
      %v4055 = vadd.f32 0.0, %v4054
      %v4056 = vpop.f32.mrf.mxu0
      %4057 = vmatprep.mubr.f32.mxu0 %v3742
      %4058 = vmatmul.mubr.f32.gmra.mxu0 %v3741
      %v4059 = vpop.f32.mrf.mxu0
      %v4060 = vadd.f32 0.0, %v4059
      %v4061 = vpop.f32.mrf.mxu0
      %4062 = vmatprep.mubr.f32.mxu0 %v3745
      %4063 = vmatmul.mubr.f32.gmra.mxu0 %v3744
      %v4064 = vpop.f32.mrf.mxu0
      %v4065 = vadd.f32 0.0, %v4064
      %v4066 = vpop.f32.mrf.mxu0
      %4067 = vmatprep.mubr.f32.mxu0 %v3748
      %4068 = vmatmul.mubr.f32.gmra.mxu0 %v3747
      %v4069 = vpop.f32.mrf.mxu0
      %v4070 = vadd.f32 0.0, %v4069
      %v4071 = vpop.f32.mrf.mxu0
      %4072 = vmatprep.mubr.f32.mxu0 %v3751
      %4073 = vmatmul.mubr.f32.gmra.mxu0 %v3750
      %v4074 = vpop.f32.mrf.mxu0
      %v4075 = vadd.f32 0.0, %v4074
      %v4076 = vpop.f32.mrf.mxu0
      %4077 = vmatprep.mubr.f32.mxu0 %v3754
      %4078 = vmatmul.mubr.f32.gmra.mxu0 %v3753
      %v4079 = vpop.f32.mrf.mxu0
      %v4080 = vadd.f32 0.0, %v4079
      %v4081 = vpop.f32.mrf.mxu0
      %4082 = vmatprep.mubr.f32.mxu0 %v3757
      %4083 = vmatmul.mubr.f32.gmra.mxu0 %v3756
      %v4084 = vpop.f32.mrf.mxu0
      %v4085 = vadd.f32 0.0, %v4084
      %v4086 = vpop.f32.mrf.mxu0
      %4087 = vmatprep.mubr.f32.mxu0 %v3760
      %4088 = vmatmul.mubr.f32.gmra.mxu0 %v3759
      %v4089 = vpop.f32.mrf.mxu0
      %v4090 = vadd.f32 0.0, %v4089
      %v4091 = vpop.f32.mrf.mxu0
      %4092 = vmatprep.mubr.f32.mxu0 %v3763
      %4093 = vmatmul.mubr.f32.gmra.mxu0 %v3762
      %v4094 = vpop.f32.mrf.mxu0
      %v4095 = vadd.f32 0.0, %v4094
      %v4096 = vpop.f32.mrf.mxu0
      %4097 = vmatprep.mubr.f32.mxu0 %v3766
      %4098 = vmatmul.mubr.f32.gmra.mxu0 %v3765
      %v4099 = vpop.f32.mrf.mxu0
      %v4100 = vadd.f32 0.0, %v4099
      %v4101 = vpop.f32.mrf.mxu0
      %4102 = vmatprep.mubr.f32.mxu0 %v3769
      %4103 = vmatmul.mubr.f32.gmra.mxu0 %v3768
      %v4104 = vpop.f32.mrf.mxu0
      %v4105 = vadd.f32 0.0, %v4104
      %v4106 = vpop.f32.mrf.mxu0
      %4107 = vmatprep.mubr.f32.mxu0 %v3772
      %4108 = vmatmul.mubr.f32.gmra.mxu0 %v3771
      %v4109 = vpop.f32.mrf.mxu0
      %v4110 = vadd.f32 0.0, %v4109
      %v4111 = vpop.f32.mrf.mxu0
      %4112 = vmatprep.mubr.f32.mxu0 %v3775
      %4113 = vmatmul.mubr.f32.gmra.mxu0 %v3774
      %v4114 = vpop.f32.mrf.mxu0
      %v4115 = vadd.f32 0.0, %v4114
      %v4116 = vpop.f32.mrf.mxu0
      %4117 = vmatprep.mubr.f32.mxu0 %v3778
      %4118 = vmatmul.mubr.f32.gmra.mxu0 %v3777
      %v4119 = vpop.f32.mrf.mxu0
      %v4120 = vadd.f32 0.0, %v4119
      %v4121 = vpop.f32.mrf.mxu0
      %4122 = vmatprep.mubr.f32.mxu0 %v3781
      %4123 = vmatmul.mubr.f32.gmra.mxu0 %v3780
      %v4124 = vpop.f32.mrf.mxu0
      %v4125 = vadd.f32 0.0, %v4124
      %v4126 = vpop.f32.mrf.mxu0
      %4127 = vmatprep.mubr.f32.mxu0 %v3784
      %4128 = vmatmul.mubr.f32.gmra.mxu0 %v3783
      %v4129 = vpop.f32.mrf.mxu0
      %v4130 = vadd.f32 0.0, %v4129
      %v4131 = vpop.f32.mrf.mxu0
      %4132 = vmatprep.mubr.f32.mxu0 %v3787
      %4133 = vmatmul.mubr.f32.gmra.mxu0 %v3786
      %v4134 = vpop.f32.mrf.mxu0
      %v4135 = vadd.f32 0.0, %v4134
      %v4136 = vpop.f32.mrf.mxu0
      %4137 = vmatprep.mubr.f32.mxu0 %v3790
      %4138 = vmatmul.mubr.f32.gmra.mxu0 %v3789
      %v4139 = vpop.f32.mrf.mxu0
      %v4140 = vadd.f32 0.0, %v4139
      %v4141 = vpop.f32.mrf.mxu0
      %4142 = vmatprep.mubr.f32.mxu0 %v3793
      %4143 = vmatmul.mubr.f32.gmra.mxu0 %v3792
      %v4144 = vpop.f32.mrf.mxu0
      %v4145 = vadd.f32 0.0, %v4144
      %v4146 = vpop.f32.mrf.mxu0
      %4147 = vmatprep.mubr.f32.mxu0 %v3796
      %4148 = vmatmul.mubr.f32.gmra.mxu0 %v3795
      %v4149 = vpop.f32.mrf.mxu0
      %v4150 = vadd.f32 0.0, %v4149
      %v4151 = vpop.f32.mrf.mxu0
      %4152 = vmatprep.mubr.f32.mxu0 %v3799
      %4153 = vmatmul.mubr.f32.gmra.mxu0 %v3798
      %v4154 = vpop.f32.mrf.mxu0
      %v4155 = vadd.f32 0.0, %v4154
      %v4156 = vpop.f32.mrf.mxu0
      %4157 = vdwg.mxu0
      %4158 = vmatprep.subr.mxu0 0.0
      %4159 = vmatpush1.msra.mxu0 0.0
      %4160 = vmatprep.subr.mxu0 0.0
      %4161 = vmatpush1.msra.mxu0 0.0
      %4162 = vmatprep.subr.mxu0 0.0
      %4163 = vmatpush1.msra.mxu0 0.0
      %4164 = vmatprep.subr.mxu0 0.0
      %4165 = vmatpush1.msra.mxu0 0.0
      %4166 = vmatprep.subr.mxu0 0.0
      %4167 = vmatpush1.msra.mxu0 0.0
      %4168 = vmatprep.subr.mxu0 0.0
      %4169 = vmatpush1.msra.mxu0 0.0
      %4170 = vmatprep.subr.mxu0 0.0
      %4171 = vmatpush1.msra.mxu0 0.0
      %4172 = vmatprep.subr.mxu0 0.0
      %4173 = vmatpush1.msra.mxu0 0.0
      %4174 = vmatprep.subr.mxu0 0.0
      %4175 = vmatpush1.msra.mxu0 0.0
      %4176 = vmatprep.subr.mxu0 0.0
      %4177 = vmatpush1.msra.mxu0 0.0
      %4178 = vmatprep.subr.mxu0 0.0
      %4179 = vmatpush1.msra.mxu0 0.0
      %4180 = vmatprep.subr.mxu0 0.0
      %4181 = vmatpush1.msra.mxu0 0.0
      %4182 = vmatprep.subr.mxu0 0.0
      %4183 = vmatpush1.msra.mxu0 %v3836
      %4184 = vmatprep.subr.mxu0 0.0
      %4185 = vmatpush1.msra.mxu0 %v3835
      %4186 = vmatprep.subr.mxu0 0.0
      %4187 = vmatpush1.msra.mxu0 %v3834
      %4188 = vmatprep.subr.mxu0 0.0
      %4189 = vmatpush1.msra.mxu0 %v3833
      %4190 = vmatprep.subr.mxu0 0.0
      %4191 = vmatpush2.msra.mxu0 0.0
      %4192 = vmatprep.subr.mxu0 0.0
      %4193 = vmatpush2.msra.mxu0 0.0
      %4194 = vmatprep.subr.mxu0 0.0
      %4195 = vmatpush2.msra.mxu0 0.0
      %4196 = vmatprep.subr.mxu0 0.0
      %4197 = vmatpush2.msra.mxu0 0.0
      %4198 = vmatprep.subr.mxu0 0.0
      %4199 = vmatpush2.msra.mxu0 0.0
      %4200 = vmatprep.subr.mxu0 0.0
      %4201 = vmatpush2.msra.mxu0 0.0
      %4202 = vmatprep.subr.mxu0 0.0
      %4203 = vmatpush2.msra.mxu0 0.0
      %4204 = vmatprep.subr.mxu0 0.0
      %4205 = vmatpush2.msra.mxu0 0.0
      %4206 = vmatprep.subr.mxu0 0.0
      %4207 = vmatpush2.msra.mxu0 0.0
      %4208 = vmatprep.subr.mxu0 0.0
      %4209 = vmatpush2.msra.mxu0 0.0
      %4210 = vmatprep.subr.mxu0 0.0
      %4211 = vmatpush2.msra.mxu0 0.0
      %4212 = vmatprep.subr.mxu0 0.0
      %4213 = vmatpush2.msra.mxu0 0.0
      %4214 = vmatprep.subr.mxu0 0.0
      %4215 = vmatpush2.msra.mxu0 0.0
      %4216 = vmatprep.subr.mxu0 0.0
      %4217 = vmatpush2.msra.mxu0 0.0
      %4218 = vmatprep.subr.mxu0 0.0
      %4219 = vmatpush2.msra.mxu0 0.0
      %4220 = vmatprep.subr.mxu0 0.0
      %4221 = vmatpush2.msra.mxu0 0.0
      %4222 = vmatprep.mubr.f32.mxu0 0.0
      %4223 = vmatmul.mubr.f32.gmra.mxu0 %v3838
      %v4224 = vpop.f32.mrf.mxu0
      %v4225 = vadd.f32 %v4000, %v4224
      %v4226 = vpop.f32.mrf.mxu0
      %4227 = vmatprep.mubr.f32.mxu0 0.0
      %4228 = vmatmul.mubr.f32.gmra.mxu0 %v3841
      %v4229 = vpop.f32.mrf.mxu0
      %v4230 = vadd.f32 %v4005, %v4229
      %v4231 = vpop.f32.mrf.mxu0
      %4232 = vmatprep.mubr.f32.mxu0 0.0
      %4233 = vmatmul.mubr.f32.gmra.mxu0 %v3844
      %v4234 = vpop.f32.mrf.mxu0
      %v4235 = vadd.f32 %v4010, %v4234
      %v4236 = vpop.f32.mrf.mxu0
      %4237 = vmatprep.mubr.f32.mxu0 0.0
      %4238 = vmatmul.mubr.f32.gmra.mxu0 %v3847
      %v4239 = vpop.f32.mrf.mxu0
      %v4240 = vadd.f32 %v4015, %v4239
      %v4241 = vpop.f32.mrf.mxu0
      %4242 = vmatprep.mubr.f32.mxu0 0.0
      %4243 = vmatmul.mubr.f32.gmra.mxu0 %v3850
      %v4244 = vpop.f32.mrf.mxu0
      %v4245 = vadd.f32 %v4020, %v4244
      %v4246 = vpop.f32.mrf.mxu0
      %4247 = vmatprep.mubr.f32.mxu0 0.0
      %4248 = vmatmul.mubr.f32.gmra.mxu0 %v3853
      %v4249 = vpop.f32.mrf.mxu0
      %v4250 = vadd.f32 %v4025, %v4249
      %v4251 = vpop.f32.mrf.mxu0
      %4252 = vmatprep.mubr.f32.mxu0 0.0
      %4253 = vmatmul.mubr.f32.gmra.mxu0 %v3856
      %v4254 = vpop.f32.mrf.mxu0
      %v4255 = vadd.f32 %v4030, %v4254
      %v4256 = vpop.f32.mrf.mxu0
      %4257 = vmatprep.mubr.f32.mxu0 0.0
      %4258 = vmatmul.mubr.f32.gmra.mxu0 %v3859
      %v4259 = vpop.f32.mrf.mxu0
      %v4260 = vadd.f32 %v4035, %v4259
      %v4261 = vpop.f32.mrf.mxu0
      %4262 = vmatprep.mubr.f32.mxu0 0.0
      %4263 = vmatmul.mubr.f32.gmra.mxu0 %v3862
      %v4264 = vpop.f32.mrf.mxu0
      %v4265 = vadd.f32 %v4040, %v4264
      %v4266 = vpop.f32.mrf.mxu0
      %4267 = vmatprep.mubr.f32.mxu0 0.0
      %4268 = vmatmul.mubr.f32.gmra.mxu0 %v3865
      %v4269 = vpop.f32.mrf.mxu0
      %v4270 = vadd.f32 %v4045, %v4269
      %v4271 = vpop.f32.mrf.mxu0
      %4272 = vmatprep.mubr.f32.mxu0 0.0
      %4273 = vmatmul.mubr.f32.gmra.mxu0 %v3868
      %v4274 = vpop.f32.mrf.mxu0
      %v4275 = vadd.f32 %v4050, %v4274
      %v4276 = vpop.f32.mrf.mxu0
      %4277 = vmatprep.mubr.f32.mxu0 0.0
      %4278 = vmatmul.mubr.f32.gmra.mxu0 %v3871
      %v4279 = vpop.f32.mrf.mxu0
      %v4280 = vadd.f32 %v4055, %v4279
      %v4281 = vpop.f32.mrf.mxu0
      %4282 = vmatprep.mubr.f32.mxu0 0.0
      %4283 = vmatmul.mubr.f32.gmra.mxu0 %v3874
      %v4284 = vpop.f32.mrf.mxu0
      %v4285 = vadd.f32 %v4060, %v4284
      %v4286 = vpop.f32.mrf.mxu0
      %4287 = vmatprep.mubr.f32.mxu0 0.0
      %4288 = vmatmul.mubr.f32.gmra.mxu0 %v3877
      %v4289 = vpop.f32.mrf.mxu0
      %v4290 = vadd.f32 %v4065, %v4289
      %v4291 = vpop.f32.mrf.mxu0
      %4292 = vmatprep.mubr.f32.mxu0 0.0
      %4293 = vmatmul.mubr.f32.gmra.mxu0 %v3880
      %v4294 = vpop.f32.mrf.mxu0
      %v4295 = vadd.f32 %v4070, %v4294
      %v4296 = vpop.f32.mrf.mxu0
      %4297 = vmatprep.mubr.f32.mxu0 0.0
      %4298 = vmatmul.mubr.f32.gmra.mxu0 %v3883
      %v4299 = vpop.f32.mrf.mxu0
      %v4300 = vadd.f32 %v4075, %v4299
      %v4301 = vpop.f32.mrf.mxu0
      %4302 = vmatprep.mubr.f32.mxu0 0.0
      %4303 = vmatmul.mubr.f32.gmra.mxu0 %v3886
      %v4304 = vpop.f32.mrf.mxu0
      %v4305 = vadd.f32 %v4080, %v4304
      %v4306 = vpop.f32.mrf.mxu0
      %4307 = vmatprep.mubr.f32.mxu0 0.0
      %4308 = vmatmul.mubr.f32.gmra.mxu0 %v3889
      %v4309 = vpop.f32.mrf.mxu0
      %v4310 = vadd.f32 %v4085, %v4309
      %v4311 = vpop.f32.mrf.mxu0
      %4312 = vmatprep.mubr.f32.mxu0 0.0
      %4313 = vmatmul.mubr.f32.gmra.mxu0 %v3892
      %v4314 = vpop.f32.mrf.mxu0
      %v4315 = vadd.f32 %v4090, %v4314
      %v4316 = vpop.f32.mrf.mxu0
      %4317 = vmatprep.mubr.f32.mxu0 0.0
      %4318 = vmatmul.mubr.f32.gmra.mxu0 %v3895
      %v4319 = vpop.f32.mrf.mxu0
      %v4320 = vadd.f32 %v4095, %v4319
      %v4321 = vpop.f32.mrf.mxu0
      %4322 = vmatprep.mubr.f32.mxu0 0.0
      %4323 = vmatmul.mubr.f32.gmra.mxu0 %v3898
      %v4324 = vpop.f32.mrf.mxu0
      %v4325 = vadd.f32 %v4100, %v4324
      %v4326 = vpop.f32.mrf.mxu0
      %4327 = vmatprep.mubr.f32.mxu0 0.0
      %4328 = vmatmul.mubr.f32.gmra.mxu0 %v3901
      %v4329 = vpop.f32.mrf.mxu0
      %v4330 = vadd.f32 %v4105, %v4329
      %v4331 = vpop.f32.mrf.mxu0
      %4332 = vmatprep.mubr.f32.mxu0 0.0
      %4333 = vmatmul.mubr.f32.gmra.mxu0 %v3904
      %v4334 = vpop.f32.mrf.mxu0
      %v4335 = vadd.f32 %v4110, %v4334
      %v4336 = vpop.f32.mrf.mxu0
      %4337 = vmatprep.mubr.f32.mxu0 0.0
      %4338 = vmatmul.mubr.f32.gmra.mxu0 %v3907
      %v4339 = vpop.f32.mrf.mxu0
      %v4340 = vadd.f32 %v4115, %v4339
      %v4341 = vpop.f32.mrf.mxu0
      %4342 = vmatprep.mubr.f32.mxu0 0.0
      %4343 = vmatmul.mubr.f32.gmra.mxu0 %v3910
      %v4344 = vpop.f32.mrf.mxu0
      %v4345 = vadd.f32 %v4120, %v4344
      %v4346 = vpop.f32.mrf.mxu0
      %4347 = vmatprep.mubr.f32.mxu0 0.0
      %4348 = vmatmul.mubr.f32.gmra.mxu0 %v3913
      %v4349 = vpop.f32.mrf.mxu0
      %v4350 = vadd.f32 %v4125, %v4349
      %v4351 = vpop.f32.mrf.mxu0
      %4352 = vmatprep.mubr.f32.mxu0 0.0
      %4353 = vmatmul.mubr.f32.gmra.mxu0 %v3916
      %v4354 = vpop.f32.mrf.mxu0
      %v4355 = vadd.f32 %v4130, %v4354
      %v4356 = vpop.f32.mrf.mxu0
      %4357 = vmatprep.mubr.f32.mxu0 0.0
      %4358 = vmatmul.mubr.f32.gmra.mxu0 %v3919
      %v4359 = vpop.f32.mrf.mxu0
      %v4360 = vadd.f32 %v4135, %v4359
      %v4361 = vpop.f32.mrf.mxu0
      %4362 = vmatprep.mubr.f32.mxu0 0.0
      %4363 = vmatmul.mubr.f32.gmra.mxu0 %v3922
      %v4364 = vpop.f32.mrf.mxu0
      %v4365 = vadd.f32 %v4140, %v4364
      %v4366 = vpop.f32.mrf.mxu0
      %4367 = vmatprep.mubr.f32.mxu0 0.0
      %4368 = vmatmul.mubr.f32.gmra.mxu0 %v3925
      %v4369 = vpop.f32.mrf.mxu0
      %v4370 = vadd.f32 %v4145, %v4369
      %v4371 = vpop.f32.mrf.mxu0
      %4372 = vmatprep.mubr.f32.mxu0 0.0
      %4373 = vmatmul.mubr.f32.gmra.mxu0 %v3928
      %v4374 = vpop.f32.mrf.mxu0
      %v4375 = vadd.f32 %v4150, %v4374
      %v4376 = vpop.f32.mrf.mxu0
      %4377 = vmatprep.mubr.f32.mxu0 0.0
      %4378 = vmatmul.mubr.f32.gmra.mxu0 %v3931
      %v4379 = vpop.f32.mrf.mxu0
      %v4380 = vadd.f32 %v4155, %v4379
      %v4381 = vpop.f32.mrf.mxu0
      %4382 = vdwg.mxu0
      %v4383 = vmax.f32 %v4225, 0.0
      %v4384 = vmax.f32 %v4230, 0.0
      %v4385 = vmax.f32 %v4235, 0.0
      %v4386 = vmax.f32 %v4240, 0.0
      %v4387 = vmax.f32 %v4245, 0.0
      %v4388 = vmax.f32 %v4250, 0.0
      %v4389 = vmax.f32 %v4255, 0.0
      %v4390 = vmax.f32 %v4260, 0.0
      %v4391 = vmax.f32 %v4265, 0.0
      %v4392 = vmax.f32 %v4270, 0.0
      %v4393 = vmax.f32 %v4275, 0.0
      %v4394 = vmax.f32 %v4280, 0.0
      %v4395 = vmax.f32 %v4285, 0.0
      %v4396 = vmax.f32 %v4290, 0.0
      %v4397 = vmax.f32 %v4295, 0.0
      %v4398 = vmax.f32 %v4300, 0.0
      %v4399 = vmax.f32 %v4305, 0.0
      %v4400 = vmax.f32 %v4310, 0.0
      %v4401 = vmax.f32 %v4315, 0.0
      %v4402 = vmax.f32 %v4320, 0.0
      %v4403 = vmax.f32 %v4325, 0.0
      %v4404 = vmax.f32 %v4330, 0.0
      %v4405 = vmax.f32 %v4335, 0.0
      %v4406 = vmax.f32 %v4340, 0.0
      %v4407 = vmax.f32 %v4345, 0.0
      %v4408 = vmax.f32 %v4350, 0.0
      %v4409 = vmax.f32 %v4355, 0.0
      %v4410 = vmax.f32 %v4360, 0.0
      %v4411 = vmax.f32 %v4365, 0.0
      %v4412 = vmax.f32 %v4370, 0.0
      %v4413 = vmax.f32 %v4375, 0.0
      %v4414 = vmax.f32 %v4380, 0.0
      %4415 = vst.msk [vmem:[%s170] sm:$0xff] %vm214, %v4383
      %4416 = vst.msk [vmem:[%s170 + $0x8] sm:$0xff] %vm214, %v4384
      %4417 = vst.msk [vmem:[%s170 + $0x10] sm:$0xff] %vm214, %v4385
      %4418 = vst.msk [vmem:[%s170 + $0x18] sm:$0xff] %vm214, %v4386
      %4419 = vst.msk [vmem:[%s170 + $0x20] sm:$0xff] %vm214, %v4387
      %4420 = vst.msk [vmem:[%s170 + $0x28] sm:$0xff] %vm214, %v4388
      %4421 = vst.msk [vmem:[%s170 + $0x30] sm:$0xff] %vm214, %v4389
      %4422 = vst.msk [vmem:[%s170 + $0x38] sm:$0xff] %vm214, %v4390
      %4423 = vst.msk [vmem:[%s170 + $0x40] sm:$0xff] %vm214, %v4391
      %4424 = vst.msk [vmem:[%s170 + $0x48] sm:$0xff] %vm214, %v4392
      %4425 = vst.msk [vmem:[%s170 + $0x50] sm:$0xff] %vm214, %v4393
      %4426 = vst.msk [vmem:[%s170 + $0x58] sm:$0xff] %vm214, %v4394
      %4427 = vst.msk [vmem:[%s170 + $0x60] sm:$0xff] %vm214, %v4395
      %4428 = vst.msk [vmem:[%s170 + $0x68] sm:$0xff] %vm214, %v4396
      %4429 = vst.msk [vmem:[%s170 + $0x70] sm:$0xff] %vm214, %v4397
      %4430 = vst.msk [vmem:[%s170 + $0x78] sm:$0xff] %vm214, %v4398
      %4431 = vst.msk [vmem:[%s170 + $0x80] sm:$0xff] %vm214, %v4399
      %4432 = vst.msk [vmem:[%s170 + $0x88] sm:$0xff] %vm214, %v4400
      %4433 = vst.msk [vmem:[%s170 + $0x90] sm:$0xff] %vm214, %v4401
      %4434 = vst.msk [vmem:[%s170 + $0x98] sm:$0xff] %vm214, %v4402
      %4435 = vst.msk [vmem:[%s170 + $0xa0] sm:$0xff] %vm214, %v4403
      %4436 = vst.msk [vmem:[%s170 + $0xa8] sm:$0xff] %vm214, %v4404
      %4437 = vst.msk [vmem:[%s170 + $0xb0] sm:$0xff] %vm214, %v4405
      %4438 = vst.msk [vmem:[%s170 + $0xb8] sm:$0xff] %vm214, %v4406
      %4439 = vst.msk [vmem:[%s170 + $0xc0] sm:$0xff] %vm214, %v4407
      %4440 = vst.msk [vmem:[%s170 + $0xc8] sm:$0xff] %vm214, %v4408
      %4441 = vst.msk [vmem:[%s170 + $0xd0] sm:$0xff] %vm214, %v4409
      %4442 = vst.msk [vmem:[%s170 + $0xd8] sm:$0xff] %vm214, %v4410
      %4443 = vst.msk [vmem:[%s170 + $0xe0] sm:$0xff] %vm214, %v4411
      %4444 = vst.msk [vmem:[%s170 + $0xe8] sm:$0xff] %vm214, %v4412
      %4445 = vst.msk [vmem:[%s170 + $0xf0] sm:$0xff] %vm214, %v4413
      %4446 = vst.msk [vmem:[%s170 + $0xf8] sm:$0xff] %vm214, %v4414
      %p4447 = scmp.lt.s32.totalorder %s14, 1
      %s4448 = scalar_select %p4447, %s14, 1
      %s4449 = smul.addr %s4448, 32
      %s4450 = smul.addr %s4449, 8
      %s4451 = scalar_lea.vmem %s3, %s4450
      // Predicated region
      $region33: #{conv_module_forward.1} parent=31 // pred_check
        %p4452 = pneg %p100
      $region34: #{conv_module_forward.1} parent=31 // pred_check_branch
        %4454 = sbr.rel (%p4452) target = $region36
      $region35: #{conv_module_forward.1} parent=31 // pred_region
        _
      $region36: #{conv_module_forward.1} parent=31 // pred_fallthru
        _
    $region32: #{conv_module_forward.1} parent=5 // pred_fallthru
      _
    %p4455 = scmp.le.s32.totalorder 2, %s9
    // Predicated region
    $region37: #{conv_module_forward.1} parent=5 // pred_check
      %p4456 = pneg %p4455
    $region38: #{conv_module_forward.1} parent=5 // pred_check_branch
      %4458 = sbr.rel (%p4456) target = $region40
    $region39: #{conv_module_forward.1} parent=5 // pred_region
      %s4459 = ssub.s32 %s9, 2
      // Predicated region
      $region41: #{conv_module_forward.1} parent=39 // pred_check
        %p4460 = pneg %p106
      $region42: #{conv_module_forward.1} parent=39 // pred_check_branch
        %4462 = sbr.rel (%p4460) target = $region44
      $region43: #{conv_module_forward.1} parent=39 // pred_region
        %p4463 = scmp.lt.s32.totalorder %s15, 1
        %s4464 = scalar_select %p4463, %s15, 1
        %s4465 = smul.addr %s4464, 32
        %s4466 = smul.addr %s4465, 8
        %s4467 = scalar_lea.vmem %s3, %s4466
      $region44: #{conv_module_forward.1} parent=39 // pred_fallthru
        _
    $region40: #{conv_module_forward.1} parent=5 // pred_fallthru
      _
  $region6: #{conv_module_forward.1} parent=0 // loop_footer
    %s13 = sadd.s32 1, %s9
  $region7: #{conv_module_forward.1} parent=0 // loop_footer_branch
    %8 = sbr.rel target = $region3
  $region8: #{conv_module_forward.1} parent=0 // loop_exit
    _

</llo_original>
